<compile_context>
chip_gen: v5e
topology: v5e:2x2
jax: 0.10.0
libtpu: 0.0.40
codegen_flags: <defaults>
</compile_context>

<pallas_src>
import jax
import jax.numpy as jnp
from jax import lax
from jax.experimental import pallas as pl
from jax.experimental.pallas import tpu as pltpu

_LANE = 128


# ----------------------------- Pallas kernels ------------------------------

def _conv_pool_relu_kernel(p_ref, w_ref, b_ref, o_ref):
    """Fused conv-as-matmul + bias + 2x2 maxpool + ReLU.

    p_ref: [4, tm, K] bf16  im2col patches, leading axis = 2x2 pool position.
    w_ref: [K, 128]   bf16  conv weight as matmul matrix (Cout padded to 128).
    b_ref: [1, 128]   f32   bias (padded).
    o_ref: [tm, 128]  bf16  pooled + ReLU'd activations (lane-dense).
    """
    g4, tm, k = p_ref.shape
    n = w_ref.shape[1]
    # One long-M matmul instead of 4 small ones (single RHS push into MXU).
    y = jnp.dot(p_ref[...].reshape(g4 * tm, k), w_ref[...],
                preferred_element_type=jnp.float32)
    y = y.reshape(g4, tm, n)
    m = jnp.maximum(jnp.maximum(y[0], y[1]), jnp.maximum(y[2], y[3]))
    o_ref[...] = jnp.maximum(m + b_ref[...], 0.0).astype(o_ref.dtype)


def _conv2_pool_fc_kernel(p_ref, w2_ref, b2_ref, wf_ref, bf_ref, o_ref):
    """conv2 + bias + 2x2 maxpool + ReLU + folded (fc1@fc2) in one kernel.

    p_ref:  [64, tb, 500] bf16  conv2 patches; leading axis = 4 pool positions
                                x 16 pooled pixels (pixel-major within group).
    w2_ref: [500, 128]    bf16  conv2 weight matrix (Cout padded to 128).
    b2_ref: [1, 128]      f32   conv2 bias (padded).
    wf_ref: [16, 128, 128] bf16 folded fc1@fc2 weight, regrouped per pooled
                                pixel (rows for channel>=50 are zero).
    bf_ref: [1, 128]      f32   folded bias fc1_b@fc2_w^T + fc2_b (padded).
    o_ref:  [tb, 128]     f32   logits (padded to 128 lanes).
    """
    gp, tb, k = p_ref.shape          # gp = 4 * 16
    pix = gp // 4
    n = w2_ref.shape[1]
    y = jnp.dot(p_ref[...].reshape(gp * tb, k), w2_ref[...],
                preferred_element_type=jnp.float32)
    y = y.reshape(4, pix * tb, n)
    h = jnp.maximum(jnp.maximum(y[0], y[1]), jnp.maximum(y[2], y[3]))
    h = jnp.maximum(h + b2_ref[...], 0.0)              # f32 [16*tb, 128]
    h = h.astype(wf_ref.dtype).reshape(pix, tb, n)     # [16, tb, 128] bf16
    wf = wf_ref[...]
    acc = jnp.zeros((tb, n), jnp.float32)
    for pi in range(pix):                              # unrolled: 16 dots
        acc = acc + jnp.dot(h[pi], wf[pi], preferred_element_type=jnp.float32)
    o_ref[...] = acc + bf_ref[...]


# --------------------------- pallas_call wrappers ---------------------------

def _round_up(x, m):
    return (x + m - 1) // m * m


def _tile_rows(m, max_tile):
    """Pick (tile, padded_m). Tiles are multiples of 8; aim for >= 2 grid
    steps when m >= 16 (v7x dual TensorCore); prefer an exact divisor of m,
    otherwise fall back to a cdiv grid with row padding."""
    m8 = _round_up(m, 8)
    if m8 < 16:
        return m8, m8
    target = min(max_tile, _round_up(m8 // 2, 8))
    lo = max(8, (target // 2) // 8 * 8)
    for t in range(target, lo - 1, -8):
        if m8 % t == 0:
            return t, m8
    return target, _round_up(m8, target)


def conv_pool_relu(patches, w, b, max_tile=1024):
    """patches [4,M,K] @ w [K,128] (+b), 2x2-pool over axis 0, ReLU -> [Mp,128]."""
    _, M, K = patches.shape
    N = w.shape[1]
    tm, Mp = _tile_rows(M, max_tile)
    if Mp != M:
        patches = jnp.pad(patches, ((0, 0), (0, Mp - M), (0, 0)))
    return pl.pallas_call(
        _conv_pool_relu_kernel,
        out_shape=jax.ShapeDtypeStruct((Mp, N), jnp.bfloat16),
        grid=(Mp // tm,),
        in_specs=[
            pl.BlockSpec((4, tm, K), lambda m: (0, m, 0)),
            pl.BlockSpec((K, N), lambda m: (0, 0)),
            pl.BlockSpec((1, N), lambda m: (0, 0)),
        ],
        out_specs=pl.BlockSpec((tm, N), lambda m: (m, 0)),
        compiler_params=pltpu.CompilerParams(
            dimension_semantics=("parallel",),
            vmem_limit_bytes=32 * 1024 * 1024),
    )(patches, w, b)


def conv2_pool_fc(patches, w2, b2, wf, bf, max_tile=64):
    """Fused conv2 + pool + ReLU + folded FC.  patches [64,B,500] -> [Bp,128]."""
    GP, B, K = patches.shape
    N = w2.shape[1]
    PIX = GP // 4
    tb, Bp = _tile_rows(B, max_tile)
    if Bp != B:
        patches = jnp.pad(patches, ((0, 0), (0, Bp - B), (0, 0)))
    return pl.pallas_call(
        _conv2_pool_fc_kernel,
        out_shape=jax.ShapeDtypeStruct((Bp, N), jnp.float32),
        grid=(Bp // tb,),
        in_specs=[
            pl.BlockSpec((GP, tb, K), lambda m: (0, m, 0)),
            pl.BlockSpec((K, N), lambda m: (0, 0)),
            pl.BlockSpec((1, N), lambda m: (0, 0)),
            pl.BlockSpec((PIX, N, N), lambda m: (0, 0, 0)),
            pl.BlockSpec((1, N), lambda m: (0, 0)),
        ],
        out_specs=pl.BlockSpec((tb, N), lambda m: (m, 0)),
        compiler_params=pltpu.CompilerParams(
            dimension_semantics=("parallel",),
            vmem_limit_bytes=32 * 1024 * 1024),
    )(patches, w2, b2, wf, bf)


# ------------------------------- glue helpers -------------------------------

def _im2col_pool_batchmajor(x_nhwc, k):
    """[B,H,W,C] -> [4, B*PH*PW, k*k*C], rows batch-major (b, ph, pw);
    leading axis = the 4 positions of the 2x2 pooling window."""
    B, H, W, C = x_nhwc.shape
    OH, OW = H - k + 1, W - k + 1
    PH, PW = OH // 2, OW // 2
    cols = [x_nhwc[:, kh:kh + OH, kw:kw + OW, :]
            for kh in range(k) for kw in range(k)]
    pat = jnp.stack(cols, axis=3).reshape(B, OH, OW, k * k * C)
    groups = [pat[:, di::2, dj::2, :].reshape(1, B * PH * PW, k * k * C)
              for di in range(2) for dj in range(2)]
    return jnp.concatenate(groups, axis=0), (PH, PW)


def _im2col_pool_pixmajor(x_nhwc, k):
    """[B,H,W,C] -> [4*PH*PW, B, k*k*C], pixel-major so the fused conv2+fc
    kernel can take per-pixel contiguous [tb,128] slices of its activations."""
    B, H, W, C = x_nhwc.shape
    OH, OW = H - k + 1, W - k + 1
    PH, PW = OH // 2, OW // 2
    cols = [x_nhwc[:, kh:kh + OH, kw:kw + OW, :]
            for kh in range(k) for kw in range(k)]
    pat = jnp.stack(cols, axis=3).reshape(B, OH, OW, k * k * C)
    groups = [jnp.transpose(
                  pat[:, di::2, dj::2, :].reshape(B, PH * PW, k * k * C),
                  (1, 0, 2))
              for di in range(2) for dj in range(2)]
    return jnp.stack(groups, axis=0).reshape(4 * PH * PW, B, k * k * C)


def _pad_last(a, n):
    widths = [(0, 0)] * (a.ndim - 1) + [(0, n - a.shape[-1])]
    return jnp.pad(a, widths)


# --------------------------------- params -----------------------------------

def init_lenet_params(key):
    ks = jax.random.split(key, 8)
    s = 0.05
    return {
        "conv1_w": s * jax.random.normal(ks[0], (20, 1, 5, 5), jnp.float32),
        "conv1_b": s * jax.random.normal(ks[1], (20,), jnp.float32),
        "conv2_w": s * jax.random.normal(ks[2], (50, 20, 5, 5), jnp.float32),
        "conv2_b": s * jax.random.normal(ks[3], (50,), jnp.float32),
        "fc1_w": s * jax.random.normal(ks[4], (500, 4 * 4 * 50), jnp.float32),
        "fc1_b": s * jax.random.normal(ks[5], (500,), jnp.float32),
        "fc2_w": s * jax.random.normal(ks[6], (10, 500), jnp.float32),
        "fc2_b": s * jax.random.normal(ks[7], (10,), jnp.float32),
    }


def prepare_params(p):
    """One-time (outside jit) weight repacking: conv weights as bf16 matmul
    matrices (Cout padded to 128 lanes), fc1+fc2 folded into one matrix (no
    nonlinearity between them), regrouped per pooled pixel to match the
    kernel's pixel-major activation layout and PyTorch's NCHW view(-1,800)."""
    def conv_to_mat(w, n_pad):        # [Cout,Cin,KH,KW] -> [KH*KW*Cin, n_pad]
        cout, cin, kh, kw = w.shape
        m = jnp.transpose(w, (2, 3, 1, 0)).reshape(kh * kw * cin, cout)
        return _pad_last(m, n_pad).astype(jnp.bfloat16)

    # ---- fold fc1 + fc2 (exact: reference has no ReLU between them) ----
    f1 = p["fc1_w"].T                              # [800, 500], rows (c,h,w)
    f2 = p["fc2_w"].T                              # [500, 10]
    wf = f1 @ f2                                   # [800, 10]
    bf = p["fc1_b"] @ f2 + p["fc2_b"]              # [10]
    # regroup rows from torch (c, h, w) flatten order to per-pixel [16,50,10],
    # then zero-pad channels 50->128 and outputs 10->128.
    wf = wf.reshape(50, 4, 4, 10).transpose(1, 2, 0, 3).reshape(16, 50, 10)
    wf = jnp.pad(wf, ((0, 0), (0, _LANE - 50), (0, _LANE - 10)))

    return {
        "c1_w": conv_to_mat(p["conv1_w"], _LANE),                 # [25,128] bf16
        "c1_b": _pad_last(p["conv1_b"], _LANE).reshape(1, _LANE),  # f32
        "c2_w": conv_to_mat(p["conv2_w"], _LANE),                 # [500,128] bf16
        "c2_b": _pad_last(p["conv2_b"], _LANE).reshape(1, _LANE),  # f32
        "fc_w": wf.astype(jnp.bfloat16),                          # [16,128,128]
        "fc_b": _pad_last(bf, _LANE).reshape(1, _LANE),           # [1,128] f32
    }


# --------------------------------- forward ----------------------------------

def lenet_forward(prep, x_nchw):
    """x_nchw: [B, 1, 28, 28] float32 -> logits [B, 10] float32."""
    B = x_nchw.shape[0]
    x = jnp.transpose(x_nchw, (0, 2, 3, 1)).astype(jnp.bfloat16)  # NHWC bf16

    # conv1 (5x5, valid) + maxpool(2,2) + relu -- fused kernel.
    p1, (ph1, pw1) = _im2col_pool_batchmajor(x, 5)      # [4, B*144, 25] bf16
    h1 = conv_pool_relu(p1, prep["c1_w"], prep["c1_b"])  # [M1p, 128] bf16
    h1 = h1[:B * ph1 * pw1, :20].reshape(B, ph1, pw1, 20)

    # conv2 + maxpool + relu + folded fc1*fc2 -- one fused kernel; the pooled
    # conv2 activations never leave VMEM.
    p2 = _im2col_pool_pixmajor(h1, 5)                    # [64, B, 500] bf16
    logits = conv2_pool_fc(p2, prep["c2_w"], prep["c2_b"],
                           prep["fc_w"], prep["fc_b"])   # [Bp, 128] f32
    return logits[:B, :10]


# ------------------------- pure-XLA reference check --------------------------

def lenet_reference(p, x):
    dn = ("NCHW", "OIHW", "NCHW")
    y = lax.conv_general_dilated(x, p["conv1_w"], (1, 1), "VALID",
                                 dimension_numbers=dn)
    y = y + p["conv1_b"].reshape(1, -1, 1, 1)
    y = lax.reduce_window(y, -jnp.inf, lax.max, (1, 1, 2, 2), (1, 1, 2, 2),
                          "VALID")
    y = jnp.maximum(y, 0.0)
    y = lax.conv_general_dilated(y, p["conv2_w"], (1, 1), "VALID",
                                 dimension_numbers=dn)
    y = y + p["conv2_b"].reshape(1, -1, 1, 1)
    y = lax.reduce_window(y, -jnp.inf, lax.max, (1, 1, 2, 2), (1, 1, 2, 2),
                          "VALID")
    y = jnp.maximum(y, 0.0)
    y = y.reshape(y.shape[0], -1)
    y = y @ p["fc1_w"].T + p["fc1_b"]
    y = y @ p["fc2_w"].T + p["fc2_b"]
    return y


if __name__ == "__main__":
    key = jax.random.PRNGKey(0)
    pkey, xkey = jax.random.split(key)
    params = init_lenet_params(pkey)
    prep = prepare_params(params)                 # one-time, outside jit
    # Spatial size must be 28x28 so the conv/pool stack yields 4*4*50.
    x = jax.random.normal(xkey, (2, 1, 28, 28), jnp.float32)

    fwd = jax.jit(lenet_forward)
    logits = jax.block_until_ready(fwd(prep, x))
    assert logits.shape == (2, 10) and logits.dtype == jnp.float32

    ref = jax.block_until_ready(jax.jit(lenet_reference)(params, x))
    # bf16 weights/patches on the MXU (f32 accumulation) -> bf16-level tolerance.
    assert jnp.allclose(logits, ref, rtol=2e-2, atol=2e-2), (
        "Pallas LeNet does not match the XLA reference")
    print("KERNEL_OK")
</pallas_src>

<mosaic_0001>
module attributes {stable_mosaic.version = 11 : i64} {
  func.func @_conv_pool_relu_kernel(%arg0: i32, %arg1: memref<4x144x25xbf16, #tpu.memory_space<vmem>>, %arg2: memref<25x128xbf16, #tpu.memory_space<vmem>>, %arg3: memref<1x128xf32, #tpu.memory_space<vmem>>, %arg4: memref<144x128xbf16, #tpu.memory_space<vmem>>) attributes {dimension_semantics = [#tpu.dimension_semantics<parallel>], iteration_bounds = array<i64: 2>, scalar_prefetch = 0 : i64, scratch_operands = 0 : i64, tpu.core_type = #tpu.core_type<tc>, window_params = [{transform_indices = @transform_0, window_bounds = array<i64: 4, 144, 25>}, {pipeline_mode = #tpu.pipeline_mode<synchronous>, transform_indices = @transform_1, window_bounds = array<i64: 25, 128>}, {pipeline_mode = #tpu.pipeline_mode<synchronous>, transform_indices = @transform_2, window_bounds = array<i64: 1, 128>}, {transform_indices = @transform_3, window_bounds = array<i64: 144, 128>}]} {
    %c0 = arith.constant 0 : index
    %c0_0 = arith.constant 0 : index
    %c0_1 = arith.constant 0 : index
    %0 = vector.load %arg1[%c0, %c0_0, %c0_1] : memref<4x144x25xbf16, #tpu.memory_space<vmem>>, vector<4x144x25xbf16>
    %1 = vector.shape_cast %0 : vector<4x144x25xbf16> to vector<576x25xbf16>
    %c0_2 = arith.constant 0 : index
    %c0_3 = arith.constant 0 : index
    %2 = vector.load %arg2[%c0_2, %c0_3] : memref<25x128xbf16, #tpu.memory_space<vmem>>, vector<25x128xbf16>
    %cst = arith.constant dense<0.000000e+00> : vector<576x128xf32>
    %3 = tpu.matmul %1, %2, %cst {dimension_numbers = #tpu.dot_dimension_numbers<[1], [0], [0], [1], [0, 0, 1, 1], [], []>} : vector<576x25xbf16>, vector<25x128xbf16>, vector<576x128xf32> -> vector<576x128xf32>
    %4 = vector.shape_cast %3 : vector<576x128xf32> to vector<4x144x128xf32>
    %5 = vector.extract_strided_slice %4 {offsets = [0, 0, 0], sizes = [1, 144, 128], strides = [1, 1, 1]} : vector<4x144x128xf32> to vector<1x144x128xf32>
    %6 = vector.shape_cast %5 : vector<1x144x128xf32> to vector<144x128xf32>
    %7 = vector.extract_strided_slice %4 {offsets = [1, 0, 0], sizes = [1, 144, 128], strides = [1, 1, 1]} : vector<4x144x128xf32> to vector<1x144x128xf32>
    %8 = vector.shape_cast %7 : vector<1x144x128xf32> to vector<144x128xf32>
    %9 = arith.maximumf %6, %8 : vector<144x128xf32>
    %10 = vector.extract_strided_slice %4 {offsets = [2, 0, 0], sizes = [1, 144, 128], strides = [1, 1, 1]} : vector<4x144x128xf32> to vector<1x144x128xf32>
    %11 = vector.shape_cast %10 : vector<1x144x128xf32> to vector<144x128xf32>
    %12 = vector.extract_strided_slice %4 {offsets = [3, 0, 0], sizes = [1, 144, 128], strides = [1, 1, 1]} : vector<4x144x128xf32> to vector<1x144x128xf32>
    %13 = vector.shape_cast %12 : vector<1x144x128xf32> to vector<144x128xf32>
    %14 = arith.maximumf %11, %13 : vector<144x128xf32>
    %15 = arith.maximumf %9, %14 : vector<144x128xf32>
    %c0_4 = arith.constant 0 : index
    %c0_5 = arith.constant 0 : index
    %16 = vector.load %arg3[%c0_4, %c0_5] : memref<1x128xf32, #tpu.memory_space<vmem>>, vector<1x128xf32>
    %17 = vector.broadcast %16 : vector<1x128xf32> to vector<144x128xf32>
    %18 = arith.addf %15, %17 : vector<144x128xf32>
    %cst_6 = arith.constant 0.000000e+00 : f32
    %19 = vector.broadcast %cst_6 : f32 to vector<144x128xf32>
    %20 = arith.maximumf %18, %19 : vector<144x128xf32>
    %21 = arith.truncf %20 : vector<144x128xf32> to vector<144x128xbf16>
    %c0_7 = arith.constant 0 : index
    %c0_8 = arith.constant 0 : index
    %22 = vector.load %arg4[%c0_7, %c0_8] : memref<144x128xbf16, #tpu.memory_space<vmem>>, vector<144x128xbf16>
    tpu.vector_store %arg4[%c0_7, %c0_8], %21 {strides = array<i32>} : memref<144x128xbf16, #tpu.memory_space<vmem>>, vector<144x128xbf16>,
    return
  }
  func.func @transform_0(%arg0: i32) -> (i32, i32, i32) {
    %c0_i32 = arith.constant 0 : i32
    %c0_i32_0 = arith.constant 0 : i32
    %c0_i32_1 = arith.constant 0 : i32
    return %c0_i32, %arg0, %c0_i32_0 : i32, i32, i32
  }
  func.func @transform_1(%arg0: i32) -> (i32, i32) {
    %c0_i32 = arith.constant 0 : i32
    %c0_i32_0 = arith.constant 0 : i32
    %c0_i32_1 = arith.constant 0 : i32
    return %c0_i32, %c0_i32_0 : i32, i32
  }
  func.func @transform_2(%arg0: i32) -> (i32, i32) {
    %c0_i32 = arith.constant 0 : i32
    %c0_i32_0 = arith.constant 0 : i32
    %c0_i32_1 = arith.constant 0 : i32
    return %c0_i32, %c0_i32_0 : i32, i32
  }
  func.func @transform_3(%arg0: i32) -> (i32, i32) {
    %c0_i32 = arith.constant 0 : i32
    %c0_i32_0 = arith.constant 0 : i32
    return %arg0, %c0_i32 : i32, i32
  }
}

module attributes {stable_mosaic.version = 11 : i64} {
  func.func @_conv2_pool_fc_kernel(%arg0: i32, %arg1: memref<64x8x500xbf16, #tpu.memory_space<vmem>>, %arg2: memref<500x128xbf16, #tpu.memory_space<vmem>>, %arg3: memref<1x128xf32, #tpu.memory_space<vmem>>, %arg4: memref<16x128x128xbf16, #tpu.memory_space<vmem>>, %arg5: memref<1x128xf32, #tpu.memory_space<vmem>>, %arg6: memref<8x128xf32, #tpu.memory_space<vmem>>) attributes {dimension_semantics = [#tpu.dimension_semantics<parallel>], iteration_bounds = array<i64: 1>, scalar_prefetch = 0 : i64, scratch_operands = 0 : i64, tpu.core_type = #tpu.core_type<tc>, window_params = [{transform_indices = @transform_0, window_bounds = array<i64: 64, 8, 500>}, {pipeline_mode = #tpu.pipeline_mode<synchronous>, transform_indices = @transform_1, window_bounds = array<i64: 500, 128>}, {pipeline_mode = #tpu.pipeline_mode<synchronous>, transform_indices = @transform_2, window_bounds = array<i64: 1, 128>}, {pipeline_mode = #tpu.pipeline_mode<synchronous>, transform_indices = @transform_3, window_bounds = array<i64: 16, 128, 128>}, {pipeline_mode = #tpu.pipeline_mode<synchronous>, transform_indices = @transform_4, window_bounds = array<i64: 1, 128>}, {transform_indices = @transform_5, window_bounds = array<i64: 8, 128>}]} {
    %c0 = arith.constant 0 : index
    %c0_0 = arith.constant 0 : index
    %c0_1 = arith.constant 0 : index
    %0 = vector.load %arg1[%c0, %c0_0, %c0_1] : memref<64x8x500xbf16, #tpu.memory_space<vmem>>, vector<64x8x500xbf16>
    %1 = vector.shape_cast %0 : vector<64x8x500xbf16> to vector<512x500xbf16>
    %c0_2 = arith.constant 0 : index
    %c0_3 = arith.constant 0 : index
    %2 = vector.load %arg2[%c0_2, %c0_3] : memref<500x128xbf16, #tpu.memory_space<vmem>>, vector<500x128xbf16>
    %cst = arith.constant dense<0.000000e+00> : vector<512x128xf32>
    %3 = tpu.matmul %1, %2, %cst {dimension_numbers = #tpu.dot_dimension_numbers<[1], [0], [0], [1], [0, 0, 1, 1], [], []>} : vector<512x500xbf16>, vector<500x128xbf16>, vector<512x128xf32> -> vector<512x128xf32>
    %4 = vector.shape_cast %3 : vector<512x128xf32> to vector<4x128x128xf32>
    %5 = vector.extract_strided_slice %4 {offsets = [0, 0, 0], sizes = [1, 128, 128], strides = [1, 1, 1]} : vector<4x128x128xf32> to vector<1x128x128xf32>
    %6 = vector.shape_cast %5 : vector<1x128x128xf32> to vector<128x128xf32>
    %7 = vector.extract_strided_slice %4 {offsets = [1, 0, 0], sizes = [1, 128, 128], strides = [1, 1, 1]} : vector<4x128x128xf32> to vector<1x128x128xf32>
    %8 = vector.shape_cast %7 : vector<1x128x128xf32> to vector<128x128xf32>
    %9 = arith.maximumf %6, %8 : vector<128x128xf32>
    %10 = vector.extract_strided_slice %4 {offsets = [2, 0, 0], sizes = [1, 128, 128], strides = [1, 1, 1]} : vector<4x128x128xf32> to vector<1x128x128xf32>
    %11 = vector.shape_cast %10 : vector<1x128x128xf32> to vector<128x128xf32>
    %12 = vector.extract_strided_slice %4 {offsets = [3, 0, 0], sizes = [1, 128, 128], strides = [1, 1, 1]} : vector<4x128x128xf32> to vector<1x128x128xf32>
    %13 = vector.shape_cast %12 : vector<1x128x128xf32> to vector<128x128xf32>
    %14 = arith.maximumf %11, %13 : vector<128x128xf32>
    %15 = arith.maximumf %9, %14 : vector<128x128xf32>
    %c0_4 = arith.constant 0 : index
    %c0_5 = arith.constant 0 : index
    %16 = vector.load %arg3[%c0_4, %c0_5] : memref<1x128xf32, #tpu.memory_space<vmem>>, vector<1x128xf32>
    %17 = vector.broadcast %16 : vector<1x128xf32> to vector<128x128xf32>
    %18 = arith.addf %15, %17 : vector<128x128xf32>
    %cst_6 = arith.constant 0.000000e+00 : f32
    %19 = vector.broadcast %cst_6 : f32 to vector<128x128xf32>
    %20 = arith.maximumf %18, %19 : vector<128x128xf32>
    %21 = arith.truncf %20 : vector<128x128xf32> to vector<128x128xbf16>
    %22 = vector.shape_cast %21 : vector<128x128xbf16> to vector<16x8x128xbf16>
    %c0_7 = arith.constant 0 : index
    %c0_8 = arith.constant 0 : index
    %c0_9 = arith.constant 0 : index
    %23 = vector.load %arg4[%c0_7, %c0_8, %c0_9] : memref<16x128x128xbf16, #tpu.memory_space<vmem>>, vector<16x128x128xbf16>
    %cst_10 = arith.constant 0.000000e+00 : f32
    %24 = vector.broadcast %cst_10 : f32 to vector<8x128xf32>
    %25 = vector.extract_strided_slice %22 {offsets = [0, 0, 0], sizes = [1, 8, 128], strides = [1, 1, 1]} : vector<16x8x128xbf16> to vector<1x8x128xbf16>
    %26 = vector.shape_cast %25 : vector<1x8x128xbf16> to vector<8x128xbf16>
    %27 = vector.extract_strided_slice %23 {offsets = [0, 0, 0], sizes = [1, 128, 128], strides = [1, 1, 1]} : vector<16x128x128xbf16> to vector<1x128x128xbf16>
    %28 = vector.shape_cast %27 : vector<1x128x128xbf16> to vector<128x128xbf16>
    %cst_11 = arith.constant dense<0.000000e+00> : vector<8x128xf32>
    %29 = tpu.matmul %26, %28, %cst_11 {dimension_numbers = #tpu.dot_dimension_numbers<[1], [0], [0], [1], [0, 0, 1, 1], [], []>} : vector<8x128xbf16>, vector<128x128xbf16>, vector<8x128xf32> -> vector<8x128xf32>
    %30 = arith.addf %24, %29 : vector<8x128xf32>
    %31 = vector.extract_strided_slice %22 {offsets = [1, 0, 0], sizes = [1, 8, 128], strides = [1, 1, 1]} : vector<16x8x128xbf16> to vector<1x8x128xbf16>
    %32 = vector.shape_cast %31 : vector<1x8x128xbf16> to vector<8x128xbf16>
    %33 = vector.extract_strided_slice %23 {offsets = [1, 0, 0], sizes = [1, 128, 128], strides = [1, 1, 1]} : vector<16x128x128xbf16> to vector<1x128x128xbf16>
    %34 = vector.shape_cast %33 : vector<1x128x128xbf16> to vector<128x128xbf16>
    %cst_12 = arith.constant dense<0.000000e+00> : vector<8x128xf32>
    %35 = tpu.matmul %32, %34, %cst_12 {dimension_numbers = #tpu.dot_dimension_numbers<[1], [0], [0], [1], [0, 0, 1, 1], [], []>} : vector<8x128xbf16>, vector<128x128xbf16>, vector<8x128xf32> -> vector<8x128xf32>
    %36 = arith.addf %30, %35 : vector<8x128xf32>
    %37 = vector.extract_strided_slice %22 {offsets = [2, 0, 0], sizes = [1, 8, 128], strides = [1, 1, 1]} : vector<16x8x128xbf16> to vector<1x8x128xbf16>
    %38 = vector.shape_cast %37 : vector<1x8x128xbf16> to vector<8x128xbf16>
    %39 = vector.extract_strided_slice %23 {offsets = [2, 0, 0], sizes = [1, 128, 128], strides = [1, 1, 1]} : vector<16x128x128xbf16> to vector<1x128x128xbf16>
    %40 = vector.shape_cast %39 : vector<1x128x128xbf16> to vector<128x128xbf16>
    %cst_13 = arith.constant dense<0.000000e+00> : vector<8x128xf32>
    %41 = tpu.matmul %38, %40, %cst_13 {dimension_numbers = #tpu.dot_dimension_numbers<[1], [0], [0], [1], [0, 0, 1, 1], [], []>} : vector<8x128xbf16>, vector<128x128xbf16>, vector<8x128xf32> -> vector<8x128xf32>
    %42 = arith.addf %36, %41 : vector<8x128xf32>
    %43 = vector.extract_strided_slice %22 {offsets = [3, 0, 0], sizes = [1, 8, 128], strides = [1, 1, 1]} : vector<16x8x128xbf16> to vector<1x8x128xbf16>
    %44 = vector.shape_cast %43 : vector<1x8x128xbf16> to vector<8x128xbf16>
    %45 = vector.extract_strided_slice %23 {offsets = [3, 0, 0], sizes = [1, 128, 128], strides = [1, 1, 1]} : vector<16x128x128xbf16> to vector<1x128x128xbf16>
    %46 = vector.shape_cast %45 : vector<1x128x128xbf16> to vector<128x128xbf16>
    %cst_14 = arith.constant dense<0.000000e+00> : vector<8x128xf32>
    %47 = tpu.matmul %44, %46, %cst_14 {dimension_numbers = #tpu.dot_dimension_numbers<[1], [0], [0], [1], [0, 0, 1, 1], [], []>} : vector<8x128xbf16>, vector<128x128xbf16>, vector<8x128xf32> -> vector<8x128xf32>
    %48 = arith.addf %42, %47 : vector<8x128xf32>
    %49 = vector.extract_strided_slice %22 {offsets = [4, 0, 0], sizes = [1, 8, 128], strides = [1, 1, 1]} : vector<16x8x128xbf16> to vector<1x8x128xbf16>
    %50 = vector.shape_cast %49 : vector<1x8x128xbf16> to vector<8x128xbf16>
    %51 = vector.extract_strided_slice %23 {offsets = [4, 0, 0], sizes = [1, 128, 128], strides = [1, 1, 1]} : vector<16x128x128xbf16> to vector<1x128x128xbf16>
    %52 = vector.shape_cast %51 : vector<1x128x128xbf16> to vector<128x128xbf16>
    %cst_15 = arith.constant dense<0.000000e+00> : vector<8x128xf32>
    %53 = tpu.matmul %50, %52, %cst_15 {dimension_numbers = #tpu.dot_dimension_numbers<[1], [0], [0], [1], [0, 0, 1, 1], [], []>} : vector<8x128xbf16>, vector<128x128xbf16>, vector<8x128xf32> -> vector<8x128xf32>
    %54 = arith.addf %48, %53 : vector<8x128xf32>
    %55 = vector.extract_strided_slice %22 {offsets = [5, 0, 0], sizes = [1, 8, 128], strides = [1, 1, 1]} : vector<16x8x128xbf16> to vector<1x8x128xbf16>
    %56 = vector.shape_cast %55 : vector<1x8x128xbf16> to vector<8x128xbf16>
    %57 = vector.extract_strided_slice %23 {offsets = [5, 0, 0], sizes = [1, 128, 128], strides = [1, 1, 1]} : vector<16x128x128xbf16> to vector<1x128x128xbf16>
    %58 = vector.shape_cast %57 : vector<1x128x128xbf16> to vector<128x128xbf16>
    %cst_16 = arith.constant dense<0.000000e+00> : vector<8x128xf32>
    %59 = tpu.matmul %56, %58, %cst_16 {dimension_numbers = #tpu.dot_dimension_numbers<[1], [0], [0], [1], [0, 0, 1, 1], [], []>} : vector<8x128xbf16>, vector<128x128xbf16>, vector<8x128xf32> -> vector<8x128xf32>
    %60 = arith.addf %54, %59 : vector<8x128xf32>
    %61 = vector.extract_strided_slice %22 {offsets = [6, 0, 0], sizes = [1, 8, 128], strides = [1, 1, 1]} : vector<16x8x128xbf16> to vector<1x8x128xbf16>
    %62 = vector.shape_cast %61 : vector<1x8x128xbf16> to vector<8x128xbf16>
    %63 = vector.extract_strided_slice %23 {offsets = [6, 0, 0], sizes = [1, 128, 128], strides = [1, 1, 1]} : vector<16x128x128xbf16> to vector<1x128x128xbf16>
    %64 = vector.shape_cast %63 : vector<1x128x128xbf16> to vector<128x128xbf16>
    %cst_17 = arith.constant dense<0.000000e+00> : vector<8x128xf32>
    %65 = tpu.matmul %62, %64, %cst_17 {dimension_numbers = #tpu.dot_dimension_numbers<[1], [0], [0], [1], [0, 0, 1, 1], [], []>} : vector<8x128xbf16>, vector<128x128xbf16>, vector<8x128xf32> -> vector<8x128xf32>
    %66 = arith.addf %60, %65 : vector<8x128xf32>
    %67 = vector.extract_strided_slice %22 {offsets = [7, 0, 0], sizes = [1, 8, 128], strides = [1, 1, 1]} : vector<16x8x128xbf16> to vector<1x8x128xbf16>
    %68 = vector.shape_cast %67 : vector<1x8x128xbf16> to vector<8x128xbf16>
    %69 = vector.extract_strided_slice %23 {offsets = [7, 0, 0], sizes = [1, 128, 128], strides = [1, 1, 1]} : vector<16x128x128xbf16> to vector<1x128x128xbf16>
    %70 = vector.shape_cast %69 : vector<1x128x128xbf16> to vector<128x128xbf16>
    %cst_18 = arith.constant dense<0.000000e+00> : vector<8x128xf32>
    %71 = tpu.matmul %68, %70, %cst_18 {dimension_numbers = #tpu.dot_dimension_numbers<[1], [0], [0], [1], [0, 0, 1, 1], [], []>} : vector<8x128xbf16>, vector<128x128xbf16>, vector<8x128xf32> -> vector<8x128xf32>
    %72 = arith.addf %66, %71 : vector<8x128xf32>
    %73 = vector.extract_strided_slice %22 {offsets = [8, 0, 0], sizes = [1, 8, 128], strides = [1, 1, 1]} : vector<16x8x128xbf16> to vector<1x8x128xbf16>
    %74 = vector.shape_cast %73 : vector<1x8x128xbf16> to vector<8x128xbf16>
    %75 = vector.extract_strided_slice %23 {offsets = [8, 0, 0], sizes = [1, 128, 128], strides = [1, 1, 1]} : vector<16x128x128xbf16> to vector<1x128x128xbf16>
    %76 = vector.shape_cast %75 : vector<1x128x128xbf16> to vector<128x128xbf16>
    %cst_19 = arith.constant dense<0.000000e+00> : vector<8x128xf32>
    %77 = tpu.matmul %74, %76, %cst_19 {dimension_numbers = #tpu.dot_dimension_numbers<[1], [0], [0], [1], [0, 0, 1, 1], [], []>} : vector<8x128xbf16>, vector<128x128xbf16>, vector<8x128xf32> -> vector<8x128xf32>
    %78 = arith.addf %72, %77 : vector<8x128xf32>
    %79 = vector.extract_strided_slice %22 {offsets = [9, 0, 0], sizes = [1, 8, 128], strides = [1, 1, 1]} : vector<16x8x128xbf16> to vector<1x8x128xbf16>
    %80 = vector.shape_cast %79 : vector<1x8x128xbf16> to vector<8x128xbf16>
    %81 = vector.extract_strided_slice %23 {offsets = [9, 0, 0], sizes = [1, 128, 128], strides = [1, 1, 1]} : vector<16x128x128xbf16> to vector<1x128x128xbf16>
    %82 = vector.shape_cast %81 : vector<1x128x128xbf16> to vector<128x128xbf16>
    %cst_20 = arith.constant dense<0.000000e+00> : vector<8x128xf32>
    %83 = tpu.matmul %80, %82, %cst_20 {dimension_numbers = #tpu.dot_dimension_numbers<[1], [0], [0], [1], [0, 0, 1, 1], [], []>} : vector<8x128xbf16>, vector<128x128xbf16>, vector<8x128xf32> -> vector<8x128xf32>
    %84 = arith.addf %78, %83 : vector<8x128xf32>
    %85 = vector.extract_strided_slice %22 {offsets = [10, 0, 0], sizes = [1, 8, 128], strides = [1, 1, 1]} : vector<16x8x128xbf16> to vector<1x8x128xbf16>
    %86 = vector.shape_cast %85 : vector<1x8x128xbf16> to vector<8x128xbf16>
    %87 = vector.extract_strided_slice %23 {offsets = [10, 0, 0], sizes = [1, 128, 128], strides = [1, 1, 1]} : vector<16x128x128xbf16> to vector<1x128x128xbf16>
    %88 = vector.shape_cast %87 : vector<1x128x128xbf16> to vector<128x128xbf16>
    %cst_21 = arith.constant dense<0.000000e+00> : vector<8x128xf32>
    %89 = tpu.matmul %86, %88, %cst_21 {dimension_numbers = #tpu.dot_dimension_numbers<[1], [0], [0], [1], [0, 0, 1, 1], [], []>} : vector<8x128xbf16>, vector<128x128xbf16>, vector<8x128xf32> -> vector<8x128xf32>
    %90 = arith.addf %84, %89 : vector<8x128xf32>
    %91 = vector.extract_strided_slice %22 {offsets = [11, 0, 0], sizes = [1, 8, 128], strides = [1, 1, 1]} : vector<16x8x128xbf16> to vector<1x8x128xbf16>
    %92 = vector.shape_cast %91 : vector<1x8x128xbf16> to vector<8x128xbf16>
    %93 = vector.extract_strided_slice %23 {offsets = [11, 0, 0], sizes = [1, 128, 128], strides = [1, 1, 1]} : vector<16x128x128xbf16> to vector<1x128x128xbf16>
    %94 = vector.shape_cast %93 : vector<1x128x128xbf16> to vector<128x128xbf16>
    %cst_22 = arith.constant dense<0.000000e+00> : vector<8x128xf32>
    %95 = tpu.matmul %92, %94, %cst_22 {dimension_numbers = #tpu.dot_dimension_numbers<[1], [0], [0], [1], [0, 0, 1, 1], [], []>} : vector<8x128xbf16>, vector<128x128xbf16>, vector<8x128xf32> -> vector<8x128xf32>
    %96 = arith.addf %90, %95 : vector<8x128xf32>
    %97 = vector.extract_strided_slice %22 {offsets = [12, 0, 0], sizes = [1, 8, 128], strides = [1, 1, 1]} : vector<16x8x128xbf16> to vector<1x8x128xbf16>
    %98 = vector.shape_cast %97 : vector<1x8x128xbf16> to vector<8x128xbf16>
    %99 = vector.extract_strided_slice %23 {offsets = [12, 0, 0], sizes = [1, 128, 128], strides = [1, 1, 1]} : vector<16x128x128xbf16> to vector<1x128x128xbf16>
    %100 = vector.shape_cast %99 : vector<1x128x128xbf16> to vector<128x128xbf16>
    %cst_23 = arith.constant dense<0.000000e+00> : vector<8x128xf32>
    %101 = tpu.matmul %98, %100, %cst_23 {dimension_numbers = #tpu.dot_dimension_numbers<[1], [0], [0], [1], [0, 0, 1, 1], [], []>} : vector<8x128xbf16>, vector<128x128xbf16>, vector<8x128xf32> -> vector<8x128xf32>
    %102 = arith.addf %96, %101 : vector<8x128xf32>
    %103 = vector.extract_strided_slice %22 {offsets = [13, 0, 0], sizes = [1, 8, 128], strides = [1, 1, 1]} : vector<16x8x128xbf16> to vector<1x8x128xbf16>
    %104 = vector.shape_cast %103 : vector<1x8x128xbf16> to vector<8x128xbf16>
    %105 = vector.extract_strided_slice %23 {offsets = [13, 0, 0], sizes = [1, 128, 128], strides = [1, 1, 1]} : vector<16x128x128xbf16> to vector<1x128x128xbf16>
    %106 = vector.shape_cast %105 : vector<1x128x128xbf16> to vector<128x128xbf16>
    %cst_24 = arith.constant dense<0.000000e+00> : vector<8x128xf32>
    %107 = tpu.matmul %104, %106, %cst_24 {dimension_numbers = #tpu.dot_dimension_numbers<[1], [0], [0], [1], [0, 0, 1, 1], [], []>} : vector<8x128xbf16>, vector<128x128xbf16>, vector<8x128xf32> -> vector<8x128xf32>
    %108 = arith.addf %102, %107 : vector<8x128xf32>
    %109 = vector.extract_strided_slice %22 {offsets = [14, 0, 0], sizes = [1, 8, 128], strides = [1, 1, 1]} : vector<16x8x128xbf16> to vector<1x8x128xbf16>
    %110 = vector.shape_cast %109 : vector<1x8x128xbf16> to vector<8x128xbf16>
    %111 = vector.extract_strided_slice %23 {offsets = [14, 0, 0], sizes = [1, 128, 128], strides = [1, 1, 1]} : vector<16x128x128xbf16> to vector<1x128x128xbf16>
    %112 = vector.shape_cast %111 : vector<1x128x128xbf16> to vector<128x128xbf16>
    %cst_25 = arith.constant dense<0.000000e+00> : vector<8x128xf32>
    %113 = tpu.matmul %110, %112, %cst_25 {dimension_numbers = #tpu.dot_dimension_numbers<[1], [0], [0], [1], [0, 0, 1, 1], [], []>} : vector<8x128xbf16>, vector<128x128xbf16>, vector<8x128xf32> -> vector<8x128xf32>
    %114 = arith.addf %108, %113 : vector<8x128xf32>
    %115 = vector.extract_strided_slice %22 {offsets = [15, 0, 0], sizes = [1, 8, 128], strides = [1, 1, 1]} : vector<16x8x128xbf16> to vector<1x8x128xbf16>
    %116 = vector.shape_cast %115 : vector<1x8x128xbf16> to vector<8x128xbf16>
    %117 = vector.extract_strided_slice %23 {offsets = [15, 0, 0], sizes = [1, 128, 128], strides = [1, 1, 1]} : vector<16x128x128xbf16> to vector<1x128x128xbf16>
    %118 = vector.shape_cast %117 : vector<1x128x128xbf16> to vector<128x128xbf16>
    %cst_26 = arith.constant dense<0.000000e+00> : vector<8x128xf32>
    %119 = tpu.matmul %116, %118, %cst_26 {dimension_numbers = #tpu.dot_dimension_numbers<[1], [0], [0], [1], [0, 0, 1, 1], [], []>} : vector<8x128xbf16>, vector<128x128xbf16>, vector<8x128xf32> -> vector<8x128xf32>
    %120 = arith.addf %114, %119 : vector<8x128xf32>
    %c0_27 = arith.constant 0 : index
    %c0_28 = arith.constant 0 : index
    %121 = vector.load %arg5[%c0_27, %c0_28] : memref<1x128xf32, #tpu.memory_space<vmem>>, vector<1x128xf32>
    %122 = vector.broadcast %121 : vector<1x128xf32> to vector<8x128xf32>
    %123 = arith.addf %120, %122 : vector<8x128xf32>
    %c0_29 = arith.constant 0 : index
    %c0_30 = arith.constant 0 : index
    %124 = vector.load %arg6[%c0_29, %c0_30] : memref<8x128xf32, #tpu.memory_space<vmem>>, vector<8x128xf32>
    tpu.vector_store %arg6[%c0_29, %c0_30], %123 {strides = array<i32>} : memref<8x128xf32, #tpu.memory_space<vmem>>, vector<8x128xf32>,
    return
  }
  func.func @transform_0(%arg0: i32) -> (i32, i32, i32) {
    %c0_i32 = arith.constant 0 : i32
    %c0_i32_0 = arith.constant 0 : i32
    %c0_i32_1 = arith.constant 0 : i32
    return %c0_i32, %arg0, %c0_i32_0 : i32, i32, i32
  }
  func.func @transform_1(%arg0: i32) -> (i32, i32) {
    %c0_i32 = arith.constant 0 : i32
    %c0_i32_0 = arith.constant 0 : i32
    %c0_i32_1 = arith.constant 0 : i32
    return %c0_i32, %c0_i32_0 : i32, i32
  }
  func.func @transform_2(%arg0: i32) -> (i32, i32) {
    %c0_i32 = arith.constant 0 : i32
    %c0_i32_0 = arith.constant 0 : i32
    %c0_i32_1 = arith.constant 0 : i32
    return %c0_i32, %c0_i32_0 : i32, i32
  }
  func.func @transform_3(%arg0: i32) -> (i32, i32, i32) {
    %c0_i32 = arith.constant 0 : i32
    %c0_i32_0 = arith.constant 0 : i32
    %c0_i32_1 = arith.constant 0 : i32
    %c0_i32_2 = arith.constant 0 : i32
    return %c0_i32, %c0_i32_0, %c0_i32_1 : i32, i32, i32
  }
  func.func @transform_4(%arg0: i32) -> (i32, i32) {
    %c0_i32 = arith.constant 0 : i32
    %c0_i32_0 = arith.constant 0 : i32
    %c0_i32_1 = arith.constant 0 : i32
    return %c0_i32, %c0_i32_0 : i32, i32
  }
  func.func @transform_5(%arg0: i32) -> (i32, i32) {
    %c0_i32 = arith.constant 0 : i32
    %c0_i32_0 = arith.constant 0 : i32
    return %arg0, %c0_i32 : i32, i32
  }
}

</mosaic_0001>

<llo_original>
// kernel: lenet_forward.2
$region0: #{lenet_forward.2}
  #allocation0 [shape = 'u32[]', space=smem, size = 0x4, offset = 0x4, fixed_abs, tag = 'smem constant byte address 0x4 - core index']
  #allocation1 [shape = 'u32[72,128]{1,0:T(1,128)}', space=vmem, size = 0x9000, scoped, tag = 'internal scratch']
  %s0 = inlined_call_operand.vmem [shape: bf16[4,288,25], index: 0, kind: input, shape index: {}]
  %s1 = inlined_call_operand.vmem [shape: bf16[25,128], index: 1, kind: input, shape index: {}]
  %s2 = inlined_call_operand.vmem [shape: f32[1,128], index: 2, kind: input, shape index: {}]
  %s3 = inlined_call_operand.vmem [shape: bf16[288,128], index: 3, kind: output, shape index: {}]
  %s4 = sld [smem:[#allocation0]]
  $region86: #{lenet_forward.2} parent=0
    _
  %s6 = ssub.s32 1, %s4
  %s7 = scalar_select 0, %s6, %s4
  $region1: #{lenet_forward.2} parent=0
    #allocation2 [shape = 'u8[294912]{0}', space=vmem, size = 0x48000, scoped, tag = 'input window, operand 0']
    loop: start=0, step=1, limit=4
    $region2: #{lenet_forward.2} parent=1 // loop_pre_header
      _
    $region3: #{lenet_forward.2} parent=1 // loop_header
      %s9 = sphi 0, %s13
      %p10 = scmp.ge.s32.totalorder %s9, 4
      %s19 = sphi 0, %s21
      %s22 = sphi 0, %s19
      %s23 = sphi 0, %s22
      %s39 = sphi 0, %s23
      %s43 = sphi 0, %s43
      %s45 = sphi 0, %s43
      %s46 = sphi 0, %s45
      %s60 = sphi 0, %s46
      %s64 = sphi 0, %s64
      %s66 = sphi 0, %s64
      %s67 = sphi 0, %s66
      %s81 = sphi 0, %s67
      %s87 = sphi 0, %s89
      %s90 = sphi 0, %s87
      %s91 = sphi 0, %s90
      %s107 = sphi 0, %s91
    $region4: #{lenet_forward.2} parent=1 // loop_header_branch
      %12 = sbr.rel (%p10) target = $region8
    $region5: #{lenet_forward.2} parent=1 // loop_body
      %s14 = ssub.s32 %s9, 1
      %s15 = ssub.s32 %s9, 2
      %s16 = sadd.s32 %s9, 1
      %s17 = ssub.s32 %s9, %s16
      %p18 = scmp.eq.s32.totalorder %s17, 0
      %s20 = sadd.s32 %s19, 1
      %s21 = scalar_select %p18, %s19, %s20
      %p24 = pneg %p18
      %p25 = scmp.eq.s32.totalorder %s9, 1
      %p26 = por %p24, %p25
      %p27 = scmp.ne.s32.totalorder %s19, %s22
      %p28 = scmp.eq.s32.totalorder %s9, 0
      %p29 = por %p27, %p28
      %p30 = scmp.ne.s32.totalorder %s19, %s22
      %p31 = scmp.eq.s32.totalorder %s14, 1
      %p32 = por %p30, %p31
      %p33 = scmp.ne.s32.totalorder %s22, %s23
      %p34 = scmp.eq.s32.totalorder %s14, 0
      %p35 = por %p33, %p34
      %p36 = scmp.ne.s32.totalorder %s22, %s23
      %p37 = scmp.eq.s32.totalorder %s15, 1
      %p38 = por %p36, %p37
      %p40 = scmp.ne.s32.totalorder %s23, %s39
      %p41 = scmp.eq.s32.totalorder %s15, 0
      %p42 = por %p40, %p41
      %s44 = sadd.s32 %s43, 1
      %p47 = scmp.eq.s32.totalorder %s9, 1
      %p48 = scmp.ne.s32.totalorder %s43, %s45
      %p49 = scmp.eq.s32.totalorder %s9, 0
      %p50 = por %p48, %p49
      %p51 = scmp.ne.s32.totalorder %s43, %s45
      %p52 = scmp.eq.s32.totalorder %s14, 1
      %p53 = por %p51, %p52
      %p54 = scmp.ne.s32.totalorder %s45, %s46
      %p55 = scmp.eq.s32.totalorder %s14, 0
      %p56 = por %p54, %p55
      %p57 = scmp.ne.s32.totalorder %s45, %s46
      %p58 = scmp.eq.s32.totalorder %s15, 1
      %p59 = por %p57, %p58
      %p61 = scmp.ne.s32.totalorder %s46, %s60
      %p62 = scmp.eq.s32.totalorder %s15, 0
      %p63 = por %p61, %p62
      %s65 = sadd.s32 %s64, 1
      %p68 = scmp.eq.s32.totalorder %s9, 1
      %p69 = scmp.ne.s32.totalorder %s64, %s66
      %p70 = scmp.eq.s32.totalorder %s9, 0
      %p71 = por %p69, %p70
      %p72 = scmp.ne.s32.totalorder %s64, %s66
      %p73 = scmp.eq.s32.totalorder %s14, 1
      %p74 = por %p72, %p73
      %p75 = scmp.ne.s32.totalorder %s66, %s67
      %p76 = scmp.eq.s32.totalorder %s14, 0
      %p77 = por %p75, %p76
      %p78 = scmp.ne.s32.totalorder %s66, %s67
      %p79 = scmp.eq.s32.totalorder %s15, 1
      %p80 = por %p78, %p79
      %p82 = scmp.ne.s32.totalorder %s67, %s81
      %p83 = scmp.eq.s32.totalorder %s15, 0
      %p84 = por %p82, %p83
      %s85 = ssub.s32 %s9, %s16
      %p86 = scmp.eq.s32.totalorder %s85, 0
      %s88 = sadd.s32 %s87, 1
      %s89 = scalar_select %p86, %s87, %s88
      %p92 = pneg %p86
      %p93 = scmp.eq.s32.totalorder %s9, 1
      %p94 = por %p92, %p93
      %p95 = scmp.ne.s32.totalorder %s87, %s90
      %p96 = scmp.eq.s32.totalorder %s9, 0
      %p97 = por %p95, %p96
      %p98 = scmp.ne.s32.totalorder %s87, %s90
      %p99 = scmp.eq.s32.totalorder %s14, 1
      %p100 = por %p98, %p99
      %p101 = scmp.ne.s32.totalorder %s90, %s91
      %p102 = scmp.eq.s32.totalorder %s14, 0
      %p103 = por %p101, %p102
      %p104 = scmp.ne.s32.totalorder %s90, %s91
      %p105 = scmp.eq.s32.totalorder %s15, 1
      %p106 = por %p104, %p105
      %p108 = scmp.ne.s32.totalorder %s91, %s107
      %p109 = scmp.eq.s32.totalorder %s15, 0
      %p110 = por %p108, %p109
      %p111 = scmp.le.s32.totalorder 1, %s9
      %p112 = scmp.lt.s32.totalorder %s9, 3
      %p113 = pnand %p111, %p112
      %p114 = pneg %p113
      // Predicated region
      $region9: #{lenet_forward.2} parent=5 // pred_check
        _
      $region10: #{lenet_forward.2} parent=5 // pred_check_branch
        %116 = sbr.rel (%p113) target = $region12
      $region11: #{lenet_forward.2} parent=5 // pred_region
        %s117 = ssub.s32 %s9, 1
        // Predicated region
        $region13: #{lenet_forward.2} parent=11 // pred_check
          %p118 = pneg %p56
        $region14: #{lenet_forward.2} parent=11 // pred_check_branch
          %120 = sbr.rel (%p118) target = $region16
        $region15: #{lenet_forward.2} parent=11 // pred_region
          _
        $region16: #{lenet_forward.2} parent=11 // pred_fallthru
          _
        // Predicated region
        $region17: #{lenet_forward.2} parent=11 // pred_check
          %p121 = pneg %p77
        $region18: #{lenet_forward.2} parent=11 // pred_check_branch
          %123 = sbr.rel (%p121) target = $region20
        $region19: #{lenet_forward.2} parent=11 // pred_region
          _
        $region20: #{lenet_forward.2} parent=11 // pred_fallthru
          _
      $region12: #{lenet_forward.2} parent=5 // pred_fallthru
        _
      %p124 = scmp.lt.s32.totalorder %s9, 2
      // Predicated region
      $region21: #{lenet_forward.2} parent=5 // pred_check
        %p125 = pneg %p124
      $region22: #{lenet_forward.2} parent=5 // pred_check_branch
        %127 = sbr.rel (%p125) target = $region24
      $region23: #{lenet_forward.2} parent=5 // pred_region
        // Predicated region
        $region25: #{lenet_forward.2} parent=23 // pred_check
          %p128 = pneg %p29
        $region26: #{lenet_forward.2} parent=23 // pred_check_branch
          %130 = sbr.rel (%p128) target = $region28
        $region27: #{lenet_forward.2} parent=23 // pred_region
          %s131 = sand.u32 %s19, 1
          %s132 = sand.u32 %s19, 1
          %s133 = smul.addr %s132, 288
          %s134 = scalar_lea.vmem [#allocation2], %s133
          %s135 = smul.u32 18, %s9
          %s136 = smul.addr %s135, 4
          %s137 = scalar_lea.vmem %s0, %s136
          // Predicated region
          $region29: #{lenet_forward.2} parent=27 // pred_check
            _
          $region30: #{lenet_forward.2} parent=27 // pred_check_branch
            %139 = sbr.rel (0) target = $region32
          $region31: #{lenet_forward.2} parent=27 // pred_region
            // Predicated region
            $region33: #{lenet_forward.2} parent=31 // pred_check
              _
            $region34: #{lenet_forward.2} parent=31 // pred_check_branch
              %141 = sbr.rel target = $region36
            $region35: #{lenet_forward.2} parent=31 // pred_region
              // Predicated region
              $region48: #{lenet_forward.2} parent=35 // pred_check
                _
              $region49: #{lenet_forward.2} parent=35 // pred_check_branch
                %299 = sbr.rel (0) target = $region51
              $region50: #{lenet_forward.2} parent=35 // pred_region
                loop: start=0, step=1, limit=1
                $region52: #{lenet_forward.2} parent=50 // loop_pre_header
                  _
                $region53: #{lenet_forward.2} parent=50 // loop_header
                  %s301 = sphi 0, %s305
                  %p302 = scmp.ge.s32.totalorder %s301, 1
                  %s306 = sphi %s137, %s137
                  %s307 = sphi %s134, %s134
                $region54: #{lenet_forward.2} parent=50 // loop_header_branch
                  %304 = sbr.rel (%p302) target = $region58
                $region55: #{lenet_forward.2} parent=50 // loop_body
                  _
                $region56: #{lenet_forward.2} parent=50 // loop_footer
                  %s305 = sadd.s32 1, %s301
                $region57: #{lenet_forward.2} parent=50 // loop_footer_branch
                  %300 = sbr.rel target = $region53
                $region58: #{lenet_forward.2} parent=50 // loop_exit
                  _
                %s309 = ssub.s32 16, 1
                loop: start=0, step=1, limit=1
                $region59: #{lenet_forward.2} parent=50 // loop_pre_header
                  _
                $region60: #{lenet_forward.2} parent=50 // loop_header
                  %s311 = sphi 0, %s315
                  %p312 = scmp.ge.s32.totalorder %s311, 1
                  %s316 = sphi %s137, %s137
                  %s317 = sphi %s134, %s134
                $region61: #{lenet_forward.2} parent=50 // loop_header_branch
                  %314 = sbr.rel (%p312) target = $region65
                $region62: #{lenet_forward.2} parent=50 // loop_body
                  %v318 = vld [vmem:[%s316] sm:%s309]
                  %319 = vst [vmem:[%s317] sm:%s309] %v318
                  %v320 = vld [vmem:[%s316 + $0x4] sm:%s309]
                  %321 = vst [vmem:[%s317 + $0x4] sm:%s309] %v320
                  %v322 = vld [vmem:[%s316 + $0x8] sm:%s309]
                  %323 = vst [vmem:[%s317 + $0x8] sm:%s309] %v322
                  %v324 = vld [vmem:[%s316 + $0xc] sm:%s309]
                  %325 = vst [vmem:[%s317 + $0xc] sm:%s309] %v324
                  %v326 = vld [vmem:[%s316 + $0x10] sm:%s309]
                  %327 = vst [vmem:[%s317 + $0x10] sm:%s309] %v326
                  %v328 = vld [vmem:[%s316 + $0x14] sm:%s309]
                  %329 = vst [vmem:[%s317 + $0x14] sm:%s309] %v328
                  %v330 = vld [vmem:[%s316 + $0x18] sm:%s309]
                  %331 = vst [vmem:[%s317 + $0x18] sm:%s309] %v330
                  %v332 = vld [vmem:[%s316 + $0x1c] sm:%s309]
                  %333 = vst [vmem:[%s317 + $0x1c] sm:%s309] %v332
                  %v334 = vld [vmem:[%s316 + $0x20] sm:%s309]
                  %335 = vst [vmem:[%s317 + $0x20] sm:%s309] %v334
                  %v336 = vld [vmem:[%s316 + $0x24] sm:%s309]
                  %337 = vst [vmem:[%s317 + $0x24] sm:%s309] %v336
                  %v338 = vld [vmem:[%s316 + $0x28] sm:%s309]
                  %339 = vst [vmem:[%s317 + $0x28] sm:%s309] %v338
                  %v340 = vld [vmem:[%s316 + $0x2c] sm:%s309]
                  %341 = vst [vmem:[%s317 + $0x2c] sm:%s309] %v340
                  %v342 = vld [vmem:[%s316 + $0x30] sm:%s309]
                  %343 = vst [vmem:[%s317 + $0x30] sm:%s309] %v342
                  %v344 = vld [vmem:[%s316 + $0x34] sm:%s309]
                  %345 = vst [vmem:[%s317 + $0x34] sm:%s309] %v344
                  %v346 = vld [vmem:[%s316 + $0x38] sm:%s309]
                  %347 = vst [vmem:[%s317 + $0x38] sm:%s309] %v346
                  %v348 = vld [vmem:[%s316 + $0x3c] sm:%s309]
                  %349 = vst [vmem:[%s317 + $0x3c] sm:%s309] %v348
                  %v350 = vld [vmem:[%s316 + $0x40] sm:%s309]
                  %351 = vst [vmem:[%s317 + $0x40] sm:%s309] %v350
                  %v352 = vld [vmem:[%s316 + $0x44] sm:%s309]
                  %353 = vst [vmem:[%s317 + $0x44] sm:%s309] %v352
                  %v354 = vld [vmem:[%s316 + $0x90] sm:%s309]
                  %355 = vst [vmem:[%s317 + $0x48] sm:%s309] %v354
                  %v356 = vld [vmem:[%s316 + $0x94] sm:%s309]
                  %357 = vst [vmem:[%s317 + $0x4c] sm:%s309] %v356
                  %v358 = vld [vmem:[%s316 + $0x98] sm:%s309]
                  %359 = vst [vmem:[%s317 + $0x50] sm:%s309] %v358
                  %v360 = vld [vmem:[%s316 + $0x9c] sm:%s309]
                  %361 = vst [vmem:[%s317 + $0x54] sm:%s309] %v360
                  %v362 = vld [vmem:[%s316 + $0xa0] sm:%s309]
                  %363 = vst [vmem:[%s317 + $0x58] sm:%s309] %v362
                  %v364 = vld [vmem:[%s316 + $0xa4] sm:%s309]
                  %365 = vst [vmem:[%s317 + $0x5c] sm:%s309] %v364
                  %v366 = vld [vmem:[%s316 + $0xa8] sm:%s309]
                  %367 = vst [vmem:[%s317 + $0x60] sm:%s309] %v366
                  %v368 = vld [vmem:[%s316 + $0xac] sm:%s309]
                  %369 = vst [vmem:[%s317 + $0x64] sm:%s309] %v368
                  %v370 = vld [vmem:[%s316 + $0xb0] sm:%s309]
                  %371 = vst [vmem:[%s317 + $0x68] sm:%s309] %v370
                  %v372 = vld [vmem:[%s316 + $0xb4] sm:%s309]
                  %373 = vst [vmem:[%s317 + $0x6c] sm:%s309] %v372
                  %v374 = vld [vmem:[%s316 + $0xb8] sm:%s309]
                  %375 = vst [vmem:[%s317 + $0x70] sm:%s309] %v374
                  %v376 = vld [vmem:[%s316 + $0xbc] sm:%s309]
                  %377 = vst [vmem:[%s317 + $0x74] sm:%s309] %v376
                  %v378 = vld [vmem:[%s316 + $0xc0] sm:%s309]
                  %379 = vst [vmem:[%s317 + $0x78] sm:%s309] %v378
                  %v380 = vld [vmem:[%s316 + $0xc4] sm:%s309]
                  %381 = vst [vmem:[%s317 + $0x7c] sm:%s309] %v380
                  %v382 = vld [vmem:[%s316 + $0xc8] sm:%s309]
                  %383 = vst [vmem:[%s317 + $0x80] sm:%s309] %v382
                  %v384 = vld [vmem:[%s316 + $0xcc] sm:%s309]
                  %385 = vst [vmem:[%s317 + $0x84] sm:%s309] %v384
                  %v386 = vld [vmem:[%s316 + $0xd0] sm:%s309]
                  %387 = vst [vmem:[%s317 + $0x88] sm:%s309] %v386
                  %v388 = vld [vmem:[%s316 + $0xd4] sm:%s309]
                  %389 = vst [vmem:[%s317 + $0x8c] sm:%s309] %v388
                  %v390 = vld [vmem:[%s316 + $0x120] sm:%s309]
                  %391 = vst [vmem:[%s317 + $0x90] sm:%s309] %v390
                  %v392 = vld [vmem:[%s316 + $0x124] sm:%s309]
                  %393 = vst [vmem:[%s317 + $0x94] sm:%s309] %v392
                  %v394 = vld [vmem:[%s316 + $0x128] sm:%s309]
                  %395 = vst [vmem:[%s317 + $0x98] sm:%s309] %v394
                  %v396 = vld [vmem:[%s316 + $0x12c] sm:%s309]
                  %397 = vst [vmem:[%s317 + $0x9c] sm:%s309] %v396
                  %v398 = vld [vmem:[%s316 + $0x130] sm:%s309]
                  %399 = vst [vmem:[%s317 + $0xa0] sm:%s309] %v398
                  %v400 = vld [vmem:[%s316 + $0x134] sm:%s309]
                  %401 = vst [vmem:[%s317 + $0xa4] sm:%s309] %v400
                  %v402 = vld [vmem:[%s316 + $0x138] sm:%s309]
                  %403 = vst [vmem:[%s317 + $0xa8] sm:%s309] %v402
                  %v404 = vld [vmem:[%s316 + $0x13c] sm:%s309]
                  %405 = vst [vmem:[%s317 + $0xac] sm:%s309] %v404
                  %v406 = vld [vmem:[%s316 + $0x140] sm:%s309]
                  %407 = vst [vmem:[%s317 + $0xb0] sm:%s309] %v406
                  %v408 = vld [vmem:[%s316 + $0x144] sm:%s309]
                  %409 = vst [vmem:[%s317 + $0xb4] sm:%s309] %v408
                  %v410 = vld [vmem:[%s316 + $0x148] sm:%s309]
                  %411 = vst [vmem:[%s317 + $0xb8] sm:%s309] %v410
                  %v412 = vld [vmem:[%s316 + $0x14c] sm:%s309]
                  %413 = vst [vmem:[%s317 + $0xbc] sm:%s309] %v412
                  %v414 = vld [vmem:[%s316 + $0x150] sm:%s309]
                  %415 = vst [vmem:[%s317 + $0xc0] sm:%s309] %v414
                  %v416 = vld [vmem:[%s316 + $0x154] sm:%s309]
                  %417 = vst [vmem:[%s317 + $0xc4] sm:%s309] %v416
                  %v418 = vld [vmem:[%s316 + $0x158] sm:%s309]
                  %419 = vst [vmem:[%s317 + $0xc8] sm:%s309] %v418
                  %v420 = vld [vmem:[%s316 + $0x15c] sm:%s309]
                  %421 = vst [vmem:[%s317 + $0xcc] sm:%s309] %v420
                  %v422 = vld [vmem:[%s316 + $0x160] sm:%s309]
                  %423 = vst [vmem:[%s317 + $0xd0] sm:%s309] %v422
                  %v424 = vld [vmem:[%s316 + $0x164] sm:%s309]
                  %425 = vst [vmem:[%s317 + $0xd4] sm:%s309] %v424
                  %v426 = vld [vmem:[%s316 + $0x1b0] sm:%s309]
                  %427 = vst [vmem:[%s317 + $0xd8] sm:%s309] %v426
                  %v428 = vld [vmem:[%s316 + $0x1b4] sm:%s309]
                  %429 = vst [vmem:[%s317 + $0xdc] sm:%s309] %v428
                  %v430 = vld [vmem:[%s316 + $0x1b8] sm:%s309]
                  %431 = vst [vmem:[%s317 + $0xe0] sm:%s309] %v430
                  %v432 = vld [vmem:[%s316 + $0x1bc] sm:%s309]
                  %433 = vst [vmem:[%s317 + $0xe4] sm:%s309] %v432
                  %v434 = vld [vmem:[%s316 + $0x1c0] sm:%s309]
                  %435 = vst [vmem:[%s317 + $0xe8] sm:%s309] %v434
                  %v436 = vld [vmem:[%s316 + $0x1c4] sm:%s309]
                  %437 = vst [vmem:[%s317 + $0xec] sm:%s309] %v436
                  %v438 = vld [vmem:[%s316 + $0x1c8] sm:%s309]
                  %439 = vst [vmem:[%s317 + $0xf0] sm:%s309] %v438
                  %v440 = vld [vmem:[%s316 + $0x1cc] sm:%s309]
                  %441 = vst [vmem:[%s317 + $0xf4] sm:%s309] %v440
                  %v442 = vld [vmem:[%s316 + $0x1d0] sm:%s309]
                  %443 = vst [vmem:[%s317 + $0xf8] sm:%s309] %v442
                  %v444 = vld [vmem:[%s316 + $0x1d4] sm:%s309]
                  %445 = vst [vmem:[%s317 + $0xfc] sm:%s309] %v444
                  %v446 = vld [vmem:[%s316 + $0x1d8] sm:%s309]
                  %447 = vst [vmem:[%s317 + $0x100] sm:%s309] %v446
                  %v448 = vld [vmem:[%s316 + $0x1dc] sm:%s309]
                  %449 = vst [vmem:[%s317 + $0x104] sm:%s309] %v448
                  %v450 = vld [vmem:[%s316 + $0x1e0] sm:%s309]
                  %451 = vst [vmem:[%s317 + $0x108] sm:%s309] %v450
                  %v452 = vld [vmem:[%s316 + $0x1e4] sm:%s309]
                  %453 = vst [vmem:[%s317 + $0x10c] sm:%s309] %v452
                  %v454 = vld [vmem:[%s316 + $0x1e8] sm:%s309]
                  %455 = vst [vmem:[%s317 + $0x110] sm:%s309] %v454
                  %v456 = vld [vmem:[%s316 + $0x1ec] sm:%s309]
                  %457 = vst [vmem:[%s317 + $0x114] sm:%s309] %v456
                  %v458 = vld [vmem:[%s316 + $0x1f0] sm:%s309]
                  %459 = vst [vmem:[%s317 + $0x118] sm:%s309] %v458
                  %v460 = vld [vmem:[%s316 + $0x1f4] sm:%s309]
                  %461 = vst [vmem:[%s317 + $0x11c] sm:%s309] %v460
                $region63: #{lenet_forward.2} parent=50 // loop_footer
                  %s315 = sadd.s32 1, %s311
                $region64: #{lenet_forward.2} parent=50 // loop_footer_branch
                  %310 = sbr.rel target = $region60
                $region65: #{lenet_forward.2} parent=50 // loop_exit
                  _
              $region51: #{lenet_forward.2} parent=35 // pred_fallthru
                _
            $region36: #{lenet_forward.2} parent=31 // pred_fallthru
              _
            // Predicated region
            $region37: #{lenet_forward.2} parent=31 // pred_check
              _
            $region38: #{lenet_forward.2} parent=31 // pred_check_branch
              %143 = sbr.rel (0) target = $region40
            $region39: #{lenet_forward.2} parent=31 // pred_region
              %s145 = ssub.s32 16, 1
              loop: start=0, step=1, limit=1
              $region41: #{lenet_forward.2} parent=39 // loop_pre_header
                _
              $region42: #{lenet_forward.2} parent=39 // loop_header
                %s147 = sphi 0, %s151
                %p148 = scmp.ge.s32.totalorder %s147, 1
                %s152 = sphi %s137, %s137
                %s153 = sphi %s134, %s134
              $region43: #{lenet_forward.2} parent=39 // loop_header_branch
                %150 = sbr.rel (%p148) target = $region47
              $region44: #{lenet_forward.2} parent=39 // loop_body
                %v154 = vld [vmem:[%s152] sm:%s145]
                %155 = vst [vmem:[%s153] sm:%s145] %v154
                %v156 = vld [vmem:[%s152 + $0x4] sm:%s145]
                %157 = vst [vmem:[%s153 + $0x4] sm:%s145] %v156
                %v158 = vld [vmem:[%s152 + $0x8] sm:%s145]
                %159 = vst [vmem:[%s153 + $0x8] sm:%s145] %v158
                %v160 = vld [vmem:[%s152 + $0xc] sm:%s145]
                %161 = vst [vmem:[%s153 + $0xc] sm:%s145] %v160
                %v162 = vld [vmem:[%s152 + $0x10] sm:%s145]
                %163 = vst [vmem:[%s153 + $0x10] sm:%s145] %v162
                %v164 = vld [vmem:[%s152 + $0x14] sm:%s145]
                %165 = vst [vmem:[%s153 + $0x14] sm:%s145] %v164
                %v166 = vld [vmem:[%s152 + $0x18] sm:%s145]
                %167 = vst [vmem:[%s153 + $0x18] sm:%s145] %v166
                %v168 = vld [vmem:[%s152 + $0x1c] sm:%s145]
                %169 = vst [vmem:[%s153 + $0x1c] sm:%s145] %v168
                %v170 = vld [vmem:[%s152 + $0x20] sm:%s145]
                %171 = vst [vmem:[%s153 + $0x20] sm:%s145] %v170
                %v172 = vld [vmem:[%s152 + $0x24] sm:%s145]
                %173 = vst [vmem:[%s153 + $0x24] sm:%s145] %v172
                %v174 = vld [vmem:[%s152 + $0x28] sm:%s145]
                %175 = vst [vmem:[%s153 + $0x28] sm:%s145] %v174
                %v176 = vld [vmem:[%s152 + $0x2c] sm:%s145]
                %177 = vst [vmem:[%s153 + $0x2c] sm:%s145] %v176
                %v178 = vld [vmem:[%s152 + $0x30] sm:%s145]
                %179 = vst [vmem:[%s153 + $0x30] sm:%s145] %v178
                %v180 = vld [vmem:[%s152 + $0x34] sm:%s145]
                %181 = vst [vmem:[%s153 + $0x34] sm:%s145] %v180
                %v182 = vld [vmem:[%s152 + $0x38] sm:%s145]
                %183 = vst [vmem:[%s153 + $0x38] sm:%s145] %v182
                %v184 = vld [vmem:[%s152 + $0x3c] sm:%s145]
                %185 = vst [vmem:[%s153 + $0x3c] sm:%s145] %v184
                %v186 = vld [vmem:[%s152 + $0x40] sm:%s145]
                %187 = vst [vmem:[%s153 + $0x40] sm:%s145] %v186
                %v188 = vld [vmem:[%s152 + $0x44] sm:%s145]
                %189 = vst [vmem:[%s153 + $0x44] sm:%s145] %v188
                %v190 = vld [vmem:[%s152 + $0x90] sm:%s145]
                %191 = vst [vmem:[%s153 + $0x48] sm:%s145] %v190
                %v192 = vld [vmem:[%s152 + $0x94] sm:%s145]
                %193 = vst [vmem:[%s153 + $0x4c] sm:%s145] %v192
                %v194 = vld [vmem:[%s152 + $0x98] sm:%s145]
                %195 = vst [vmem:[%s153 + $0x50] sm:%s145] %v194
                %v196 = vld [vmem:[%s152 + $0x9c] sm:%s145]
                %197 = vst [vmem:[%s153 + $0x54] sm:%s145] %v196
                %v198 = vld [vmem:[%s152 + $0xa0] sm:%s145]
                %199 = vst [vmem:[%s153 + $0x58] sm:%s145] %v198
                %v200 = vld [vmem:[%s152 + $0xa4] sm:%s145]
                %201 = vst [vmem:[%s153 + $0x5c] sm:%s145] %v200
                %v202 = vld [vmem:[%s152 + $0xa8] sm:%s145]
                %203 = vst [vmem:[%s153 + $0x60] sm:%s145] %v202
                %v204 = vld [vmem:[%s152 + $0xac] sm:%s145]
                %205 = vst [vmem:[%s153 + $0x64] sm:%s145] %v204
                %v206 = vld [vmem:[%s152 + $0xb0] sm:%s145]
                %207 = vst [vmem:[%s153 + $0x68] sm:%s145] %v206
                %v208 = vld [vmem:[%s152 + $0xb4] sm:%s145]
                %209 = vst [vmem:[%s153 + $0x6c] sm:%s145] %v208
                %v210 = vld [vmem:[%s152 + $0xb8] sm:%s145]
                %211 = vst [vmem:[%s153 + $0x70] sm:%s145] %v210
                %v212 = vld [vmem:[%s152 + $0xbc] sm:%s145]
                %213 = vst [vmem:[%s153 + $0x74] sm:%s145] %v212
                %v214 = vld [vmem:[%s152 + $0xc0] sm:%s145]
                %215 = vst [vmem:[%s153 + $0x78] sm:%s145] %v214
                %v216 = vld [vmem:[%s152 + $0xc4] sm:%s145]
                %217 = vst [vmem:[%s153 + $0x7c] sm:%s145] %v216
                %v218 = vld [vmem:[%s152 + $0xc8] sm:%s145]
                %219 = vst [vmem:[%s153 + $0x80] sm:%s145] %v218
                %v220 = vld [vmem:[%s152 + $0xcc] sm:%s145]
                %221 = vst [vmem:[%s153 + $0x84] sm:%s145] %v220
                %v222 = vld [vmem:[%s152 + $0xd0] sm:%s145]
                %223 = vst [vmem:[%s153 + $0x88] sm:%s145] %v222
                %v224 = vld [vmem:[%s152 + $0xd4] sm:%s145]
                %225 = vst [vmem:[%s153 + $0x8c] sm:%s145] %v224
                %v226 = vld [vmem:[%s152 + $0x120] sm:%s145]
                %227 = vst [vmem:[%s153 + $0x90] sm:%s145] %v226
                %v228 = vld [vmem:[%s152 + $0x124] sm:%s145]
                %229 = vst [vmem:[%s153 + $0x94] sm:%s145] %v228
                %v230 = vld [vmem:[%s152 + $0x128] sm:%s145]
                %231 = vst [vmem:[%s153 + $0x98] sm:%s145] %v230
                %v232 = vld [vmem:[%s152 + $0x12c] sm:%s145]
                %233 = vst [vmem:[%s153 + $0x9c] sm:%s145] %v232
                %v234 = vld [vmem:[%s152 + $0x130] sm:%s145]
                %235 = vst [vmem:[%s153 + $0xa0] sm:%s145] %v234
                %v236 = vld [vmem:[%s152 + $0x134] sm:%s145]
                %237 = vst [vmem:[%s153 + $0xa4] sm:%s145] %v236
                %v238 = vld [vmem:[%s152 + $0x138] sm:%s145]
                %239 = vst [vmem:[%s153 + $0xa8] sm:%s145] %v238
                %v240 = vld [vmem:[%s152 + $0x13c] sm:%s145]
                %241 = vst [vmem:[%s153 + $0xac] sm:%s145] %v240
                %v242 = vld [vmem:[%s152 + $0x140] sm:%s145]
                %243 = vst [vmem:[%s153 + $0xb0] sm:%s145] %v242
                %v244 = vld [vmem:[%s152 + $0x144] sm:%s145]
                %245 = vst [vmem:[%s153 + $0xb4] sm:%s145] %v244
                %v246 = vld [vmem:[%s152 + $0x148] sm:%s145]
                %247 = vst [vmem:[%s153 + $0xb8] sm:%s145] %v246
                %v248 = vld [vmem:[%s152 + $0x14c] sm:%s145]
                %249 = vst [vmem:[%s153 + $0xbc] sm:%s145] %v248
                %v250 = vld [vmem:[%s152 + $0x150] sm:%s145]
                %251 = vst [vmem:[%s153 + $0xc0] sm:%s145] %v250
                %v252 = vld [vmem:[%s152 + $0x154] sm:%s145]
                %253 = vst [vmem:[%s153 + $0xc4] sm:%s145] %v252
                %v254 = vld [vmem:[%s152 + $0x158] sm:%s145]
                %255 = vst [vmem:[%s153 + $0xc8] sm:%s145] %v254
                %v256 = vld [vmem:[%s152 + $0x15c] sm:%s145]
                %257 = vst [vmem:[%s153 + $0xcc] sm:%s145] %v256
                %v258 = vld [vmem:[%s152 + $0x160] sm:%s145]
                %259 = vst [vmem:[%s153 + $0xd0] sm:%s145] %v258
                %v260 = vld [vmem:[%s152 + $0x164] sm:%s145]
                %261 = vst [vmem:[%s153 + $0xd4] sm:%s145] %v260
                %v262 = vld [vmem:[%s152 + $0x1b0] sm:%s145]
                %263 = vst [vmem:[%s153 + $0xd8] sm:%s145] %v262
                %v264 = vld [vmem:[%s152 + $0x1b4] sm:%s145]
                %265 = vst [vmem:[%s153 + $0xdc] sm:%s145] %v264
                %v266 = vld [vmem:[%s152 + $0x1b8] sm:%s145]
                %267 = vst [vmem:[%s153 + $0xe0] sm:%s145] %v266
                %v268 = vld [vmem:[%s152 + $0x1bc] sm:%s145]
                %269 = vst [vmem:[%s153 + $0xe4] sm:%s145] %v268
                %v270 = vld [vmem:[%s152 + $0x1c0] sm:%s145]
                %271 = vst [vmem:[%s153 + $0xe8] sm:%s145] %v270
                %v272 = vld [vmem:[%s152 + $0x1c4] sm:%s145]
                %273 = vst [vmem:[%s153 + $0xec] sm:%s145] %v272
                %v274 = vld [vmem:[%s152 + $0x1c8] sm:%s145]
                %275 = vst [vmem:[%s153 + $0xf0] sm:%s145] %v274
                %v276 = vld [vmem:[%s152 + $0x1cc] sm:%s145]
                %277 = vst [vmem:[%s153 + $0xf4] sm:%s145] %v276
                %v278 = vld [vmem:[%s152 + $0x1d0] sm:%s145]
                %279 = vst [vmem:[%s153 + $0xf8] sm:%s145] %v278
                %v280 = vld [vmem:[%s152 + $0x1d4] sm:%s145]
                %281 = vst [vmem:[%s153 + $0xfc] sm:%s145] %v280
                %v282 = vld [vmem:[%s152 + $0x1d8] sm:%s145]
                %283 = vst [vmem:[%s153 + $0x100] sm:%s145] %v282
                %v284 = vld [vmem:[%s152 + $0x1dc] sm:%s145]
                %285 = vst [vmem:[%s153 + $0x104] sm:%s145] %v284
                %v286 = vld [vmem:[%s152 + $0x1e0] sm:%s145]
                %287 = vst [vmem:[%s153 + $0x108] sm:%s145] %v286
                %v288 = vld [vmem:[%s152 + $0x1e4] sm:%s145]
                %289 = vst [vmem:[%s153 + $0x10c] sm:%s145] %v288
                %v290 = vld [vmem:[%s152 + $0x1e8] sm:%s145]
                %291 = vst [vmem:[%s153 + $0x110] sm:%s145] %v290
                %v292 = vld [vmem:[%s152 + $0x1ec] sm:%s145]
                %293 = vst [vmem:[%s153 + $0x114] sm:%s145] %v292
                %v294 = vld [vmem:[%s152 + $0x1f0] sm:%s145]
                %295 = vst [vmem:[%s153 + $0x118] sm:%s145] %v294
                %v296 = vld [vmem:[%s152 + $0x1f4] sm:%s145]
                %297 = vst [vmem:[%s153 + $0x11c] sm:%s145] %v296
              $region45: #{lenet_forward.2} parent=39 // loop_footer
                %s151 = sadd.s32 1, %s147
              $region46: #{lenet_forward.2} parent=39 // loop_footer_branch
                %146 = sbr.rel target = $region42
              $region47: #{lenet_forward.2} parent=39 // loop_exit
                _
            $region40: #{lenet_forward.2} parent=31 // pred_fallthru
              _
          $region32: #{lenet_forward.2} parent=27 // pred_fallthru
            _
          %462 = vnop
        $region28: #{lenet_forward.2} parent=23 // pred_fallthru
          _
      $region24: #{lenet_forward.2} parent=5 // pred_fallthru
        _
      %p463 = scmp.le.s32.totalorder 1, %s9
      %p464 = scmp.lt.s32.totalorder %s9, 3
      %p465 = pnand %p463, %p464
      %p466 = pneg %p465
      // Predicated region
      $region66: #{lenet_forward.2} parent=5 // pred_check
        _
      $region67: #{lenet_forward.2} parent=5 // pred_check_branch
        %468 = sbr.rel (%p465) target = $region69
      $region68: #{lenet_forward.2} parent=5 // pred_region
        %s469 = ssub.s32 %s9, 1
        %s470 = sand.u32 %s22, 1
        %s471 = sand.u32 %s22, 1
        %s472 = smul.addr %s471, 288
        %s473 = scalar_lea.vmem [#allocation2], %s472
        // Predicated region
        $region70: #{lenet_forward.2} parent=68 // pred_check
          %p474 = pneg %p35
        $region71: #{lenet_forward.2} parent=68 // pred_check_branch
          %476 = sbr.rel (%p474) target = $region73
        $region72: #{lenet_forward.2} parent=68 // pred_region
          _
        $region73: #{lenet_forward.2} parent=68 // pred_fallthru
          _
        %s477 = sand.u32 %s22, 1
        %s478 = sand.u32 %s22, 1
        %s479 = smul.addr %s478, 288
        %s480 = scalar_lea.vmem [#allocation2], %s479
        %p481 = pneg %p35
        %p482 = pneg %p32
        %p483 = pneg %p56
        %p484 = pneg %p53
        %p485 = pneg %p77
        %p486 = pneg %p74
        %p487 = pneg %p103
        %p488 = pneg %p100
        %s489 = smul.u32 18, %s14
        %p490 = scmp.lt.s32.totalorder %s489, 35
        %s491 = scalar_select %p490, %s489, 35
        %s492 = smul.addr %s491, 4
        %s493 = scalar_lea.vmem %s3, %s492
        %s494 = smul.u32 18, %s14
        %s495 = smul.u32 18, %s14
        %p496 = scmp.lt.s32.totalorder %s495, 35
        %s497 = scalar_select %p496, %s495, 35
        %s498 = smul.addr %s497, 4
        %s499 = scalar_lea.vmem %s3, %s498
        %s500 = smul.u32 18, %s14
        %v502 = vld [vmem:[%s473] sm:$0xf]
        %v503 = vld [vmem:[%s473 + $0x4] sm:$0xf]
        %v504 = vld [vmem:[%s473 + $0x8] sm:$0xf]
        %v505 = vld [vmem:[%s473 + $0xc] sm:$0xf]
        %v506 = vld [vmem:[%s473 + $0x10] sm:$0xf]
        %v507 = vld [vmem:[%s473 + $0x14] sm:$0xf]
        %v508 = vld [vmem:[%s473 + $0x18] sm:$0xf]
        %v509 = vld [vmem:[%s473 + $0x1c] sm:$0xf]
        %v510 = vld [vmem:[%s473 + $0x20] sm:$0xf]
        %v511 = vld [vmem:[%s473 + $0x24] sm:$0xf]
        %v512 = vld [vmem:[%s473 + $0x28] sm:$0xf]
        %v513 = vld [vmem:[%s473 + $0x2c] sm:$0xf]
        %v514 = vld [vmem:[%s473 + $0x30] sm:$0xf]
        %v515 = vld [vmem:[%s473 + $0x34] sm:$0xf]
        %v516 = vld [vmem:[%s473 + $0x38] sm:$0xf]
        %v517 = vld [vmem:[%s473 + $0x3c] sm:$0xf]
        %v518 = vld [vmem:[%s473 + $0x40] sm:$0xf]
        %v519 = vld [vmem:[%s473 + $0x44] sm:$0xf]
        %v520 = vld [vmem:[%s473 + $0x48] sm:$0xf]
        %v521 = vld [vmem:[%s473 + $0x4c] sm:$0xf]
        %v522 = vld [vmem:[%s473 + $0x50] sm:$0xf]
        %v523 = vld [vmem:[%s473 + $0x54] sm:$0xf]
        %v524 = vld [vmem:[%s473 + $0x58] sm:$0xf]
        %v525 = vld [vmem:[%s473 + $0x5c] sm:$0xf]
        %v526 = vld [vmem:[%s473 + $0x60] sm:$0xf]
        %v527 = vld [vmem:[%s473 + $0x64] sm:$0xf]
        %v528 = vld [vmem:[%s473 + $0x68] sm:$0xf]
        %v529 = vld [vmem:[%s473 + $0x6c] sm:$0xf]
        %v530 = vld [vmem:[%s473 + $0x70] sm:$0xf]
        %v531 = vld [vmem:[%s473 + $0x74] sm:$0xf]
        %v532 = vld [vmem:[%s473 + $0x78] sm:$0xf]
        %v533 = vld [vmem:[%s473 + $0x7c] sm:$0xf]
        %v534 = vld [vmem:[%s473 + $0x80] sm:$0xf]
        %v535 = vld [vmem:[%s473 + $0x84] sm:$0xf]
        %v536 = vld [vmem:[%s473 + $0x88] sm:$0xf]
        %v537 = vld [vmem:[%s473 + $0x8c] sm:$0xf]
        %v538 = vld [vmem:[%s473 + $0x90] sm:$0xf]
        %v539 = vld [vmem:[%s473 + $0x94] sm:$0xf]
        %v540 = vld [vmem:[%s473 + $0x98] sm:$0xf]
        %v541 = vld [vmem:[%s473 + $0x9c] sm:$0xf]
        %v542 = vld [vmem:[%s473 + $0xa0] sm:$0xf]
        %v543 = vld [vmem:[%s473 + $0xa4] sm:$0xf]
        %v544 = vld [vmem:[%s473 + $0xa8] sm:$0xf]
        %v545 = vld [vmem:[%s473 + $0xac] sm:$0xf]
        %v546 = vld [vmem:[%s473 + $0xb0] sm:$0xf]
        %v547 = vld [vmem:[%s473 + $0xb4] sm:$0xf]
        %v548 = vld [vmem:[%s473 + $0xb8] sm:$0xf]
        %v549 = vld [vmem:[%s473 + $0xbc] sm:$0xf]
        %v550 = vld [vmem:[%s473 + $0xc0] sm:$0xf]
        %v551 = vld [vmem:[%s473 + $0xc4] sm:$0xf]
        %v552 = vld [vmem:[%s473 + $0xc8] sm:$0xf]
        %v553 = vld [vmem:[%s473 + $0xcc] sm:$0xf]
        %v554 = vld [vmem:[%s473 + $0xd0] sm:$0xf]
        %v555 = vld [vmem:[%s473 + $0xd4] sm:$0xf]
        %v556 = vld [vmem:[%s473 + $0xd8] sm:$0xf]
        %v557 = vld [vmem:[%s473 + $0xdc] sm:$0xf]
        %v558 = vld [vmem:[%s473 + $0xe0] sm:$0xf]
        %v559 = vld [vmem:[%s473 + $0xe4] sm:$0xf]
        %v560 = vld [vmem:[%s473 + $0xe8] sm:$0xf]
        %v561 = vld [vmem:[%s473 + $0xec] sm:$0xf]
        %v562 = vld [vmem:[%s473 + $0xf0] sm:$0xf]
        %v563 = vld [vmem:[%s473 + $0xf4] sm:$0xf]
        %v564 = vld [vmem:[%s473 + $0xf8] sm:$0xf]
        %v565 = vld [vmem:[%s473 + $0xfc] sm:$0xf]
        %v566 = vld [vmem:[%s473 + $0x100] sm:$0xf]
        %v567 = vld [vmem:[%s473 + $0x104] sm:$0xf]
        %v568 = vld [vmem:[%s473 + $0x108] sm:$0xf]
        %v569 = vld [vmem:[%s473 + $0x10c] sm:$0xf]
        %v570 = vld [vmem:[%s473 + $0x110] sm:$0xf]
        %v571 = vld [vmem:[%s473 + $0x114] sm:$0xf]
        %v572 = vld [vmem:[%s473 + $0x118] sm:$0xf]
        %v573 = vld [vmem:[%s473 + $0x11c] sm:$0xf]
        %v574 = vld [vmem:[%s1] sm:$0xf]
        %v575 = vld [vmem:[%s1 + $0x4] sm:$0xf]
        %v576 = vld [vmem:[%s1 + $0x8] sm:$0xf]
        %v577 = vld [vmem:[%s1 + $0xc] sm:$0x1]
        %v650 = vunpack.c.l.b16 %v502
        %v651 = vunpack.c.l.b16 %v503
        %v652 = vunpack.c.l.b16 %v504
        %v653 = vunpack.c.l.b16 %v505
        %v654 = vunpack.c.l.b16 %v506
        %v655 = vunpack.c.l.b16 %v507
        %v656 = vunpack.c.l.b16 %v508
        %v657 = vunpack.c.l.b16 %v509
        %v658 = vunpack.c.l.b16 %v510
        %v659 = vunpack.c.l.b16 %v511
        %v660 = vunpack.c.l.b16 %v512
        %v661 = vunpack.c.l.b16 %v513
        %v662 = vunpack.c.l.b16 %v514
        %v663 = vunpack.c.l.b16 %v515
        %v664 = vunpack.c.l.b16 %v516
        %v665 = vunpack.c.l.b16 %v517
        %v666 = vunpack.c.l.b16 %v518
        %v667 = vunpack.c.l.b16 %v519
        %v668 = vunpack.c.l.b16 %v520
        %v669 = vunpack.c.l.b16 %v521
        %v670 = vunpack.c.l.b16 %v522
        %v671 = vunpack.c.l.b16 %v523
        %v672 = vunpack.c.l.b16 %v524
        %v673 = vunpack.c.l.b16 %v525
        %v674 = vunpack.c.l.b16 %v526
        %v675 = vunpack.c.l.b16 %v527
        %v676 = vunpack.c.l.b16 %v528
        %v677 = vunpack.c.l.b16 %v529
        %v678 = vunpack.c.l.b16 %v530
        %v679 = vunpack.c.l.b16 %v531
        %v680 = vunpack.c.l.b16 %v532
        %v681 = vunpack.c.l.b16 %v533
        %v682 = vunpack.c.l.b16 %v534
        %v683 = vunpack.c.l.b16 %v535
        %v684 = vunpack.c.l.b16 %v536
        %v685 = vunpack.c.l.b16 %v537
        %v686 = vunpack.c.l.b16 %v538
        %v687 = vunpack.c.l.b16 %v539
        %v688 = vunpack.c.l.b16 %v540
        %v689 = vunpack.c.l.b16 %v541
        %v690 = vunpack.c.l.b16 %v542
        %v691 = vunpack.c.l.b16 %v543
        %v692 = vunpack.c.l.b16 %v544
        %v693 = vunpack.c.l.b16 %v545
        %v694 = vunpack.c.l.b16 %v546
        %v695 = vunpack.c.l.b16 %v547
        %v696 = vunpack.c.l.b16 %v548
        %v697 = vunpack.c.l.b16 %v549
        %v698 = vunpack.c.l.b16 %v550
        %v699 = vunpack.c.l.b16 %v551
        %v700 = vunpack.c.l.b16 %v552
        %v701 = vunpack.c.l.b16 %v553
        %v702 = vunpack.c.l.b16 %v554
        %v703 = vunpack.c.l.b16 %v555
        %v704 = vunpack.c.l.b16 %v556
        %v705 = vunpack.c.l.b16 %v557
        %v706 = vunpack.c.l.b16 %v558
        %v707 = vunpack.c.l.b16 %v559
        %v708 = vunpack.c.l.b16 %v560
        %v709 = vunpack.c.l.b16 %v561
        %v710 = vunpack.c.l.b16 %v562
        %v711 = vunpack.c.l.b16 %v563
        %v712 = vunpack.c.l.b16 %v564
        %v713 = vunpack.c.l.b16 %v565
        %v714 = vunpack.c.l.b16 %v566
        %v715 = vunpack.c.l.b16 %v567
        %v716 = vunpack.c.l.b16 %v568
        %v717 = vunpack.c.l.b16 %v569
        %v718 = vunpack.c.l.b16 %v570
        %v719 = vunpack.c.l.b16 %v571
        %v720 = vunpack.c.l.b16 %v572
        %v721 = vunpack.c.l.b16 %v573
        %v722 = vpack.c.b16 %v651, %v650
        %v723 = vpack.c.b16 %v653, %v652
        %v724 = vpack.c.b16 %v655, %v654
        %v725 = vpack.c.b16 %v657, %v656
        %v726 = vpack.c.b16 %v659, %v658
        %v727 = vpack.c.b16 %v661, %v660
        %v728 = vpack.c.b16 %v663, %v662
        %v729 = vpack.c.b16 %v665, %v664
        %v730 = vpack.c.b16 %v667, %v666
        %v731 = vpack.c.b16 %v669, %v668
        %v732 = vpack.c.b16 %v671, %v670
        %v733 = vpack.c.b16 %v673, %v672
        %v734 = vpack.c.b16 %v675, %v674
        %v735 = vpack.c.b16 %v677, %v676
        %v736 = vpack.c.b16 %v679, %v678
        %v737 = vpack.c.b16 %v681, %v680
        %v738 = vpack.c.b16 %v683, %v682
        %v739 = vpack.c.b16 %v685, %v684
        %v740 = vpack.c.b16 %v687, %v686
        %v741 = vpack.c.b16 %v689, %v688
        %v742 = vpack.c.b16 %v691, %v690
        %v743 = vpack.c.b16 %v693, %v692
        %v744 = vpack.c.b16 %v695, %v694
        %v745 = vpack.c.b16 %v697, %v696
        %v746 = vpack.c.b16 %v699, %v698
        %v747 = vpack.c.b16 %v701, %v700
        %v748 = vpack.c.b16 %v703, %v702
        %v749 = vpack.c.b16 %v705, %v704
        %v750 = vpack.c.b16 %v707, %v706
        %v751 = vpack.c.b16 %v709, %v708
        %v752 = vpack.c.b16 %v711, %v710
        %v753 = vpack.c.b16 %v713, %v712
        %v754 = vpack.c.b16 %v715, %v714
        %v755 = vpack.c.b16 %v717, %v716
        %v756 = vpack.c.b16 %v719, %v718
        %v757 = vpack.c.b16 %v721, %v720
        %v762 = vunpack.c.l.b16 %v574
        %v763 = vunpack.c.l.b16 %v575
        %v764 = vunpack.c.l.b16 %v576
        %v765 = vunpack.c.l.b16 %v577
        %v766 = vpack.c.b16 %v763, %v762
        %v767 = vpack.c.b16 %v765, %v764
        %vm769 = vcmask 203776
        %v771 = vsel %vm769, %v722, 0
        %v774 = vsel %vm769, %v723, 0
        %v777 = vsel %vm769, %v724, 0
        %v780 = vsel %vm769, %v725, 0
        %v783 = vsel %vm769, %v726, 0
        %v786 = vsel %vm769, %v727, 0
        %v789 = vsel %vm769, %v728, 0
        %v792 = vsel %vm769, %v729, 0
        %v795 = vsel %vm769, %v730, 0
        %v798 = vsel %vm769, %v731, 0
        %v801 = vsel %vm769, %v732, 0
        %v804 = vsel %vm769, %v733, 0
        %v807 = vsel %vm769, %v734, 0
        %v810 = vsel %vm769, %v735, 0
        %v813 = vsel %vm769, %v736, 0
        %v816 = vsel %vm769, %v737, 0
        %v819 = vsel %vm769, %v738, 0
        %v822 = vsel %vm769, %v739, 0
        %v825 = vsel %vm769, %v740, 0
        %v828 = vsel %vm769, %v741, 0
        %v831 = vsel %vm769, %v742, 0
        %v834 = vsel %vm769, %v743, 0
        %v837 = vsel %vm769, %v744, 0
        %v840 = vsel %vm769, %v745, 0
        %v843 = vsel %vm769, %v746, 0
        %v846 = vsel %vm769, %v747, 0
        %v849 = vsel %vm769, %v748, 0
        %v852 = vsel %vm769, %v749, 0
        %v855 = vsel %vm769, %v750, 0
        %v858 = vsel %vm769, %v751, 0
        %v861 = vsel %vm769, %v752, 0
        %v864 = vsel %vm769, %v753, 0
        %v867 = vsel %vm769, %v754, 0
        %v870 = vsel %vm769, %v755, 0
        %v873 = vsel %vm769, %v756, 0
        %v876 = vsel %vm769, %v757, 0
        %vm878 = vcmask 1043456
        %vm879 = vcmask 1044480
        %v880 = vsel %vm878, 4294967295, 65535
        %v881 = vsel %vm879, %v880, 0
        %v883 = vand.u32 %v767, %v881
        %885 = vmatpush.bf16.msra.mxu0 0
        %886 = vmatpush.bf16.msra.mxu0 0
        %887 = vmatpush.bf16.msra.mxu0 0
        %888 = vmatpush.bf16.msra.mxu0 0
        %889 = vmatpush.bf16.msra.mxu0 0
        %890 = vmatpush.bf16.msra.mxu0 0
        %891 = vmatpush.bf16.msra.mxu0 %v883
        %892 = vmatpush.bf16.msra.mxu0 %v766
        %893 = vmatmul.bf16.gmra.mxu0 %v771
        %v894 = vpop.f32.mrf.mxu0
        %v895 = vadd.f32 0.0, %v894
        %v896 = vpop.f32.mrf.mxu0
        %v897 = vadd.f32 0.0, %v896
        %898 = vmatmul.bf16.gmra.mxu0 %v774
        %v899 = vpop.f32.mrf.mxu0
        %v900 = vadd.f32 0.0, %v899
        %v901 = vpop.f32.mrf.mxu0
        %v902 = vadd.f32 0.0, %v901
        %903 = vmatmul.bf16.gmra.mxu0 %v777
        %v904 = vpop.f32.mrf.mxu0
        %v905 = vadd.f32 0.0, %v904
        %v906 = vpop.f32.mrf.mxu0
        %v907 = vadd.f32 0.0, %v906
        %908 = vmatmul.bf16.gmra.mxu0 %v780
        %v909 = vpop.f32.mrf.mxu0
        %v910 = vadd.f32 0.0, %v909
        %v911 = vpop.f32.mrf.mxu0
        %v912 = vadd.f32 0.0, %v911
        %913 = vmatmul.bf16.gmra.mxu0 %v783
        %v914 = vpop.f32.mrf.mxu0
        %v915 = vadd.f32 0.0, %v914
        %v916 = vpop.f32.mrf.mxu0
        %v917 = vadd.f32 0.0, %v916
        %918 = vmatmul.bf16.gmra.mxu0 %v786
        %v919 = vpop.f32.mrf.mxu0
        %v920 = vadd.f32 0.0, %v919
        %v921 = vpop.f32.mrf.mxu0
        %v922 = vadd.f32 0.0, %v921
        %923 = vmatmul.bf16.gmra.mxu0 %v789
        %v924 = vpop.f32.mrf.mxu0
        %v925 = vadd.f32 0.0, %v924
        %v926 = vpop.f32.mrf.mxu0
        %v927 = vadd.f32 0.0, %v926
        %928 = vmatmul.bf16.gmra.mxu0 %v792
        %v929 = vpop.f32.mrf.mxu0
        %v930 = vadd.f32 0.0, %v929
        %v931 = vpop.f32.mrf.mxu0
        %v932 = vadd.f32 0.0, %v931
        %933 = vmatmul.bf16.gmra.mxu0 %v795
        %v934 = vpop.f32.mrf.mxu0
        %v935 = vadd.f32 0.0, %v934
        %v936 = vpop.f32.mrf.mxu0
        %v937 = vadd.f32 0.0, %v936
        %938 = vmatmul.bf16.gmra.mxu0 %v798
        %v939 = vpop.f32.mrf.mxu0
        %v940 = vadd.f32 0.0, %v939
        %v941 = vpop.f32.mrf.mxu0
        %v942 = vadd.f32 0.0, %v941
        %943 = vmatmul.bf16.gmra.mxu0 %v801
        %v944 = vpop.f32.mrf.mxu0
        %v945 = vadd.f32 0.0, %v944
        %v946 = vpop.f32.mrf.mxu0
        %v947 = vadd.f32 0.0, %v946
        %948 = vmatmul.bf16.gmra.mxu0 %v804
        %v949 = vpop.f32.mrf.mxu0
        %v950 = vadd.f32 0.0, %v949
        %v951 = vpop.f32.mrf.mxu0
        %v952 = vadd.f32 0.0, %v951
        %953 = vmatmul.bf16.gmra.mxu0 %v807
        %v954 = vpop.f32.mrf.mxu0
        %v955 = vadd.f32 0.0, %v954
        %v956 = vpop.f32.mrf.mxu0
        %v957 = vadd.f32 0.0, %v956
        %958 = vmatmul.bf16.gmra.mxu0 %v810
        %v959 = vpop.f32.mrf.mxu0
        %v960 = vadd.f32 0.0, %v959
        %v961 = vpop.f32.mrf.mxu0
        %v962 = vadd.f32 0.0, %v961
        %963 = vmatmul.bf16.gmra.mxu0 %v813
        %v964 = vpop.f32.mrf.mxu0
        %v965 = vadd.f32 0.0, %v964
        %v966 = vpop.f32.mrf.mxu0
        %v967 = vadd.f32 0.0, %v966
        %968 = vmatmul.bf16.gmra.mxu0 %v816
        %v969 = vpop.f32.mrf.mxu0
        %v970 = vadd.f32 0.0, %v969
        %v971 = vpop.f32.mrf.mxu0
        %v972 = vadd.f32 0.0, %v971
        %973 = vmatmul.bf16.gmra.mxu0 %v819
        %v974 = vpop.f32.mrf.mxu0
        %v975 = vadd.f32 0.0, %v974
        %v976 = vpop.f32.mrf.mxu0
        %v977 = vadd.f32 0.0, %v976
        %978 = vmatmul.bf16.gmra.mxu0 %v822
        %v979 = vpop.f32.mrf.mxu0
        %v980 = vadd.f32 0.0, %v979
        %v981 = vpop.f32.mrf.mxu0
        %v982 = vadd.f32 0.0, %v981
        %983 = vmatmul.bf16.gmra.mxu0 %v825
        %v984 = vpop.f32.mrf.mxu0
        %v985 = vadd.f32 0.0, %v984
        %v986 = vpop.f32.mrf.mxu0
        %v987 = vadd.f32 0.0, %v986
        %988 = vmatmul.bf16.gmra.mxu0 %v828
        %v989 = vpop.f32.mrf.mxu0
        %v990 = vadd.f32 0.0, %v989
        %v991 = vpop.f32.mrf.mxu0
        %v992 = vadd.f32 0.0, %v991
        %993 = vmatmul.bf16.gmra.mxu0 %v831
        %v994 = vpop.f32.mrf.mxu0
        %v995 = vadd.f32 0.0, %v994
        %v996 = vpop.f32.mrf.mxu0
        %v997 = vadd.f32 0.0, %v996
        %998 = vmatmul.bf16.gmra.mxu0 %v834
        %v999 = vpop.f32.mrf.mxu0
        %v1000 = vadd.f32 0.0, %v999
        %v1001 = vpop.f32.mrf.mxu0
        %v1002 = vadd.f32 0.0, %v1001
        %1003 = vmatmul.bf16.gmra.mxu0 %v837
        %v1004 = vpop.f32.mrf.mxu0
        %v1005 = vadd.f32 0.0, %v1004
        %v1006 = vpop.f32.mrf.mxu0
        %v1007 = vadd.f32 0.0, %v1006
        %1008 = vmatmul.bf16.gmra.mxu0 %v840
        %v1009 = vpop.f32.mrf.mxu0
        %v1010 = vadd.f32 0.0, %v1009
        %v1011 = vpop.f32.mrf.mxu0
        %v1012 = vadd.f32 0.0, %v1011
        %1013 = vmatmul.bf16.gmra.mxu0 %v843
        %v1014 = vpop.f32.mrf.mxu0
        %v1015 = vadd.f32 0.0, %v1014
        %v1016 = vpop.f32.mrf.mxu0
        %v1017 = vadd.f32 0.0, %v1016
        %1018 = vmatmul.bf16.gmra.mxu0 %v846
        %v1019 = vpop.f32.mrf.mxu0
        %v1020 = vadd.f32 0.0, %v1019
        %v1021 = vpop.f32.mrf.mxu0
        %v1022 = vadd.f32 0.0, %v1021
        %1023 = vmatmul.bf16.gmra.mxu0 %v849
        %v1024 = vpop.f32.mrf.mxu0
        %v1025 = vadd.f32 0.0, %v1024
        %v1026 = vpop.f32.mrf.mxu0
        %v1027 = vadd.f32 0.0, %v1026
        %1028 = vmatmul.bf16.gmra.mxu0 %v852
        %v1029 = vpop.f32.mrf.mxu0
        %v1030 = vadd.f32 0.0, %v1029
        %v1031 = vpop.f32.mrf.mxu0
        %v1032 = vadd.f32 0.0, %v1031
        %1033 = vmatmul.bf16.gmra.mxu0 %v855
        %v1034 = vpop.f32.mrf.mxu0
        %v1035 = vadd.f32 0.0, %v1034
        %v1036 = vpop.f32.mrf.mxu0
        %v1037 = vadd.f32 0.0, %v1036
        %1038 = vmatmul.bf16.gmra.mxu0 %v858
        %v1039 = vpop.f32.mrf.mxu0
        %v1040 = vadd.f32 0.0, %v1039
        %v1041 = vpop.f32.mrf.mxu0
        %v1042 = vadd.f32 0.0, %v1041
        %1043 = vmatmul.bf16.gmra.mxu0 %v861
        %v1044 = vpop.f32.mrf.mxu0
        %v1045 = vadd.f32 0.0, %v1044
        %v1046 = vpop.f32.mrf.mxu0
        %v1047 = vadd.f32 0.0, %v1046
        %1048 = vmatmul.bf16.gmra.mxu0 %v864
        %v1049 = vpop.f32.mrf.mxu0
        %v1050 = vadd.f32 0.0, %v1049
        %v1051 = vpop.f32.mrf.mxu0
        %v1052 = vadd.f32 0.0, %v1051
        %1053 = vmatmul.bf16.gmra.mxu0 %v867
        %v1054 = vpop.f32.mrf.mxu0
        %v1055 = vadd.f32 0.0, %v1054
        %v1056 = vpop.f32.mrf.mxu0
        %v1057 = vadd.f32 0.0, %v1056
        %1058 = vmatmul.bf16.gmra.mxu0 %v870
        %v1059 = vpop.f32.mrf.mxu0
        %v1060 = vadd.f32 0.0, %v1059
        %v1061 = vpop.f32.mrf.mxu0
        %v1062 = vadd.f32 0.0, %v1061
        %1063 = vmatmul.bf16.gmra.mxu0 %v873
        %v1064 = vpop.f32.mrf.mxu0
        %v1065 = vadd.f32 0.0, %v1064
        %v1066 = vpop.f32.mrf.mxu0
        %v1067 = vadd.f32 0.0, %v1066
        %1068 = vmatmul.bf16.gmra.mxu0 %v876
        %v1069 = vpop.f32.mrf.mxu0
        %v1070 = vadd.f32 0.0, %v1069
        %v1071 = vpop.f32.mrf.mxu0
        %v1072 = vadd.f32 0.0, %v1071
        %1073 = vdwg.mxu0
        %v1074 = vmax.f32 %v895, %v940
        %v1075 = vmax.f32 %v897, %v942
        %v1076 = vmax.f32 %v900, %v945
        %v1077 = vmax.f32 %v902, %v947
        %v1078 = vmax.f32 %v905, %v950
        %v1079 = vmax.f32 %v907, %v952
        %v1080 = vmax.f32 %v910, %v955
        %v1081 = vmax.f32 %v912, %v957
        %v1082 = vmax.f32 %v915, %v960
        %v1083 = vmax.f32 %v917, %v962
        %v1084 = vmax.f32 %v920, %v965
        %v1085 = vmax.f32 %v922, %v967
        %v1086 = vmax.f32 %v925, %v970
        %v1087 = vmax.f32 %v927, %v972
        %v1088 = vmax.f32 %v930, %v975
        %v1089 = vmax.f32 %v932, %v977
        %v1090 = vmax.f32 %v935, %v980
        %v1091 = vmax.f32 %v937, %v982
        %v1092 = vmax.f32 %v985, %v1030
        %v1093 = vmax.f32 %v987, %v1032
        %v1094 = vmax.f32 %v990, %v1035
        %v1095 = vmax.f32 %v992, %v1037
        %v1096 = vmax.f32 %v995, %v1040
        %v1097 = vmax.f32 %v997, %v1042
        %v1098 = vmax.f32 %v1000, %v1045
        %v1099 = vmax.f32 %v1002, %v1047
        %v1100 = vmax.f32 %v1005, %v1050
        %v1101 = vmax.f32 %v1007, %v1052
        %v1102 = vmax.f32 %v1010, %v1055
        %v1103 = vmax.f32 %v1012, %v1057
        %v1104 = vmax.f32 %v1015, %v1060
        %v1105 = vmax.f32 %v1017, %v1062
        %v1106 = vmax.f32 %v1020, %v1065
        %v1107 = vmax.f32 %v1022, %v1067
        %v1108 = vmax.f32 %v1025, %v1070
        %v1109 = vmax.f32 %v1027, %v1072
        %v1110 = vmax.f32 %v1074, %v1092
        %v1111 = vmax.f32 %v1075, %v1093
        %v1112 = vmax.f32 %v1076, %v1094
        %v1113 = vmax.f32 %v1077, %v1095
        %v1114 = vmax.f32 %v1078, %v1096
        %v1115 = vmax.f32 %v1079, %v1097
        %v1116 = vmax.f32 %v1080, %v1098
        %v1117 = vmax.f32 %v1081, %v1099
        %v1118 = vmax.f32 %v1082, %v1100
        %v1119 = vmax.f32 %v1083, %v1101
        %v1120 = vmax.f32 %v1084, %v1102
        %v1121 = vmax.f32 %v1085, %v1103
        %v1122 = vmax.f32 %v1086, %v1104
        %v1123 = vmax.f32 %v1087, %v1105
        %v1124 = vmax.f32 %v1088, %v1106
        %v1125 = vmax.f32 %v1089, %v1107
        %v1126 = vmax.f32 %v1090, %v1108
        %v1127 = vmax.f32 %v1091, %v1109
        %v1128 = vld [vmem:[%s2] sm:$0x1]
        %v1130 = vperm.slane %v1128, 0
        %v1132 = vadd.f32 %v1110, %v1130
        %v1133 = vadd.f32 %v1111, %v1130
        %v1134 = vadd.f32 %v1112, %v1130
        %v1135 = vadd.f32 %v1113, %v1130
        %v1136 = vadd.f32 %v1114, %v1130
        %v1137 = vadd.f32 %v1115, %v1130
        %v1138 = vadd.f32 %v1116, %v1130
        %v1139 = vadd.f32 %v1117, %v1130
        %v1140 = vadd.f32 %v1118, %v1130
        %v1141 = vadd.f32 %v1119, %v1130
        %v1142 = vadd.f32 %v1120, %v1130
        %v1143 = vadd.f32 %v1121, %v1130
        %v1144 = vadd.f32 %v1122, %v1130
        %v1145 = vadd.f32 %v1123, %v1130
        %v1146 = vadd.f32 %v1124, %v1130
        %v1147 = vadd.f32 %v1125, %v1130
        %v1148 = vadd.f32 %v1126, %v1130
        %v1149 = vadd.f32 %v1127, %v1130
        %v1150 = vmax.f32 %v1132, 0.0
        %v1151 = vmax.f32 %v1133, 0.0
        %v1152 = vmax.f32 %v1134, 0.0
        %v1153 = vmax.f32 %v1135, 0.0
        %v1154 = vmax.f32 %v1136, 0.0
        %v1155 = vmax.f32 %v1137, 0.0
        %v1156 = vmax.f32 %v1138, 0.0
        %v1157 = vmax.f32 %v1139, 0.0
        %v1158 = vmax.f32 %v1140, 0.0
        %v1159 = vmax.f32 %v1141, 0.0
        %v1160 = vmax.f32 %v1142, 0.0
        %v1161 = vmax.f32 %v1143, 0.0
        %v1162 = vmax.f32 %v1144, 0.0
        %v1163 = vmax.f32 %v1145, 0.0
        %v1164 = vmax.f32 %v1146, 0.0
        %v1165 = vmax.f32 %v1147, 0.0
        %v1166 = vmax.f32 %v1148, 0.0
        %v1167 = vmax.f32 %v1149, 0.0
        %v1168 = vpack.c.bf16 %v1150, %v1150
        %v1169 = vpack.c.bf16 %v1151, %v1151
        %v1170 = vpack.c.bf16 %v1152, %v1152
        %v1171 = vpack.c.bf16 %v1153, %v1153
        %v1172 = vpack.c.bf16 %v1154, %v1154
        %v1173 = vpack.c.bf16 %v1155, %v1155
        %v1174 = vpack.c.bf16 %v1156, %v1156
        %v1175 = vpack.c.bf16 %v1157, %v1157
        %v1176 = vpack.c.bf16 %v1158, %v1158
        %v1177 = vpack.c.bf16 %v1159, %v1159
        %v1178 = vpack.c.bf16 %v1160, %v1160
        %v1179 = vpack.c.bf16 %v1161, %v1161
        %v1180 = vpack.c.bf16 %v1162, %v1162
        %v1181 = vpack.c.bf16 %v1163, %v1163
        %v1182 = vpack.c.bf16 %v1164, %v1164
        %v1183 = vpack.c.bf16 %v1165, %v1165
        %v1184 = vpack.c.bf16 %v1166, %v1166
        %v1185 = vpack.c.bf16 %v1167, %v1167
        %1186 = vst [vmem:[%s499] sm:$0xf] %v1168
        %1187 = vst [vmem:[%s499 + $0x4] sm:$0xf] %v1169
        %1188 = vst [vmem:[%s499 + $0x8] sm:$0xf] %v1170
        %1189 = vst [vmem:[%s499 + $0xc] sm:$0xf] %v1171
        %1190 = vst [vmem:[%s499 + $0x10] sm:$0xf] %v1172
        %1191 = vst [vmem:[%s499 + $0x14] sm:$0xf] %v1173
        %1192 = vst [vmem:[%s499 + $0x18] sm:$0xf] %v1174
        %1193 = vst [vmem:[%s499 + $0x1c] sm:$0xf] %v1175
        %1194 = vst [vmem:[%s499 + $0x20] sm:$0xf] %v1176
        %1195 = vst [vmem:[%s499 + $0x24] sm:$0xf] %v1177
        %1196 = vst [vmem:[%s499 + $0x28] sm:$0xf] %v1178
        %1197 = vst [vmem:[%s499 + $0x2c] sm:$0xf] %v1179
        %1198 = vst [vmem:[%s499 + $0x30] sm:$0xf] %v1180
        %1199 = vst [vmem:[%s499 + $0x34] sm:$0xf] %v1181
        %1200 = vst [vmem:[%s499 + $0x38] sm:$0xf] %v1182
        %1201 = vst [vmem:[%s499 + $0x3c] sm:$0xf] %v1183
        %1202 = vst [vmem:[%s499 + $0x40] sm:$0xf] %v1184
        %1203 = vst [vmem:[%s499 + $0x44] sm:$0xf] %v1185
        %s1204 = smul.u32 18, %s14
        %p1205 = scmp.lt.s32.totalorder %s1204, 35
        %s1206 = scalar_select %p1205, %s1204, 35
        %s1207 = smul.addr %s1206, 4
        %s1208 = scalar_lea.vmem %s3, %s1207
        // Predicated region
        $region74: #{lenet_forward.2} parent=68 // pred_check
          %p1209 = pneg %p100
        $region75: #{lenet_forward.2} parent=68 // pred_check_branch
          %1211 = sbr.rel (%p1209) target = $region77
        $region76: #{lenet_forward.2} parent=68 // pred_region
          %s1212 = smul.u32 18, %s14
        $region77: #{lenet_forward.2} parent=68 // pred_fallthru
          _
      $region69: #{lenet_forward.2} parent=5 // pred_fallthru
        _
      %p1213 = scmp.le.s32.totalorder 2, %s9
      // Predicated region
      $region78: #{lenet_forward.2} parent=5 // pred_check
        %p1214 = pneg %p1213
      $region79: #{lenet_forward.2} parent=5 // pred_check_branch
        %1216 = sbr.rel (%p1214) target = $region81
      $region80: #{lenet_forward.2} parent=5 // pred_region
        %s1217 = ssub.s32 %s9, 2
        // Predicated region
        $region82: #{lenet_forward.2} parent=80 // pred_check
          %p1218 = pneg %p106
        $region83: #{lenet_forward.2} parent=80 // pred_check_branch
          %1220 = sbr.rel (%p1218) target = $region85
        $region84: #{lenet_forward.2} parent=80 // pred_region
          %s1221 = smul.u32 18, %s15
          %p1222 = scmp.lt.s32.totalorder %s1221, 35
          %s1223 = scalar_select %p1222, %s1221, 35
          %s1224 = smul.addr %s1223, 4
          %s1225 = scalar_lea.vmem %s3, %s1224
        $region85: #{lenet_forward.2} parent=80 // pred_fallthru
          _
      $region81: #{lenet_forward.2} parent=5 // pred_fallthru
        _
    $region6: #{lenet_forward.2} parent=1 // loop_footer
      %s13 = sadd.s32 1, %s9
    $region7: #{lenet_forward.2} parent=1 // loop_footer_branch
      %8 = sbr.rel target = $region3
    $region8: #{lenet_forward.2} parent=1 // loop_exit
      _

// kernel: lenet_forward.3
$region0: #{lenet_forward.3}
  #allocation0 [shape = 'u32[]', space=smem, size = 0x4, offset = 0x4, fixed_abs, tag = 'smem constant byte address 0x4 - core index']
  #allocation1 [shape = 'u32[72,128]{1,0:T(1,128)}', space=vmem, size = 0x9000, scoped, tag = 'internal scratch']
  %s0 = inlined_call_operand.vmem [shape: bf16[64,8,500], index: 0, kind: input, shape index: {}]
  %s1 = inlined_call_operand.vmem [shape: bf16[500,128], index: 1, kind: input, shape index: {}]
  %s2 = inlined_call_operand.vmem [shape: f32[1,128], index: 2, kind: input, shape index: {}]
  %s3 = inlined_call_operand.vmem [shape: bf16[16,128,128], index: 3, kind: input, shape index: {}]
  %s4 = inlined_call_operand.vmem [shape: f32[1,128], index: 4, kind: input, shape index: {}]
  %s5 = inlined_call_operand.vmem [shape: f32[8,128], index: 5, kind: output, shape index: {}]
  %s6 = sld [smem:[#allocation0]]
  $region30: #{lenet_forward.3} parent=0
    _
  %s8 = ssub.s32 1, %s6
  %s9 = scalar_select 0, %s8, %s6
  // Predicated region
  $region2: #{lenet_forward.3} parent=0 // pred_check
    _
  $region3: #{lenet_forward.3} parent=0 // pred_check_branch
    %11 = sbr.rel (0) target = $region5
  $region4: #{lenet_forward.3} parent=0 // pred_region
    _
  $region5: #{lenet_forward.3} parent=0 // pred_fallthru
    _
  // Predicated region
  $region6: #{lenet_forward.3} parent=0 // pred_check
    _
  $region7: #{lenet_forward.3} parent=0 // pred_check_branch
    %13 = sbr.rel (0) target = $region9
  $region8: #{lenet_forward.3} parent=0 // pred_region
    _
  $region9: #{lenet_forward.3} parent=0 // pred_fallthru
    _
  // Predicated region
  $region10: #{lenet_forward.3} parent=0 // pred_check
    _
  $region11: #{lenet_forward.3} parent=0 // pred_check_branch
    %15 = sbr.rel (0) target = $region13
  $region12: #{lenet_forward.3} parent=0 // pred_region
    _
  $region13: #{lenet_forward.3} parent=0 // pred_fallthru
    _
  // Predicated region
  $region14: #{lenet_forward.3} parent=0 // pred_check
    _
  $region15: #{lenet_forward.3} parent=0 // pred_check_branch
    %17 = sbr.rel (0) target = $region17
  $region16: #{lenet_forward.3} parent=0 // pred_region
    _
  $region17: #{lenet_forward.3} parent=0 // pred_fallthru
    _
  // Predicated region
  $region18: #{lenet_forward.3} parent=0 // pred_check
    _
  $region19: #{lenet_forward.3} parent=0 // pred_check_branch
    %19 = sbr.rel (0) target = $region21
  $region20: #{lenet_forward.3} parent=0 // pred_region
    _
  $region21: #{lenet_forward.3} parent=0 // pred_fallthru
    _
  %v20 = vld [vmem:[%s0] sm:$0xff]
  %v21 = vld [vmem:[%s0 + $0x8] sm:$0xff]
  %v22 = vld [vmem:[%s0 + $0x10] sm:$0xff]
  %v23 = vld [vmem:[%s0 + $0x18] sm:$0xff]
  %v24 = vld [vmem:[%s0 + $0x20] sm:$0xff]
  %v25 = vld [vmem:[%s0 + $0x28] sm:$0xff]
  %v26 = vld [vmem:[%s0 + $0x30] sm:$0xff]
  %v27 = vld [vmem:[%s0 + $0x38] sm:$0xff]
  %v28 = vld [vmem:[%s0 + $0x40] sm:$0xff]
  %v29 = vld [vmem:[%s0 + $0x48] sm:$0xff]
  %v30 = vld [vmem:[%s0 + $0x50] sm:$0xff]
  %v31 = vld [vmem:[%s0 + $0x58] sm:$0xff]
  %v32 = vld [vmem:[%s0 + $0x60] sm:$0xff]
  %v33 = vld [vmem:[%s0 + $0x68] sm:$0xff]
  %v34 = vld [vmem:[%s0 + $0x70] sm:$0xff]
  %v35 = vld [vmem:[%s0 + $0x78] sm:$0xff]
  %v36 = vld [vmem:[%s0 + $0x80] sm:$0xff]
  %v37 = vld [vmem:[%s0 + $0x88] sm:$0xff]
  %v38 = vld [vmem:[%s0 + $0x90] sm:$0xff]
  %v39 = vld [vmem:[%s0 + $0x98] sm:$0xff]
  %v40 = vld [vmem:[%s0 + $0xa0] sm:$0xff]
  %v41 = vld [vmem:[%s0 + $0xa8] sm:$0xff]
  %v42 = vld [vmem:[%s0 + $0xb0] sm:$0xff]
  %v43 = vld [vmem:[%s0 + $0xb8] sm:$0xff]
  %v44 = vld [vmem:[%s0 + $0xc0] sm:$0xff]
  %v45 = vld [vmem:[%s0 + $0xc8] sm:$0xff]
  %v46 = vld [vmem:[%s0 + $0xd0] sm:$0xff]
  %v47 = vld [vmem:[%s0 + $0xd8] sm:$0xff]
  %v48 = vld [vmem:[%s0 + $0xe0] sm:$0xff]
  %v49 = vld [vmem:[%s0 + $0xe8] sm:$0xff]
  %v50 = vld [vmem:[%s0 + $0xf0] sm:$0xff]
  %v51 = vld [vmem:[%s0 + $0xf8] sm:$0xff]
  %v52 = vld [vmem:[%s0 + $0x100] sm:$0xff]
  %v53 = vld [vmem:[%s0 + $0x108] sm:$0xff]
  %v54 = vld [vmem:[%s0 + $0x110] sm:$0xff]
  %v55 = vld [vmem:[%s0 + $0x118] sm:$0xff]
  %v56 = vld [vmem:[%s0 + $0x120] sm:$0xff]
  %v57 = vld [vmem:[%s0 + $0x128] sm:$0xff]
  %v58 = vld [vmem:[%s0 + $0x130] sm:$0xff]
  %v59 = vld [vmem:[%s0 + $0x138] sm:$0xff]
  %v60 = vld [vmem:[%s0 + $0x140] sm:$0xff]
  %v61 = vld [vmem:[%s0 + $0x148] sm:$0xff]
  %v62 = vld [vmem:[%s0 + $0x150] sm:$0xff]
  %v63 = vld [vmem:[%s0 + $0x158] sm:$0xff]
  %v64 = vld [vmem:[%s0 + $0x160] sm:$0xff]
  %v65 = vld [vmem:[%s0 + $0x168] sm:$0xff]
  %v66 = vld [vmem:[%s0 + $0x170] sm:$0xff]
  %v67 = vld [vmem:[%s0 + $0x178] sm:$0xff]
  %v68 = vld [vmem:[%s0 + $0x180] sm:$0xff]
  %v69 = vld [vmem:[%s0 + $0x188] sm:$0xff]
  %v70 = vld [vmem:[%s0 + $0x190] sm:$0xff]
  %v71 = vld [vmem:[%s0 + $0x198] sm:$0xff]
  %v72 = vld [vmem:[%s0 + $0x1a0] sm:$0xff]
  %v73 = vld [vmem:[%s0 + $0x1a8] sm:$0xff]
  %v74 = vld [vmem:[%s0 + $0x1b0] sm:$0xff]
  %v75 = vld [vmem:[%s0 + $0x1b8] sm:$0xff]
  %v76 = vld [vmem:[%s0 + $0x1c0] sm:$0xff]
  %v77 = vld [vmem:[%s0 + $0x1c8] sm:$0xff]
  %v78 = vld [vmem:[%s0 + $0x1d0] sm:$0xff]
  %v79 = vld [vmem:[%s0 + $0x1d8] sm:$0xff]
  %v80 = vld [vmem:[%s0 + $0x1e0] sm:$0xff]
  %v81 = vld [vmem:[%s0 + $0x1e8] sm:$0xff]
  %v82 = vld [vmem:[%s0 + $0x1f0] sm:$0xff]
  %v83 = vld [vmem:[%s0 + $0x1f8] sm:$0xff]
  %v84 = vld [vmem:[%s0 + $0x200] sm:$0xff]
  %v85 = vld [vmem:[%s0 + $0x208] sm:$0xff]
  %v86 = vld [vmem:[%s0 + $0x210] sm:$0xff]
  %v87 = vld [vmem:[%s0 + $0x218] sm:$0xff]
  %v88 = vld [vmem:[%s0 + $0x220] sm:$0xff]
  %v89 = vld [vmem:[%s0 + $0x228] sm:$0xff]
  %v90 = vld [vmem:[%s0 + $0x230] sm:$0xff]
  %v91 = vld [vmem:[%s0 + $0x238] sm:$0xff]
  %v92 = vld [vmem:[%s0 + $0x240] sm:$0xff]
  %v93 = vld [vmem:[%s0 + $0x248] sm:$0xff]
  %v94 = vld [vmem:[%s0 + $0x250] sm:$0xff]
  %v95 = vld [vmem:[%s0 + $0x258] sm:$0xff]
  %v96 = vld [vmem:[%s0 + $0x260] sm:$0xff]
  %v97 = vld [vmem:[%s0 + $0x268] sm:$0xff]
  %v98 = vld [vmem:[%s0 + $0x270] sm:$0xff]
  %v99 = vld [vmem:[%s0 + $0x278] sm:$0xff]
  %v100 = vld [vmem:[%s0 + $0x280] sm:$0xff]
  %v101 = vld [vmem:[%s0 + $0x288] sm:$0xff]
  %v102 = vld [vmem:[%s0 + $0x290] sm:$0xff]
  %v103 = vld [vmem:[%s0 + $0x298] sm:$0xff]
  %v104 = vld [vmem:[%s0 + $0x2a0] sm:$0xff]
  %v105 = vld [vmem:[%s0 + $0x2a8] sm:$0xff]
  %v106 = vld [vmem:[%s0 + $0x2b0] sm:$0xff]
  %v107 = vld [vmem:[%s0 + $0x2b8] sm:$0xff]
  %v108 = vld [vmem:[%s0 + $0x2c0] sm:$0xff]
  %v109 = vld [vmem:[%s0 + $0x2c8] sm:$0xff]
  %v110 = vld [vmem:[%s0 + $0x2d0] sm:$0xff]
  %v111 = vld [vmem:[%s0 + $0x2d8] sm:$0xff]
  %v112 = vld [vmem:[%s0 + $0x2e0] sm:$0xff]
  %v113 = vld [vmem:[%s0 + $0x2e8] sm:$0xff]
  %v114 = vld [vmem:[%s0 + $0x2f0] sm:$0xff]
  %v115 = vld [vmem:[%s0 + $0x2f8] sm:$0xff]
  %v116 = vld [vmem:[%s0 + $0x300] sm:$0xff]
  %v117 = vld [vmem:[%s0 + $0x308] sm:$0xff]
  %v118 = vld [vmem:[%s0 + $0x310] sm:$0xff]
  %v119 = vld [vmem:[%s0 + $0x318] sm:$0xff]
  %v120 = vld [vmem:[%s0 + $0x320] sm:$0xff]
  %v121 = vld [vmem:[%s0 + $0x328] sm:$0xff]
  %v122 = vld [vmem:[%s0 + $0x330] sm:$0xff]
  %v123 = vld [vmem:[%s0 + $0x338] sm:$0xff]
  %v124 = vld [vmem:[%s0 + $0x340] sm:$0xff]
  %v125 = vld [vmem:[%s0 + $0x348] sm:$0xff]
  %v126 = vld [vmem:[%s0 + $0x350] sm:$0xff]
  %v127 = vld [vmem:[%s0 + $0x358] sm:$0xff]
  %v128 = vld [vmem:[%s0 + $0x360] sm:$0xff]
  %v129 = vld [vmem:[%s0 + $0x368] sm:$0xff]
  %v130 = vld [vmem:[%s0 + $0x370] sm:$0xff]
  %v131 = vld [vmem:[%s0 + $0x378] sm:$0xff]
  %v132 = vld [vmem:[%s0 + $0x380] sm:$0xff]
  %v133 = vld [vmem:[%s0 + $0x388] sm:$0xff]
  %v134 = vld [vmem:[%s0 + $0x390] sm:$0xff]
  %v135 = vld [vmem:[%s0 + $0x398] sm:$0xff]
  %v136 = vld [vmem:[%s0 + $0x3a0] sm:$0xff]
  %v137 = vld [vmem:[%s0 + $0x3a8] sm:$0xff]
  %v138 = vld [vmem:[%s0 + $0x3b0] sm:$0xff]
  %v139 = vld [vmem:[%s0 + $0x3b8] sm:$0xff]
  %v140 = vld [vmem:[%s0 + $0x3c0] sm:$0xff]
  %v141 = vld [vmem:[%s0 + $0x3c8] sm:$0xff]
  %v142 = vld [vmem:[%s0 + $0x3d0] sm:$0xff]
  %v143 = vld [vmem:[%s0 + $0x3d8] sm:$0xff]
  %v144 = vld [vmem:[%s0 + $0x3e0] sm:$0xff]
  %v145 = vld [vmem:[%s0 + $0x3e8] sm:$0xff]
  %v146 = vld [vmem:[%s0 + $0x3f0] sm:$0xff]
  %v147 = vld [vmem:[%s0 + $0x3f8] sm:$0xff]
  %v148 = vld [vmem:[%s1] sm:$0xf]
  %v149 = vld [vmem:[%s1 + $0x4] sm:$0xf]
  %v150 = vld [vmem:[%s1 + $0x8] sm:$0xf]
  %v151 = vld [vmem:[%s1 + $0xc] sm:$0xf]
  %v152 = vld [vmem:[%s1 + $0x10] sm:$0xf]
  %v153 = vld [vmem:[%s1 + $0x14] sm:$0xf]
  %v154 = vld [vmem:[%s1 + $0x18] sm:$0xf]
  %v155 = vld [vmem:[%s1 + $0x1c] sm:$0xf]
  %v156 = vld [vmem:[%s1 + $0x20] sm:$0xf]
  %v157 = vld [vmem:[%s1 + $0x24] sm:$0xf]
  %v158 = vld [vmem:[%s1 + $0x28] sm:$0xf]
  %v159 = vld [vmem:[%s1 + $0x2c] sm:$0xf]
  %v160 = vld [vmem:[%s1 + $0x30] sm:$0xf]
  %v161 = vld [vmem:[%s1 + $0x34] sm:$0xf]
  %v162 = vld [vmem:[%s1 + $0x38] sm:$0xf]
  %v163 = vld [vmem:[%s1 + $0x3c] sm:$0xf]
  %v164 = vld [vmem:[%s1 + $0x40] sm:$0xf]
  %v165 = vld [vmem:[%s1 + $0x44] sm:$0xf]
  %v166 = vld [vmem:[%s1 + $0x48] sm:$0xf]
  %v167 = vld [vmem:[%s1 + $0x4c] sm:$0xf]
  %v168 = vld [vmem:[%s1 + $0x50] sm:$0xf]
  %v169 = vld [vmem:[%s1 + $0x54] sm:$0xf]
  %v170 = vld [vmem:[%s1 + $0x58] sm:$0xf]
  %v171 = vld [vmem:[%s1 + $0x5c] sm:$0xf]
  %v172 = vld [vmem:[%s1 + $0x60] sm:$0xf]
  %v173 = vld [vmem:[%s1 + $0x64] sm:$0xf]
  %v174 = vld [vmem:[%s1 + $0x68] sm:$0xf]
  %v175 = vld [vmem:[%s1 + $0x6c] sm:$0xf]
  %v176 = vld [vmem:[%s1 + $0x70] sm:$0xf]
  %v177 = vld [vmem:[%s1 + $0x74] sm:$0xf]
  %v178 = vld [vmem:[%s1 + $0x78] sm:$0xf]
  %v179 = vld [vmem:[%s1 + $0x7c] sm:$0xf]
  %v180 = vld [vmem:[%s1 + $0x80] sm:$0xf]
  %v181 = vld [vmem:[%s1 + $0x84] sm:$0xf]
  %v182 = vld [vmem:[%s1 + $0x88] sm:$0xf]
  %v183 = vld [vmem:[%s1 + $0x8c] sm:$0xf]
  %v184 = vld [vmem:[%s1 + $0x90] sm:$0xf]
  %v185 = vld [vmem:[%s1 + $0x94] sm:$0xf]
  %v186 = vld [vmem:[%s1 + $0x98] sm:$0xf]
  %v187 = vld [vmem:[%s1 + $0x9c] sm:$0xf]
  %v188 = vld [vmem:[%s1 + $0xa0] sm:$0xf]
  %v189 = vld [vmem:[%s1 + $0xa4] sm:$0xf]
  %v190 = vld [vmem:[%s1 + $0xa8] sm:$0xf]
  %v191 = vld [vmem:[%s1 + $0xac] sm:$0xf]
  %v192 = vld [vmem:[%s1 + $0xb0] sm:$0xf]
  %v193 = vld [vmem:[%s1 + $0xb4] sm:$0xf]
  %v194 = vld [vmem:[%s1 + $0xb8] sm:$0xf]
  %v195 = vld [vmem:[%s1 + $0xbc] sm:$0xf]
  %v196 = vld [vmem:[%s1 + $0xc0] sm:$0xf]
  %v197 = vld [vmem:[%s1 + $0xc4] sm:$0xf]
  %v198 = vld [vmem:[%s1 + $0xc8] sm:$0xf]
  %v199 = vld [vmem:[%s1 + $0xcc] sm:$0xf]
  %v200 = vld [vmem:[%s1 + $0xd0] sm:$0xf]
  %v201 = vld [vmem:[%s1 + $0xd4] sm:$0xf]
  %v202 = vld [vmem:[%s1 + $0xd8] sm:$0xf]
  %v203 = vld [vmem:[%s1 + $0xdc] sm:$0xf]
  %v204 = vld [vmem:[%s1 + $0xe0] sm:$0xf]
  %v205 = vld [vmem:[%s1 + $0xe4] sm:$0xf]
  %v206 = vld [vmem:[%s1 + $0xe8] sm:$0xf]
  %v207 = vld [vmem:[%s1 + $0xec] sm:$0xf]
  %v208 = vld [vmem:[%s1 + $0xf0] sm:$0xf]
  %v209 = vld [vmem:[%s1 + $0xf4] sm:$0xf]
  %v210 = vld [vmem:[%s1 + $0xf8] sm:$0x3]
  %v339 = vunpack.c.l.b16 %v20
  %v340 = vunpack.c.h.b16 %v20
  %v341 = vunpack.c.l.b16 %v21
  %v342 = vunpack.c.h.b16 %v21
  %v343 = vunpack.c.l.b16 %v22
  %v344 = vunpack.c.h.b16 %v22
  %v345 = vunpack.c.l.b16 %v23
  %v346 = vunpack.c.h.b16 %v23
  %v347 = vunpack.c.l.b16 %v24
  %v348 = vunpack.c.h.b16 %v24
  %v349 = vunpack.c.l.b16 %v25
  %v350 = vunpack.c.h.b16 %v25
  %v351 = vunpack.c.l.b16 %v26
  %v352 = vunpack.c.h.b16 %v26
  %v353 = vunpack.c.l.b16 %v27
  %v354 = vunpack.c.h.b16 %v27
  %v355 = vunpack.c.l.b16 %v28
  %v356 = vunpack.c.h.b16 %v28
  %v357 = vunpack.c.l.b16 %v29
  %v358 = vunpack.c.h.b16 %v29
  %v359 = vunpack.c.l.b16 %v30
  %v360 = vunpack.c.h.b16 %v30
  %v361 = vunpack.c.l.b16 %v31
  %v362 = vunpack.c.h.b16 %v31
  %v363 = vunpack.c.l.b16 %v32
  %v364 = vunpack.c.h.b16 %v32
  %v365 = vunpack.c.l.b16 %v33
  %v366 = vunpack.c.h.b16 %v33
  %v367 = vunpack.c.l.b16 %v34
  %v368 = vunpack.c.h.b16 %v34
  %v369 = vunpack.c.l.b16 %v35
  %v370 = vunpack.c.h.b16 %v35
  %v371 = vunpack.c.l.b16 %v36
  %v372 = vunpack.c.h.b16 %v36
  %v373 = vunpack.c.l.b16 %v37
  %v374 = vunpack.c.h.b16 %v37
  %v375 = vunpack.c.l.b16 %v38
  %v376 = vunpack.c.h.b16 %v38
  %v377 = vunpack.c.l.b16 %v39
  %v378 = vunpack.c.h.b16 %v39
  %v379 = vunpack.c.l.b16 %v40
  %v380 = vunpack.c.h.b16 %v40
  %v381 = vunpack.c.l.b16 %v41
  %v382 = vunpack.c.h.b16 %v41
  %v383 = vunpack.c.l.b16 %v42
  %v384 = vunpack.c.h.b16 %v42
  %v385 = vunpack.c.l.b16 %v43
  %v386 = vunpack.c.h.b16 %v43
  %v387 = vunpack.c.l.b16 %v44
  %v388 = vunpack.c.h.b16 %v44
  %v389 = vunpack.c.l.b16 %v45
  %v390 = vunpack.c.h.b16 %v45
  %v391 = vunpack.c.l.b16 %v46
  %v392 = vunpack.c.h.b16 %v46
  %v393 = vunpack.c.l.b16 %v47
  %v394 = vunpack.c.h.b16 %v47
  %v395 = vunpack.c.l.b16 %v48
  %v396 = vunpack.c.h.b16 %v48
  %v397 = vunpack.c.l.b16 %v49
  %v398 = vunpack.c.h.b16 %v49
  %v399 = vunpack.c.l.b16 %v50
  %v400 = vunpack.c.h.b16 %v50
  %v401 = vunpack.c.l.b16 %v51
  %v402 = vunpack.c.h.b16 %v51
  %v403 = vunpack.c.l.b16 %v52
  %v404 = vunpack.c.h.b16 %v52
  %v405 = vunpack.c.l.b16 %v53
  %v406 = vunpack.c.h.b16 %v53
  %v407 = vunpack.c.l.b16 %v54
  %v408 = vunpack.c.h.b16 %v54
  %v409 = vunpack.c.l.b16 %v55
  %v410 = vunpack.c.h.b16 %v55
  %v411 = vunpack.c.l.b16 %v56
  %v412 = vunpack.c.h.b16 %v56
  %v413 = vunpack.c.l.b16 %v57
  %v414 = vunpack.c.h.b16 %v57
  %v415 = vunpack.c.l.b16 %v58
  %v416 = vunpack.c.h.b16 %v58
  %v417 = vunpack.c.l.b16 %v59
  %v418 = vunpack.c.h.b16 %v59
  %v419 = vunpack.c.l.b16 %v60
  %v420 = vunpack.c.h.b16 %v60
  %v421 = vunpack.c.l.b16 %v61
  %v422 = vunpack.c.h.b16 %v61
  %v423 = vunpack.c.l.b16 %v62
  %v424 = vunpack.c.h.b16 %v62
  %v425 = vunpack.c.l.b16 %v63
  %v426 = vunpack.c.h.b16 %v63
  %v427 = vunpack.c.l.b16 %v64
  %v428 = vunpack.c.h.b16 %v64
  %v429 = vunpack.c.l.b16 %v65
  %v430 = vunpack.c.h.b16 %v65
  %v431 = vunpack.c.l.b16 %v66
  %v432 = vunpack.c.h.b16 %v66
  %v433 = vunpack.c.l.b16 %v67
  %v434 = vunpack.c.h.b16 %v67
  %v435 = vunpack.c.l.b16 %v68
  %v436 = vunpack.c.h.b16 %v68
  %v437 = vunpack.c.l.b16 %v69
  %v438 = vunpack.c.h.b16 %v69
  %v439 = vunpack.c.l.b16 %v70
  %v440 = vunpack.c.h.b16 %v70
  %v441 = vunpack.c.l.b16 %v71
  %v442 = vunpack.c.h.b16 %v71
  %v443 = vunpack.c.l.b16 %v72
  %v444 = vunpack.c.h.b16 %v72
  %v445 = vunpack.c.l.b16 %v73
  %v446 = vunpack.c.h.b16 %v73
  %v447 = vunpack.c.l.b16 %v74
  %v448 = vunpack.c.h.b16 %v74
  %v449 = vunpack.c.l.b16 %v75
  %v450 = vunpack.c.h.b16 %v75
  %v451 = vunpack.c.l.b16 %v76
  %v452 = vunpack.c.h.b16 %v76
  %v453 = vunpack.c.l.b16 %v77
  %v454 = vunpack.c.h.b16 %v77
  %v455 = vunpack.c.l.b16 %v78
  %v456 = vunpack.c.h.b16 %v78
  %v457 = vunpack.c.l.b16 %v79
  %v458 = vunpack.c.h.b16 %v79
  %v459 = vunpack.c.l.b16 %v80
  %v460 = vunpack.c.h.b16 %v80
  %v461 = vunpack.c.l.b16 %v81
  %v462 = vunpack.c.h.b16 %v81
  %v463 = vunpack.c.l.b16 %v82
  %v464 = vunpack.c.h.b16 %v82
  %v465 = vunpack.c.l.b16 %v83
  %v466 = vunpack.c.h.b16 %v83
  %v467 = vunpack.c.l.b16 %v84
  %v468 = vunpack.c.h.b16 %v84
  %v469 = vunpack.c.l.b16 %v85
  %v470 = vunpack.c.h.b16 %v85
  %v471 = vunpack.c.l.b16 %v86
  %v472 = vunpack.c.h.b16 %v86
  %v473 = vunpack.c.l.b16 %v87
  %v474 = vunpack.c.h.b16 %v87
  %v475 = vunpack.c.l.b16 %v88
  %v476 = vunpack.c.h.b16 %v88
  %v477 = vunpack.c.l.b16 %v89
  %v478 = vunpack.c.h.b16 %v89
  %v479 = vunpack.c.l.b16 %v90
  %v480 = vunpack.c.h.b16 %v90
  %v481 = vunpack.c.l.b16 %v91
  %v482 = vunpack.c.h.b16 %v91
  %v483 = vunpack.c.l.b16 %v92
  %v484 = vunpack.c.h.b16 %v92
  %v485 = vunpack.c.l.b16 %v93
  %v486 = vunpack.c.h.b16 %v93
  %v487 = vunpack.c.l.b16 %v94
  %v488 = vunpack.c.h.b16 %v94
  %v489 = vunpack.c.l.b16 %v95
  %v490 = vunpack.c.h.b16 %v95
  %v491 = vunpack.c.l.b16 %v96
  %v492 = vunpack.c.h.b16 %v96
  %v493 = vunpack.c.l.b16 %v97
  %v494 = vunpack.c.h.b16 %v97
  %v495 = vunpack.c.l.b16 %v98
  %v496 = vunpack.c.h.b16 %v98
  %v497 = vunpack.c.l.b16 %v99
  %v498 = vunpack.c.h.b16 %v99
  %v499 = vunpack.c.l.b16 %v100
  %v500 = vunpack.c.h.b16 %v100
  %v501 = vunpack.c.l.b16 %v101
  %v502 = vunpack.c.h.b16 %v101
  %v503 = vunpack.c.l.b16 %v102
  %v504 = vunpack.c.h.b16 %v102
  %v505 = vunpack.c.l.b16 %v103
  %v506 = vunpack.c.h.b16 %v103
  %v507 = vunpack.c.l.b16 %v104
  %v508 = vunpack.c.h.b16 %v104
  %v509 = vunpack.c.l.b16 %v105
  %v510 = vunpack.c.h.b16 %v105
  %v511 = vunpack.c.l.b16 %v106
  %v512 = vunpack.c.h.b16 %v106
  %v513 = vunpack.c.l.b16 %v107
  %v514 = vunpack.c.h.b16 %v107
  %v515 = vunpack.c.l.b16 %v108
  %v516 = vunpack.c.h.b16 %v108
  %v517 = vunpack.c.l.b16 %v109
  %v518 = vunpack.c.h.b16 %v109
  %v519 = vunpack.c.l.b16 %v110
  %v520 = vunpack.c.h.b16 %v110
  %v521 = vunpack.c.l.b16 %v111
  %v522 = vunpack.c.h.b16 %v111
  %v523 = vunpack.c.l.b16 %v112
  %v524 = vunpack.c.h.b16 %v112
  %v525 = vunpack.c.l.b16 %v113
  %v526 = vunpack.c.h.b16 %v113
  %v527 = vunpack.c.l.b16 %v114
  %v528 = vunpack.c.h.b16 %v114
  %v529 = vunpack.c.l.b16 %v115
  %v530 = vunpack.c.h.b16 %v115
  %v531 = vunpack.c.l.b16 %v116
  %v532 = vunpack.c.h.b16 %v116
  %v533 = vunpack.c.l.b16 %v117
  %v534 = vunpack.c.h.b16 %v117
  %v535 = vunpack.c.l.b16 %v118
  %v536 = vunpack.c.h.b16 %v118
  %v537 = vunpack.c.l.b16 %v119
  %v538 = vunpack.c.h.b16 %v119
  %v539 = vunpack.c.l.b16 %v120
  %v540 = vunpack.c.h.b16 %v120
  %v541 = vunpack.c.l.b16 %v121
  %v542 = vunpack.c.h.b16 %v121
  %v543 = vunpack.c.l.b16 %v122
  %v544 = vunpack.c.h.b16 %v122
  %v545 = vunpack.c.l.b16 %v123
  %v546 = vunpack.c.h.b16 %v123
  %v547 = vunpack.c.l.b16 %v124
  %v548 = vunpack.c.h.b16 %v124
  %v549 = vunpack.c.l.b16 %v125
  %v550 = vunpack.c.h.b16 %v125
  %v551 = vunpack.c.l.b16 %v126
  %v552 = vunpack.c.h.b16 %v126
  %v553 = vunpack.c.l.b16 %v127
  %v554 = vunpack.c.h.b16 %v127
  %v555 = vunpack.c.l.b16 %v128
  %v556 = vunpack.c.h.b16 %v128
  %v557 = vunpack.c.l.b16 %v129
  %v558 = vunpack.c.h.b16 %v129
  %v559 = vunpack.c.l.b16 %v130
  %v560 = vunpack.c.h.b16 %v130
  %v561 = vunpack.c.l.b16 %v131
  %v562 = vunpack.c.h.b16 %v131
  %v563 = vunpack.c.l.b16 %v132
  %v564 = vunpack.c.h.b16 %v132
  %v565 = vunpack.c.l.b16 %v133
  %v566 = vunpack.c.h.b16 %v133
  %v567 = vunpack.c.l.b16 %v134
  %v568 = vunpack.c.h.b16 %v134
  %v569 = vunpack.c.l.b16 %v135
  %v570 = vunpack.c.h.b16 %v135
  %v571 = vunpack.c.l.b16 %v136
  %v572 = vunpack.c.h.b16 %v136
  %v573 = vunpack.c.l.b16 %v137
  %v574 = vunpack.c.h.b16 %v137
  %v575 = vunpack.c.l.b16 %v138
  %v576 = vunpack.c.h.b16 %v138
  %v577 = vunpack.c.l.b16 %v139
  %v578 = vunpack.c.h.b16 %v139
  %v579 = vunpack.c.l.b16 %v140
  %v580 = vunpack.c.h.b16 %v140
  %v581 = vunpack.c.l.b16 %v141
  %v582 = vunpack.c.h.b16 %v141
  %v583 = vunpack.c.l.b16 %v142
  %v584 = vunpack.c.h.b16 %v142
  %v585 = vunpack.c.l.b16 %v143
  %v586 = vunpack.c.h.b16 %v143
  %v587 = vunpack.c.l.b16 %v144
  %v588 = vunpack.c.h.b16 %v144
  %v589 = vunpack.c.l.b16 %v145
  %v590 = vunpack.c.h.b16 %v145
  %v591 = vunpack.c.l.b16 %v146
  %v592 = vunpack.c.h.b16 %v146
  %v593 = vunpack.c.l.b16 %v147
  %v594 = vunpack.c.h.b16 %v147
  %v595 = vpack.c.b16 %v343, %v339
  %v596 = vpack.c.b16 %v344, %v340
  %v597 = vpack.c.b16 %v345, %v341
  %v598 = vpack.c.b16 %v346, %v342
  %v599 = vpack.c.b16 %v351, %v347
  %v600 = vpack.c.b16 %v352, %v348
  %v601 = vpack.c.b16 %v353, %v349
  %v602 = vpack.c.b16 %v354, %v350
  %v603 = vpack.c.b16 %v359, %v355
  %v604 = vpack.c.b16 %v360, %v356
  %v605 = vpack.c.b16 %v361, %v357
  %v606 = vpack.c.b16 %v362, %v358
  %v607 = vpack.c.b16 %v367, %v363
  %v608 = vpack.c.b16 %v368, %v364
  %v609 = vpack.c.b16 %v369, %v365
  %v610 = vpack.c.b16 %v370, %v366
  %v611 = vpack.c.b16 %v375, %v371
  %v612 = vpack.c.b16 %v376, %v372
  %v613 = vpack.c.b16 %v377, %v373
  %v614 = vpack.c.b16 %v378, %v374
  %v615 = vpack.c.b16 %v383, %v379
  %v616 = vpack.c.b16 %v384, %v380
  %v617 = vpack.c.b16 %v385, %v381
  %v618 = vpack.c.b16 %v386, %v382
  %v619 = vpack.c.b16 %v391, %v387
  %v620 = vpack.c.b16 %v392, %v388
  %v621 = vpack.c.b16 %v393, %v389
  %v622 = vpack.c.b16 %v394, %v390
  %v623 = vpack.c.b16 %v399, %v395
  %v624 = vpack.c.b16 %v400, %v396
  %v625 = vpack.c.b16 %v401, %v397
  %v626 = vpack.c.b16 %v402, %v398
  %v627 = vpack.c.b16 %v407, %v403
  %v628 = vpack.c.b16 %v408, %v404
  %v629 = vpack.c.b16 %v409, %v405
  %v630 = vpack.c.b16 %v410, %v406
  %v631 = vpack.c.b16 %v415, %v411
  %v632 = vpack.c.b16 %v416, %v412
  %v633 = vpack.c.b16 %v417, %v413
  %v634 = vpack.c.b16 %v418, %v414
  %v635 = vpack.c.b16 %v423, %v419
  %v636 = vpack.c.b16 %v424, %v420
  %v637 = vpack.c.b16 %v425, %v421
  %v638 = vpack.c.b16 %v426, %v422
  %v639 = vpack.c.b16 %v431, %v427
  %v640 = vpack.c.b16 %v432, %v428
  %v641 = vpack.c.b16 %v433, %v429
  %v642 = vpack.c.b16 %v434, %v430
  %v643 = vpack.c.b16 %v439, %v435
  %v644 = vpack.c.b16 %v440, %v436
  %v645 = vpack.c.b16 %v441, %v437
  %v646 = vpack.c.b16 %v442, %v438
  %v647 = vpack.c.b16 %v447, %v443
  %v648 = vpack.c.b16 %v448, %v444
  %v649 = vpack.c.b16 %v449, %v445
  %v650 = vpack.c.b16 %v450, %v446
  %v651 = vpack.c.b16 %v455, %v451
  %v652 = vpack.c.b16 %v456, %v452
  %v653 = vpack.c.b16 %v457, %v453
  %v654 = vpack.c.b16 %v458, %v454
  %v655 = vpack.c.b16 %v463, %v459
  %v656 = vpack.c.b16 %v464, %v460
  %v657 = vpack.c.b16 %v465, %v461
  %v658 = vpack.c.b16 %v466, %v462
  %v659 = vpack.c.b16 %v471, %v467
  %v660 = vpack.c.b16 %v472, %v468
  %v661 = vpack.c.b16 %v473, %v469
  %v662 = vpack.c.b16 %v474, %v470
  %v663 = vpack.c.b16 %v479, %v475
  %v664 = vpack.c.b16 %v480, %v476
  %v665 = vpack.c.b16 %v481, %v477
  %v666 = vpack.c.b16 %v482, %v478
  %v667 = vpack.c.b16 %v487, %v483
  %v668 = vpack.c.b16 %v488, %v484
  %v669 = vpack.c.b16 %v489, %v485
  %v670 = vpack.c.b16 %v490, %v486
  %v671 = vpack.c.b16 %v495, %v491
  %v672 = vpack.c.b16 %v496, %v492
  %v673 = vpack.c.b16 %v497, %v493
  %v674 = vpack.c.b16 %v498, %v494
  %v675 = vpack.c.b16 %v503, %v499
  %v676 = vpack.c.b16 %v504, %v500
  %v677 = vpack.c.b16 %v505, %v501
  %v678 = vpack.c.b16 %v506, %v502
  %v679 = vpack.c.b16 %v511, %v507
  %v680 = vpack.c.b16 %v512, %v508
  %v681 = vpack.c.b16 %v513, %v509
  %v682 = vpack.c.b16 %v514, %v510
  %v683 = vpack.c.b16 %v519, %v515
  %v684 = vpack.c.b16 %v520, %v516
  %v685 = vpack.c.b16 %v521, %v517
  %v686 = vpack.c.b16 %v522, %v518
  %v687 = vpack.c.b16 %v527, %v523
  %v688 = vpack.c.b16 %v528, %v524
  %v689 = vpack.c.b16 %v529, %v525
  %v690 = vpack.c.b16 %v530, %v526
  %v691 = vpack.c.b16 %v535, %v531
  %v692 = vpack.c.b16 %v536, %v532
  %v693 = vpack.c.b16 %v537, %v533
  %v694 = vpack.c.b16 %v538, %v534
  %v695 = vpack.c.b16 %v543, %v539
  %v696 = vpack.c.b16 %v544, %v540
  %v697 = vpack.c.b16 %v545, %v541
  %v698 = vpack.c.b16 %v546, %v542
  %v699 = vpack.c.b16 %v551, %v547
  %v700 = vpack.c.b16 %v552, %v548
  %v701 = vpack.c.b16 %v553, %v549
  %v702 = vpack.c.b16 %v554, %v550
  %v703 = vpack.c.b16 %v559, %v555
  %v704 = vpack.c.b16 %v560, %v556
  %v705 = vpack.c.b16 %v561, %v557
  %v706 = vpack.c.b16 %v562, %v558
  %v707 = vpack.c.b16 %v567, %v563
  %v708 = vpack.c.b16 %v568, %v564
  %v709 = vpack.c.b16 %v569, %v565
  %v710 = vpack.c.b16 %v570, %v566
  %v711 = vpack.c.b16 %v575, %v571
  %v712 = vpack.c.b16 %v576, %v572
  %v713 = vpack.c.b16 %v577, %v573
  %v714 = vpack.c.b16 %v578, %v574
  %v715 = vpack.c.b16 %v583, %v579
  %v716 = vpack.c.b16 %v584, %v580
  %v717 = vpack.c.b16 %v585, %v581
  %v718 = vpack.c.b16 %v586, %v582
  %v719 = vpack.c.b16 %v591, %v587
  %v720 = vpack.c.b16 %v592, %v588
  %v721 = vpack.c.b16 %v593, %v589
  %v722 = vpack.c.b16 %v594, %v590
  %v882 = vunpack.c.l.b16 %v148
  %v883 = vunpack.c.l.b16 %v149
  %v884 = vunpack.c.l.b16 %v150
  %v885 = vunpack.c.l.b16 %v151
  %v886 = vunpack.c.l.b16 %v152
  %v887 = vunpack.c.l.b16 %v153
  %v888 = vunpack.c.l.b16 %v154
  %v889 = vunpack.c.l.b16 %v155
  %v890 = vunpack.c.l.b16 %v156
  %v891 = vunpack.c.l.b16 %v157
  %v892 = vunpack.c.l.b16 %v158
  %v893 = vunpack.c.l.b16 %v159
  %v894 = vunpack.c.l.b16 %v160
  %v895 = vunpack.c.l.b16 %v161
  %v896 = vunpack.c.l.b16 %v162
  %v897 = vunpack.c.l.b16 %v163
  %v898 = vunpack.c.l.b16 %v164
  %v899 = vunpack.c.l.b16 %v165
  %v900 = vunpack.c.l.b16 %v166
  %v901 = vunpack.c.l.b16 %v167
  %v902 = vunpack.c.l.b16 %v168
  %v903 = vunpack.c.l.b16 %v169
  %v904 = vunpack.c.l.b16 %v170
  %v905 = vunpack.c.l.b16 %v171
  %v906 = vunpack.c.l.b16 %v172
  %v907 = vunpack.c.l.b16 %v173
  %v908 = vunpack.c.l.b16 %v174
  %v909 = vunpack.c.l.b16 %v175
  %v910 = vunpack.c.l.b16 %v176
  %v911 = vunpack.c.l.b16 %v177
  %v912 = vunpack.c.l.b16 %v178
  %v913 = vunpack.c.l.b16 %v179
  %v914 = vunpack.c.l.b16 %v180
  %v915 = vunpack.c.l.b16 %v181
  %v916 = vunpack.c.l.b16 %v182
  %v917 = vunpack.c.l.b16 %v183
  %v918 = vunpack.c.l.b16 %v184
  %v919 = vunpack.c.l.b16 %v185
  %v920 = vunpack.c.l.b16 %v186
  %v921 = vunpack.c.l.b16 %v187
  %v922 = vunpack.c.l.b16 %v188
  %v923 = vunpack.c.l.b16 %v189
  %v924 = vunpack.c.l.b16 %v190
  %v925 = vunpack.c.l.b16 %v191
  %v926 = vunpack.c.l.b16 %v192
  %v927 = vunpack.c.l.b16 %v193
  %v928 = vunpack.c.l.b16 %v194
  %v929 = vunpack.c.l.b16 %v195
  %v930 = vunpack.c.l.b16 %v196
  %v931 = vunpack.c.l.b16 %v197
  %v932 = vunpack.c.l.b16 %v198
  %v933 = vunpack.c.l.b16 %v199
  %v934 = vunpack.c.l.b16 %v200
  %v935 = vunpack.c.l.b16 %v201
  %v936 = vunpack.c.l.b16 %v202
  %v937 = vunpack.c.l.b16 %v203
  %v938 = vunpack.c.l.b16 %v204
  %v939 = vunpack.c.l.b16 %v205
  %v940 = vunpack.c.l.b16 %v206
  %v941 = vunpack.c.l.b16 %v207
  %v942 = vunpack.c.l.b16 %v208
  %v943 = vunpack.c.l.b16 %v209
  %v944 = vunpack.c.l.b16 %v210
  %v945 = vpack.c.b16 %v883, %v882
  %v946 = vpack.c.b16 %v885, %v884
  %v947 = vpack.c.b16 %v887, %v886
  %v948 = vpack.c.b16 %v889, %v888
  %v949 = vpack.c.b16 %v891, %v890
  %v950 = vpack.c.b16 %v893, %v892
  %v951 = vpack.c.b16 %v895, %v894
  %v952 = vpack.c.b16 %v897, %v896
  %v953 = vpack.c.b16 %v899, %v898
  %v954 = vpack.c.b16 %v901, %v900
  %v955 = vpack.c.b16 %v903, %v902
  %v956 = vpack.c.b16 %v905, %v904
  %v957 = vpack.c.b16 %v907, %v906
  %v958 = vpack.c.b16 %v909, %v908
  %v959 = vpack.c.b16 %v911, %v910
  %v960 = vpack.c.b16 %v913, %v912
  %v961 = vpack.c.b16 %v915, %v914
  %v962 = vpack.c.b16 %v917, %v916
  %v963 = vpack.c.b16 %v919, %v918
  %v964 = vpack.c.b16 %v921, %v920
  %v965 = vpack.c.b16 %v923, %v922
  %v966 = vpack.c.b16 %v925, %v924
  %v967 = vpack.c.b16 %v927, %v926
  %v968 = vpack.c.b16 %v929, %v928
  %v969 = vpack.c.b16 %v931, %v930
  %v970 = vpack.c.b16 %v933, %v932
  %v971 = vpack.c.b16 %v935, %v934
  %v972 = vpack.c.b16 %v937, %v936
  %v973 = vpack.c.b16 %v939, %v938
  %v974 = vpack.c.b16 %v941, %v940
  %v975 = vpack.c.b16 %v943, %v942
  %v976 = vpack.c.b16 %v944, %v944
  %vm1008 = vcmask 949248
  %v1010 = vsel %vm1008, %v598, 0
  %v1013 = vsel %vm1008, %v602, 0
  %v1016 = vsel %vm1008, %v606, 0
  %v1019 = vsel %vm1008, %v610, 0
  %v1022 = vsel %vm1008, %v614, 0
  %v1025 = vsel %vm1008, %v618, 0
  %v1028 = vsel %vm1008, %v622, 0
  %v1031 = vsel %vm1008, %v626, 0
  %v1034 = vsel %vm1008, %v630, 0
  %v1037 = vsel %vm1008, %v634, 0
  %v1040 = vsel %vm1008, %v638, 0
  %v1043 = vsel %vm1008, %v642, 0
  %v1046 = vsel %vm1008, %v646, 0
  %v1049 = vsel %vm1008, %v650, 0
  %v1052 = vsel %vm1008, %v654, 0
  %v1055 = vsel %vm1008, %v658, 0
  %v1058 = vsel %vm1008, %v662, 0
  %v1061 = vsel %vm1008, %v666, 0
  %v1064 = vsel %vm1008, %v670, 0
  %v1067 = vsel %vm1008, %v674, 0
  %v1070 = vsel %vm1008, %v678, 0
  %v1073 = vsel %vm1008, %v682, 0
  %v1076 = vsel %vm1008, %v686, 0
  %v1079 = vsel %vm1008, %v690, 0
  %v1082 = vsel %vm1008, %v694, 0
  %v1085 = vsel %vm1008, %v698, 0
  %v1088 = vsel %vm1008, %v702, 0
  %v1091 = vsel %vm1008, %v706, 0
  %v1094 = vsel %vm1008, %v710, 0
  %v1097 = vsel %vm1008, %v714, 0
  %v1100 = vsel %vm1008, %v718, 0
  %v1103 = vsel %vm1008, %v722, 0
  %vm1105 = vcmask 1041408
  %v1107 = vsel %vm1105, %v976, 0
  %1109 = vmatpush.bf16.msra.mxu0 %v952
  %1110 = vmatpush.bf16.msra.mxu0 %v951
  %1111 = vmatpush.bf16.msra.mxu0 %v950
  %1112 = vmatpush.bf16.msra.mxu0 %v949
  %1113 = vmatpush.bf16.msra.mxu0 %v948
  %1114 = vmatpush.bf16.msra.mxu0 %v947
  %1115 = vmatpush.bf16.msra.mxu0 %v946
  %1116 = vmatpush.bf16.msra.mxu0 %v945
  %1117 = vmatmul.bf16.gmra.mxu0 %v595
  %v1118 = vpop.f32.mrf.mxu0
  %v1119 = vadd.f32 0.0, %v1118
  %v1120 = vpop.f32.mrf.mxu0
  %v1121 = vadd.f32 0.0, %v1120
  %1122 = vmatmul.bf16.gmra.mxu0 %v599
  %v1123 = vpop.f32.mrf.mxu0
  %v1124 = vadd.f32 0.0, %v1123
  %v1125 = vpop.f32.mrf.mxu0
  %v1126 = vadd.f32 0.0, %v1125
  %1127 = vmatmul.bf16.gmra.mxu0 %v603
  %v1128 = vpop.f32.mrf.mxu0
  %v1129 = vadd.f32 0.0, %v1128
  %v1130 = vpop.f32.mrf.mxu0
  %v1131 = vadd.f32 0.0, %v1130
  %1132 = vmatmul.bf16.gmra.mxu0 %v607
  %v1133 = vpop.f32.mrf.mxu0
  %v1134 = vadd.f32 0.0, %v1133
  %v1135 = vpop.f32.mrf.mxu0
  %v1136 = vadd.f32 0.0, %v1135
  %1137 = vmatmul.bf16.gmra.mxu0 %v611
  %v1138 = vpop.f32.mrf.mxu0
  %v1139 = vadd.f32 0.0, %v1138
  %v1140 = vpop.f32.mrf.mxu0
  %v1141 = vadd.f32 0.0, %v1140
  %1142 = vmatmul.bf16.gmra.mxu0 %v615
  %v1143 = vpop.f32.mrf.mxu0
  %v1144 = vadd.f32 0.0, %v1143
  %v1145 = vpop.f32.mrf.mxu0
  %v1146 = vadd.f32 0.0, %v1145
  %1147 = vmatmul.bf16.gmra.mxu0 %v619
  %v1148 = vpop.f32.mrf.mxu0
  %v1149 = vadd.f32 0.0, %v1148
  %v1150 = vpop.f32.mrf.mxu0
  %v1151 = vadd.f32 0.0, %v1150
  %1152 = vmatmul.bf16.gmra.mxu0 %v623
  %v1153 = vpop.f32.mrf.mxu0
  %v1154 = vadd.f32 0.0, %v1153
  %v1155 = vpop.f32.mrf.mxu0
  %v1156 = vadd.f32 0.0, %v1155
  %1157 = vmatmul.bf16.gmra.mxu0 %v627
  %v1158 = vpop.f32.mrf.mxu0
  %v1159 = vadd.f32 0.0, %v1158
  %v1160 = vpop.f32.mrf.mxu0
  %v1161 = vadd.f32 0.0, %v1160
  %1162 = vmatmul.bf16.gmra.mxu0 %v631
  %v1163 = vpop.f32.mrf.mxu0
  %v1164 = vadd.f32 0.0, %v1163
  %v1165 = vpop.f32.mrf.mxu0
  %v1166 = vadd.f32 0.0, %v1165
  %1167 = vmatmul.bf16.gmra.mxu0 %v635
  %v1168 = vpop.f32.mrf.mxu0
  %v1169 = vadd.f32 0.0, %v1168
  %v1170 = vpop.f32.mrf.mxu0
  %v1171 = vadd.f32 0.0, %v1170
  %1172 = vmatmul.bf16.gmra.mxu0 %v639
  %v1173 = vpop.f32.mrf.mxu0
  %v1174 = vadd.f32 0.0, %v1173
  %v1175 = vpop.f32.mrf.mxu0
  %v1176 = vadd.f32 0.0, %v1175
  %1177 = vmatmul.bf16.gmra.mxu0 %v643
  %v1178 = vpop.f32.mrf.mxu0
  %v1179 = vadd.f32 0.0, %v1178
  %v1180 = vpop.f32.mrf.mxu0
  %v1181 = vadd.f32 0.0, %v1180
  %1182 = vmatmul.bf16.gmra.mxu0 %v647
  %v1183 = vpop.f32.mrf.mxu0
  %v1184 = vadd.f32 0.0, %v1183
  %v1185 = vpop.f32.mrf.mxu0
  %v1186 = vadd.f32 0.0, %v1185
  %1187 = vmatmul.bf16.gmra.mxu0 %v651
  %v1188 = vpop.f32.mrf.mxu0
  %v1189 = vadd.f32 0.0, %v1188
  %v1190 = vpop.f32.mrf.mxu0
  %v1191 = vadd.f32 0.0, %v1190
  %1192 = vmatmul.bf16.gmra.mxu0 %v655
  %v1193 = vpop.f32.mrf.mxu0
  %v1194 = vadd.f32 0.0, %v1193
  %v1195 = vpop.f32.mrf.mxu0
  %v1196 = vadd.f32 0.0, %v1195
  %1197 = vmatmul.bf16.gmra.mxu0 %v659
  %v1198 = vpop.f32.mrf.mxu0
  %v1199 = vadd.f32 0.0, %v1198
  %v1200 = vpop.f32.mrf.mxu0
  %v1201 = vadd.f32 0.0, %v1200
  %1202 = vmatmul.bf16.gmra.mxu0 %v663
  %v1203 = vpop.f32.mrf.mxu0
  %v1204 = vadd.f32 0.0, %v1203
  %v1205 = vpop.f32.mrf.mxu0
  %v1206 = vadd.f32 0.0, %v1205
  %1207 = vmatmul.bf16.gmra.mxu0 %v667
  %v1208 = vpop.f32.mrf.mxu0
  %v1209 = vadd.f32 0.0, %v1208
  %v1210 = vpop.f32.mrf.mxu0
  %v1211 = vadd.f32 0.0, %v1210
  %1212 = vmatmul.bf16.gmra.mxu0 %v671
  %v1213 = vpop.f32.mrf.mxu0
  %v1214 = vadd.f32 0.0, %v1213
  %v1215 = vpop.f32.mrf.mxu0
  %v1216 = vadd.f32 0.0, %v1215
  %1217 = vmatmul.bf16.gmra.mxu0 %v675
  %v1218 = vpop.f32.mrf.mxu0
  %v1219 = vadd.f32 0.0, %v1218
  %v1220 = vpop.f32.mrf.mxu0
  %v1221 = vadd.f32 0.0, %v1220
  %1222 = vmatmul.bf16.gmra.mxu0 %v679
  %v1223 = vpop.f32.mrf.mxu0
  %v1224 = vadd.f32 0.0, %v1223
  %v1225 = vpop.f32.mrf.mxu0
  %v1226 = vadd.f32 0.0, %v1225
  %1227 = vmatmul.bf16.gmra.mxu0 %v683
  %v1228 = vpop.f32.mrf.mxu0
  %v1229 = vadd.f32 0.0, %v1228
  %v1230 = vpop.f32.mrf.mxu0
  %v1231 = vadd.f32 0.0, %v1230
  %1232 = vmatmul.bf16.gmra.mxu0 %v687
  %v1233 = vpop.f32.mrf.mxu0
  %v1234 = vadd.f32 0.0, %v1233
  %v1235 = vpop.f32.mrf.mxu0
  %v1236 = vadd.f32 0.0, %v1235
  %1237 = vmatmul.bf16.gmra.mxu0 %v691
  %v1238 = vpop.f32.mrf.mxu0
  %v1239 = vadd.f32 0.0, %v1238
  %v1240 = vpop.f32.mrf.mxu0
  %v1241 = vadd.f32 0.0, %v1240
  %1242 = vmatmul.bf16.gmra.mxu0 %v695
  %v1243 = vpop.f32.mrf.mxu0
  %v1244 = vadd.f32 0.0, %v1243
  %v1245 = vpop.f32.mrf.mxu0
  %v1246 = vadd.f32 0.0, %v1245
  %1247 = vmatmul.bf16.gmra.mxu0 %v699
  %v1248 = vpop.f32.mrf.mxu0
  %v1249 = vadd.f32 0.0, %v1248
  %v1250 = vpop.f32.mrf.mxu0
  %v1251 = vadd.f32 0.0, %v1250
  %1252 = vmatmul.bf16.gmra.mxu0 %v703
  %v1253 = vpop.f32.mrf.mxu0
  %v1254 = vadd.f32 0.0, %v1253
  %v1255 = vpop.f32.mrf.mxu0
  %v1256 = vadd.f32 0.0, %v1255
  %1257 = vmatmul.bf16.gmra.mxu0 %v707
  %v1258 = vpop.f32.mrf.mxu0
  %v1259 = vadd.f32 0.0, %v1258
  %v1260 = vpop.f32.mrf.mxu0
  %v1261 = vadd.f32 0.0, %v1260
  %1262 = vmatmul.bf16.gmra.mxu0 %v711
  %v1263 = vpop.f32.mrf.mxu0
  %v1264 = vadd.f32 0.0, %v1263
  %v1265 = vpop.f32.mrf.mxu0
  %v1266 = vadd.f32 0.0, %v1265
  %1267 = vmatmul.bf16.gmra.mxu0 %v715
  %v1268 = vpop.f32.mrf.mxu0
  %v1269 = vadd.f32 0.0, %v1268
  %v1270 = vpop.f32.mrf.mxu0
  %v1271 = vadd.f32 0.0, %v1270
  %1272 = vmatmul.bf16.gmra.mxu0 %v719
  %v1273 = vpop.f32.mrf.mxu0
  %v1274 = vadd.f32 0.0, %v1273
  %v1275 = vpop.f32.mrf.mxu0
  %v1276 = vadd.f32 0.0, %v1275
  %1277 = vdwg.mxu0
  %1278 = vmatpush.bf16.msra.mxu0 %v960
  %1279 = vmatpush.bf16.msra.mxu0 %v959
  %1280 = vmatpush.bf16.msra.mxu0 %v958
  %1281 = vmatpush.bf16.msra.mxu0 %v957
  %1282 = vmatpush.bf16.msra.mxu0 %v956
  %1283 = vmatpush.bf16.msra.mxu0 %v955
  %1284 = vmatpush.bf16.msra.mxu0 %v954
  %1285 = vmatpush.bf16.msra.mxu0 %v953
  %1286 = vmatmul.bf16.gmra.mxu0 %v596
  %v1287 = vpop.f32.mrf.mxu0
  %v1288 = vadd.f32 %v1119, %v1287
  %v1289 = vpop.f32.mrf.mxu0
  %v1290 = vadd.f32 %v1121, %v1289
  %1291 = vmatmul.bf16.gmra.mxu0 %v600
  %v1292 = vpop.f32.mrf.mxu0
  %v1293 = vadd.f32 %v1124, %v1292
  %v1294 = vpop.f32.mrf.mxu0
  %v1295 = vadd.f32 %v1126, %v1294
  %1296 = vmatmul.bf16.gmra.mxu0 %v604
  %v1297 = vpop.f32.mrf.mxu0
  %v1298 = vadd.f32 %v1129, %v1297
  %v1299 = vpop.f32.mrf.mxu0
  %v1300 = vadd.f32 %v1131, %v1299
  %1301 = vmatmul.bf16.gmra.mxu0 %v608
  %v1302 = vpop.f32.mrf.mxu0
  %v1303 = vadd.f32 %v1134, %v1302
  %v1304 = vpop.f32.mrf.mxu0
  %v1305 = vadd.f32 %v1136, %v1304
  %1306 = vmatmul.bf16.gmra.mxu0 %v612
  %v1307 = vpop.f32.mrf.mxu0
  %v1308 = vadd.f32 %v1139, %v1307
  %v1309 = vpop.f32.mrf.mxu0
  %v1310 = vadd.f32 %v1141, %v1309
  %1311 = vmatmul.bf16.gmra.mxu0 %v616
  %v1312 = vpop.f32.mrf.mxu0
  %v1313 = vadd.f32 %v1144, %v1312
  %v1314 = vpop.f32.mrf.mxu0
  %v1315 = vadd.f32 %v1146, %v1314
  %1316 = vmatmul.bf16.gmra.mxu0 %v620
  %v1317 = vpop.f32.mrf.mxu0
  %v1318 = vadd.f32 %v1149, %v1317
  %v1319 = vpop.f32.mrf.mxu0
  %v1320 = vadd.f32 %v1151, %v1319
  %1321 = vmatmul.bf16.gmra.mxu0 %v624
  %v1322 = vpop.f32.mrf.mxu0
  %v1323 = vadd.f32 %v1154, %v1322
  %v1324 = vpop.f32.mrf.mxu0
  %v1325 = vadd.f32 %v1156, %v1324
  %1326 = vmatmul.bf16.gmra.mxu0 %v628
  %v1327 = vpop.f32.mrf.mxu0
  %v1328 = vadd.f32 %v1159, %v1327
  %v1329 = vpop.f32.mrf.mxu0
  %v1330 = vadd.f32 %v1161, %v1329
  %1331 = vmatmul.bf16.gmra.mxu0 %v632
  %v1332 = vpop.f32.mrf.mxu0
  %v1333 = vadd.f32 %v1164, %v1332
  %v1334 = vpop.f32.mrf.mxu0
  %v1335 = vadd.f32 %v1166, %v1334
  %1336 = vmatmul.bf16.gmra.mxu0 %v636
  %v1337 = vpop.f32.mrf.mxu0
  %v1338 = vadd.f32 %v1169, %v1337
  %v1339 = vpop.f32.mrf.mxu0
  %v1340 = vadd.f32 %v1171, %v1339
  %1341 = vmatmul.bf16.gmra.mxu0 %v640
  %v1342 = vpop.f32.mrf.mxu0
  %v1343 = vadd.f32 %v1174, %v1342
  %v1344 = vpop.f32.mrf.mxu0
  %v1345 = vadd.f32 %v1176, %v1344
  %1346 = vmatmul.bf16.gmra.mxu0 %v644
  %v1347 = vpop.f32.mrf.mxu0
  %v1348 = vadd.f32 %v1179, %v1347
  %v1349 = vpop.f32.mrf.mxu0
  %v1350 = vadd.f32 %v1181, %v1349
  %1351 = vmatmul.bf16.gmra.mxu0 %v648
  %v1352 = vpop.f32.mrf.mxu0
  %v1353 = vadd.f32 %v1184, %v1352
  %v1354 = vpop.f32.mrf.mxu0
  %v1355 = vadd.f32 %v1186, %v1354
  %1356 = vmatmul.bf16.gmra.mxu0 %v652
  %v1357 = vpop.f32.mrf.mxu0
  %v1358 = vadd.f32 %v1189, %v1357
  %v1359 = vpop.f32.mrf.mxu0
  %v1360 = vadd.f32 %v1191, %v1359
  %1361 = vmatmul.bf16.gmra.mxu0 %v656
  %v1362 = vpop.f32.mrf.mxu0
  %v1363 = vadd.f32 %v1194, %v1362
  %v1364 = vpop.f32.mrf.mxu0
  %v1365 = vadd.f32 %v1196, %v1364
  %1366 = vmatmul.bf16.gmra.mxu0 %v660
  %v1367 = vpop.f32.mrf.mxu0
  %v1368 = vadd.f32 %v1199, %v1367
  %v1369 = vpop.f32.mrf.mxu0
  %v1370 = vadd.f32 %v1201, %v1369
  %1371 = vmatmul.bf16.gmra.mxu0 %v664
  %v1372 = vpop.f32.mrf.mxu0
  %v1373 = vadd.f32 %v1204, %v1372
  %v1374 = vpop.f32.mrf.mxu0
  %v1375 = vadd.f32 %v1206, %v1374
  %1376 = vmatmul.bf16.gmra.mxu0 %v668
  %v1377 = vpop.f32.mrf.mxu0
  %v1378 = vadd.f32 %v1209, %v1377
  %v1379 = vpop.f32.mrf.mxu0
  %v1380 = vadd.f32 %v1211, %v1379
  %1381 = vmatmul.bf16.gmra.mxu0 %v672
  %v1382 = vpop.f32.mrf.mxu0
  %v1383 = vadd.f32 %v1214, %v1382
  %v1384 = vpop.f32.mrf.mxu0
  %v1385 = vadd.f32 %v1216, %v1384
  %1386 = vmatmul.bf16.gmra.mxu0 %v676
  %v1387 = vpop.f32.mrf.mxu0
  %v1388 = vadd.f32 %v1219, %v1387
  %v1389 = vpop.f32.mrf.mxu0
  %v1390 = vadd.f32 %v1221, %v1389
  %1391 = vmatmul.bf16.gmra.mxu0 %v680
  %v1392 = vpop.f32.mrf.mxu0
  %v1393 = vadd.f32 %v1224, %v1392
  %v1394 = vpop.f32.mrf.mxu0
  %v1395 = vadd.f32 %v1226, %v1394
  %1396 = vmatmul.bf16.gmra.mxu0 %v684
  %v1397 = vpop.f32.mrf.mxu0
  %v1398 = vadd.f32 %v1229, %v1397
  %v1399 = vpop.f32.mrf.mxu0
  %v1400 = vadd.f32 %v1231, %v1399
  %1401 = vmatmul.bf16.gmra.mxu0 %v688
  %v1402 = vpop.f32.mrf.mxu0
  %v1403 = vadd.f32 %v1234, %v1402
  %v1404 = vpop.f32.mrf.mxu0
  %v1405 = vadd.f32 %v1236, %v1404
  %1406 = vmatmul.bf16.gmra.mxu0 %v692
  %v1407 = vpop.f32.mrf.mxu0
  %v1408 = vadd.f32 %v1239, %v1407
  %v1409 = vpop.f32.mrf.mxu0
  %v1410 = vadd.f32 %v1241, %v1409
  %1411 = vmatmul.bf16.gmra.mxu0 %v696
  %v1412 = vpop.f32.mrf.mxu0
  %v1413 = vadd.f32 %v1244, %v1412
  %v1414 = vpop.f32.mrf.mxu0
  %v1415 = vadd.f32 %v1246, %v1414
  %1416 = vmatmul.bf16.gmra.mxu0 %v700
  %v1417 = vpop.f32.mrf.mxu0
  %v1418 = vadd.f32 %v1249, %v1417
  %v1419 = vpop.f32.mrf.mxu0
  %v1420 = vadd.f32 %v1251, %v1419
  %1421 = vmatmul.bf16.gmra.mxu0 %v704
  %v1422 = vpop.f32.mrf.mxu0
  %v1423 = vadd.f32 %v1254, %v1422
  %v1424 = vpop.f32.mrf.mxu0
  %v1425 = vadd.f32 %v1256, %v1424
  %1426 = vmatmul.bf16.gmra.mxu0 %v708
  %v1427 = vpop.f32.mrf.mxu0
  %v1428 = vadd.f32 %v1259, %v1427
  %v1429 = vpop.f32.mrf.mxu0
  %v1430 = vadd.f32 %v1261, %v1429
  %1431 = vmatmul.bf16.gmra.mxu0 %v712
  %v1432 = vpop.f32.mrf.mxu0
  %v1433 = vadd.f32 %v1264, %v1432
  %v1434 = vpop.f32.mrf.mxu0
  %v1435 = vadd.f32 %v1266, %v1434
  %1436 = vmatmul.bf16.gmra.mxu0 %v716
  %v1437 = vpop.f32.mrf.mxu0
  %v1438 = vadd.f32 %v1269, %v1437
  %v1439 = vpop.f32.mrf.mxu0
  %v1440 = vadd.f32 %v1271, %v1439
  %1441 = vmatmul.bf16.gmra.mxu0 %v720
  %v1442 = vpop.f32.mrf.mxu0
  %v1443 = vadd.f32 %v1274, %v1442
  %v1444 = vpop.f32.mrf.mxu0
  %v1445 = vadd.f32 %v1276, %v1444
  %1446 = vdwg.mxu0
  %1447 = vmatpush.bf16.msra.mxu0 %v968
  %1448 = vmatpush.bf16.msra.mxu0 %v967
  %1449 = vmatpush.bf16.msra.mxu0 %v966
  %1450 = vmatpush.bf16.msra.mxu0 %v965
  %1451 = vmatpush.bf16.msra.mxu0 %v964
  %1452 = vmatpush.bf16.msra.mxu0 %v963
  %1453 = vmatpush.bf16.msra.mxu0 %v962
  %1454 = vmatpush.bf16.msra.mxu0 %v961
  %1455 = vmatmul.bf16.gmra.mxu0 %v597
  %v1456 = vpop.f32.mrf.mxu0
  %v1457 = vadd.f32 %v1288, %v1456
  %v1458 = vpop.f32.mrf.mxu0
  %v1459 = vadd.f32 %v1290, %v1458
  %1460 = vmatmul.bf16.gmra.mxu0 %v601
  %v1461 = vpop.f32.mrf.mxu0
  %v1462 = vadd.f32 %v1293, %v1461
  %v1463 = vpop.f32.mrf.mxu0
  %v1464 = vadd.f32 %v1295, %v1463
  %1465 = vmatmul.bf16.gmra.mxu0 %v605
  %v1466 = vpop.f32.mrf.mxu0
  %v1467 = vadd.f32 %v1298, %v1466
  %v1468 = vpop.f32.mrf.mxu0
  %v1469 = vadd.f32 %v1300, %v1468
  %1470 = vmatmul.bf16.gmra.mxu0 %v609
  %v1471 = vpop.f32.mrf.mxu0
  %v1472 = vadd.f32 %v1303, %v1471
  %v1473 = vpop.f32.mrf.mxu0
  %v1474 = vadd.f32 %v1305, %v1473
  %1475 = vmatmul.bf16.gmra.mxu0 %v613
  %v1476 = vpop.f32.mrf.mxu0
  %v1477 = vadd.f32 %v1308, %v1476
  %v1478 = vpop.f32.mrf.mxu0
  %v1479 = vadd.f32 %v1310, %v1478
  %1480 = vmatmul.bf16.gmra.mxu0 %v617
  %v1481 = vpop.f32.mrf.mxu0
  %v1482 = vadd.f32 %v1313, %v1481
  %v1483 = vpop.f32.mrf.mxu0
  %v1484 = vadd.f32 %v1315, %v1483
  %1485 = vmatmul.bf16.gmra.mxu0 %v621
  %v1486 = vpop.f32.mrf.mxu0
  %v1487 = vadd.f32 %v1318, %v1486
  %v1488 = vpop.f32.mrf.mxu0
  %v1489 = vadd.f32 %v1320, %v1488
  %1490 = vmatmul.bf16.gmra.mxu0 %v625
  %v1491 = vpop.f32.mrf.mxu0
  %v1492 = vadd.f32 %v1323, %v1491
  %v1493 = vpop.f32.mrf.mxu0
  %v1494 = vadd.f32 %v1325, %v1493
  %1495 = vmatmul.bf16.gmra.mxu0 %v629
  %v1496 = vpop.f32.mrf.mxu0
  %v1497 = vadd.f32 %v1328, %v1496
  %v1498 = vpop.f32.mrf.mxu0
  %v1499 = vadd.f32 %v1330, %v1498
  %1500 = vmatmul.bf16.gmra.mxu0 %v633
  %v1501 = vpop.f32.mrf.mxu0
  %v1502 = vadd.f32 %v1333, %v1501
  %v1503 = vpop.f32.mrf.mxu0
  %v1504 = vadd.f32 %v1335, %v1503
  %1505 = vmatmul.bf16.gmra.mxu0 %v637
  %v1506 = vpop.f32.mrf.mxu0
  %v1507 = vadd.f32 %v1338, %v1506
  %v1508 = vpop.f32.mrf.mxu0
  %v1509 = vadd.f32 %v1340, %v1508
  %1510 = vmatmul.bf16.gmra.mxu0 %v641
  %v1511 = vpop.f32.mrf.mxu0
  %v1512 = vadd.f32 %v1343, %v1511
  %v1513 = vpop.f32.mrf.mxu0
  %v1514 = vadd.f32 %v1345, %v1513
  %1515 = vmatmul.bf16.gmra.mxu0 %v645
  %v1516 = vpop.f32.mrf.mxu0
  %v1517 = vadd.f32 %v1348, %v1516
  %v1518 = vpop.f32.mrf.mxu0
  %v1519 = vadd.f32 %v1350, %v1518
  %1520 = vmatmul.bf16.gmra.mxu0 %v649
  %v1521 = vpop.f32.mrf.mxu0
  %v1522 = vadd.f32 %v1353, %v1521
  %v1523 = vpop.f32.mrf.mxu0
  %v1524 = vadd.f32 %v1355, %v1523
  %1525 = vmatmul.bf16.gmra.mxu0 %v653
  %v1526 = vpop.f32.mrf.mxu0
  %v1527 = vadd.f32 %v1358, %v1526
  %v1528 = vpop.f32.mrf.mxu0
  %v1529 = vadd.f32 %v1360, %v1528
  %1530 = vmatmul.bf16.gmra.mxu0 %v657
  %v1531 = vpop.f32.mrf.mxu0
  %v1532 = vadd.f32 %v1363, %v1531
  %v1533 = vpop.f32.mrf.mxu0
  %v1534 = vadd.f32 %v1365, %v1533
  %1535 = vmatmul.bf16.gmra.mxu0 %v661
  %v1536 = vpop.f32.mrf.mxu0
  %v1537 = vadd.f32 %v1368, %v1536
  %v1538 = vpop.f32.mrf.mxu0
  %v1539 = vadd.f32 %v1370, %v1538
  %1540 = vmatmul.bf16.gmra.mxu0 %v665
  %v1541 = vpop.f32.mrf.mxu0
  %v1542 = vadd.f32 %v1373, %v1541
  %v1543 = vpop.f32.mrf.mxu0
  %v1544 = vadd.f32 %v1375, %v1543
  %1545 = vmatmul.bf16.gmra.mxu0 %v669
  %v1546 = vpop.f32.mrf.mxu0
  %v1547 = vadd.f32 %v1378, %v1546
  %v1548 = vpop.f32.mrf.mxu0
  %v1549 = vadd.f32 %v1380, %v1548
  %1550 = vmatmul.bf16.gmra.mxu0 %v673
  %v1551 = vpop.f32.mrf.mxu0
  %v1552 = vadd.f32 %v1383, %v1551
  %v1553 = vpop.f32.mrf.mxu0
  %v1554 = vadd.f32 %v1385, %v1553
  %1555 = vmatmul.bf16.gmra.mxu0 %v677
  %v1556 = vpop.f32.mrf.mxu0
  %v1557 = vadd.f32 %v1388, %v1556
  %v1558 = vpop.f32.mrf.mxu0
  %v1559 = vadd.f32 %v1390, %v1558
  %1560 = vmatmul.bf16.gmra.mxu0 %v681
  %v1561 = vpop.f32.mrf.mxu0
  %v1562 = vadd.f32 %v1393, %v1561
  %v1563 = vpop.f32.mrf.mxu0
  %v1564 = vadd.f32 %v1395, %v1563
  %1565 = vmatmul.bf16.gmra.mxu0 %v685
  %v1566 = vpop.f32.mrf.mxu0
  %v1567 = vadd.f32 %v1398, %v1566
  %v1568 = vpop.f32.mrf.mxu0
  %v1569 = vadd.f32 %v1400, %v1568
  %1570 = vmatmul.bf16.gmra.mxu0 %v689
  %v1571 = vpop.f32.mrf.mxu0
  %v1572 = vadd.f32 %v1403, %v1571
  %v1573 = vpop.f32.mrf.mxu0
  %v1574 = vadd.f32 %v1405, %v1573
  %1575 = vmatmul.bf16.gmra.mxu0 %v693
  %v1576 = vpop.f32.mrf.mxu0
  %v1577 = vadd.f32 %v1408, %v1576
  %v1578 = vpop.f32.mrf.mxu0
  %v1579 = vadd.f32 %v1410, %v1578
  %1580 = vmatmul.bf16.gmra.mxu0 %v697
  %v1581 = vpop.f32.mrf.mxu0
  %v1582 = vadd.f32 %v1413, %v1581
  %v1583 = vpop.f32.mrf.mxu0
  %v1584 = vadd.f32 %v1415, %v1583
  %1585 = vmatmul.bf16.gmra.mxu0 %v701
  %v1586 = vpop.f32.mrf.mxu0
  %v1587 = vadd.f32 %v1418, %v1586
  %v1588 = vpop.f32.mrf.mxu0
  %v1589 = vadd.f32 %v1420, %v1588
  %1590 = vmatmul.bf16.gmra.mxu0 %v705
  %v1591 = vpop.f32.mrf.mxu0
  %v1592 = vadd.f32 %v1423, %v1591
  %v1593 = vpop.f32.mrf.mxu0
  %v1594 = vadd.f32 %v1425, %v1593
  %1595 = vmatmul.bf16.gmra.mxu0 %v709
  %v1596 = vpop.f32.mrf.mxu0
  %v1597 = vadd.f32 %v1428, %v1596
  %v1598 = vpop.f32.mrf.mxu0
  %v1599 = vadd.f32 %v1430, %v1598
  %1600 = vmatmul.bf16.gmra.mxu0 %v713
  %v1601 = vpop.f32.mrf.mxu0
  %v1602 = vadd.f32 %v1433, %v1601
  %v1603 = vpop.f32.mrf.mxu0
  %v1604 = vadd.f32 %v1435, %v1603
  %1605 = vmatmul.bf16.gmra.mxu0 %v717
  %v1606 = vpop.f32.mrf.mxu0
  %v1607 = vadd.f32 %v1438, %v1606
  %v1608 = vpop.f32.mrf.mxu0
  %v1609 = vadd.f32 %v1440, %v1608
  %1610 = vmatmul.bf16.gmra.mxu0 %v721
  %v1611 = vpop.f32.mrf.mxu0
  %v1612 = vadd.f32 %v1443, %v1611
  %v1613 = vpop.f32.mrf.mxu0
  %v1614 = vadd.f32 %v1445, %v1613
  %1615 = vdwg.mxu0
  %1616 = vmatpush.bf16.msra.mxu0 %v1107
  %1617 = vmatpush.bf16.msra.mxu0 %v975
  %1618 = vmatpush.bf16.msra.mxu0 %v974
  %1619 = vmatpush.bf16.msra.mxu0 %v973
  %1620 = vmatpush.bf16.msra.mxu0 %v972
  %1621 = vmatpush.bf16.msra.mxu0 %v971
  %1622 = vmatpush.bf16.msra.mxu0 %v970
  %1623 = vmatpush.bf16.msra.mxu0 %v969
  %1624 = vmatmul.bf16.gmra.mxu0 %v1010
  %v1625 = vpop.f32.mrf.mxu0
  %v1626 = vadd.f32 %v1457, %v1625
  %v1627 = vpop.f32.mrf.mxu0
  %v1628 = vadd.f32 %v1459, %v1627
  %1629 = vmatmul.bf16.gmra.mxu0 %v1013
  %v1630 = vpop.f32.mrf.mxu0
  %v1631 = vadd.f32 %v1462, %v1630
  %v1632 = vpop.f32.mrf.mxu0
  %v1633 = vadd.f32 %v1464, %v1632
  %1634 = vmatmul.bf16.gmra.mxu0 %v1016
  %v1635 = vpop.f32.mrf.mxu0
  %v1636 = vadd.f32 %v1467, %v1635
  %v1637 = vpop.f32.mrf.mxu0
  %v1638 = vadd.f32 %v1469, %v1637
  %1639 = vmatmul.bf16.gmra.mxu0 %v1019
  %v1640 = vpop.f32.mrf.mxu0
  %v1641 = vadd.f32 %v1472, %v1640
  %v1642 = vpop.f32.mrf.mxu0
  %v1643 = vadd.f32 %v1474, %v1642
  %1644 = vmatmul.bf16.gmra.mxu0 %v1022
  %v1645 = vpop.f32.mrf.mxu0
  %v1646 = vadd.f32 %v1477, %v1645
  %v1647 = vpop.f32.mrf.mxu0
  %v1648 = vadd.f32 %v1479, %v1647
  %1649 = vmatmul.bf16.gmra.mxu0 %v1025
  %v1650 = vpop.f32.mrf.mxu0
  %v1651 = vadd.f32 %v1482, %v1650
  %v1652 = vpop.f32.mrf.mxu0
  %v1653 = vadd.f32 %v1484, %v1652
  %1654 = vmatmul.bf16.gmra.mxu0 %v1028
  %v1655 = vpop.f32.mrf.mxu0
  %v1656 = vadd.f32 %v1487, %v1655
  %v1657 = vpop.f32.mrf.mxu0
  %v1658 = vadd.f32 %v1489, %v1657
  %1659 = vmatmul.bf16.gmra.mxu0 %v1031
  %v1660 = vpop.f32.mrf.mxu0
  %v1661 = vadd.f32 %v1492, %v1660
  %v1662 = vpop.f32.mrf.mxu0
  %v1663 = vadd.f32 %v1494, %v1662
  %1664 = vmatmul.bf16.gmra.mxu0 %v1034
  %v1665 = vpop.f32.mrf.mxu0
  %v1666 = vadd.f32 %v1497, %v1665
  %v1667 = vpop.f32.mrf.mxu0
  %v1668 = vadd.f32 %v1499, %v1667
  %1669 = vmatmul.bf16.gmra.mxu0 %v1037
  %v1670 = vpop.f32.mrf.mxu0
  %v1671 = vadd.f32 %v1502, %v1670
  %v1672 = vpop.f32.mrf.mxu0
  %v1673 = vadd.f32 %v1504, %v1672
  %1674 = vmatmul.bf16.gmra.mxu0 %v1040
  %v1675 = vpop.f32.mrf.mxu0
  %v1676 = vadd.f32 %v1507, %v1675
  %v1677 = vpop.f32.mrf.mxu0
  %v1678 = vadd.f32 %v1509, %v1677
  %1679 = vmatmul.bf16.gmra.mxu0 %v1043
  %v1680 = vpop.f32.mrf.mxu0
  %v1681 = vadd.f32 %v1512, %v1680
  %v1682 = vpop.f32.mrf.mxu0
  %v1683 = vadd.f32 %v1514, %v1682
  %1684 = vmatmul.bf16.gmra.mxu0 %v1046
  %v1685 = vpop.f32.mrf.mxu0
  %v1686 = vadd.f32 %v1517, %v1685
  %v1687 = vpop.f32.mrf.mxu0
  %v1688 = vadd.f32 %v1519, %v1687
  %1689 = vmatmul.bf16.gmra.mxu0 %v1049
  %v1690 = vpop.f32.mrf.mxu0
  %v1691 = vadd.f32 %v1522, %v1690
  %v1692 = vpop.f32.mrf.mxu0
  %v1693 = vadd.f32 %v1524, %v1692
  %1694 = vmatmul.bf16.gmra.mxu0 %v1052
  %v1695 = vpop.f32.mrf.mxu0
  %v1696 = vadd.f32 %v1527, %v1695
  %v1697 = vpop.f32.mrf.mxu0
  %v1698 = vadd.f32 %v1529, %v1697
  %1699 = vmatmul.bf16.gmra.mxu0 %v1055
  %v1700 = vpop.f32.mrf.mxu0
  %v1701 = vadd.f32 %v1532, %v1700
  %v1702 = vpop.f32.mrf.mxu0
  %v1703 = vadd.f32 %v1534, %v1702
  %1704 = vmatmul.bf16.gmra.mxu0 %v1058
  %v1705 = vpop.f32.mrf.mxu0
  %v1706 = vadd.f32 %v1537, %v1705
  %v1707 = vpop.f32.mrf.mxu0
  %v1708 = vadd.f32 %v1539, %v1707
  %1709 = vmatmul.bf16.gmra.mxu0 %v1061
  %v1710 = vpop.f32.mrf.mxu0
  %v1711 = vadd.f32 %v1542, %v1710
  %v1712 = vpop.f32.mrf.mxu0
  %v1713 = vadd.f32 %v1544, %v1712
  %1714 = vmatmul.bf16.gmra.mxu0 %v1064
  %v1715 = vpop.f32.mrf.mxu0
  %v1716 = vadd.f32 %v1547, %v1715
  %v1717 = vpop.f32.mrf.mxu0
  %v1718 = vadd.f32 %v1549, %v1717
  %1719 = vmatmul.bf16.gmra.mxu0 %v1067
  %v1720 = vpop.f32.mrf.mxu0
  %v1721 = vadd.f32 %v1552, %v1720
  %v1722 = vpop.f32.mrf.mxu0
  %v1723 = vadd.f32 %v1554, %v1722
  %1724 = vmatmul.bf16.gmra.mxu0 %v1070
  %v1725 = vpop.f32.mrf.mxu0
  %v1726 = vadd.f32 %v1557, %v1725
  %v1727 = vpop.f32.mrf.mxu0
  %v1728 = vadd.f32 %v1559, %v1727
  %1729 = vmatmul.bf16.gmra.mxu0 %v1073
  %v1730 = vpop.f32.mrf.mxu0
  %v1731 = vadd.f32 %v1562, %v1730
  %v1732 = vpop.f32.mrf.mxu0
  %v1733 = vadd.f32 %v1564, %v1732
  %1734 = vmatmul.bf16.gmra.mxu0 %v1076
  %v1735 = vpop.f32.mrf.mxu0
  %v1736 = vadd.f32 %v1567, %v1735
  %v1737 = vpop.f32.mrf.mxu0
  %v1738 = vadd.f32 %v1569, %v1737
  %1739 = vmatmul.bf16.gmra.mxu0 %v1079
  %v1740 = vpop.f32.mrf.mxu0
  %v1741 = vadd.f32 %v1572, %v1740
  %v1742 = vpop.f32.mrf.mxu0
  %v1743 = vadd.f32 %v1574, %v1742
  %1744 = vmatmul.bf16.gmra.mxu0 %v1082
  %v1745 = vpop.f32.mrf.mxu0
  %v1746 = vadd.f32 %v1577, %v1745
  %v1747 = vpop.f32.mrf.mxu0
  %v1748 = vadd.f32 %v1579, %v1747
  %1749 = vmatmul.bf16.gmra.mxu0 %v1085
  %v1750 = vpop.f32.mrf.mxu0
  %v1751 = vadd.f32 %v1582, %v1750
  %v1752 = vpop.f32.mrf.mxu0
  %v1753 = vadd.f32 %v1584, %v1752
  %1754 = vmatmul.bf16.gmra.mxu0 %v1088
  %v1755 = vpop.f32.mrf.mxu0
  %v1756 = vadd.f32 %v1587, %v1755
  %v1757 = vpop.f32.mrf.mxu0
  %v1758 = vadd.f32 %v1589, %v1757
  %1759 = vmatmul.bf16.gmra.mxu0 %v1091
  %v1760 = vpop.f32.mrf.mxu0
  %v1761 = vadd.f32 %v1592, %v1760
  %v1762 = vpop.f32.mrf.mxu0
  %v1763 = vadd.f32 %v1594, %v1762
  %1764 = vmatmul.bf16.gmra.mxu0 %v1094
  %v1765 = vpop.f32.mrf.mxu0
  %v1766 = vadd.f32 %v1597, %v1765
  %v1767 = vpop.f32.mrf.mxu0
  %v1768 = vadd.f32 %v1599, %v1767
  %1769 = vmatmul.bf16.gmra.mxu0 %v1097
  %v1770 = vpop.f32.mrf.mxu0
  %v1771 = vadd.f32 %v1602, %v1770
  %v1772 = vpop.f32.mrf.mxu0
  %v1773 = vadd.f32 %v1604, %v1772
  %1774 = vmatmul.bf16.gmra.mxu0 %v1100
  %v1775 = vpop.f32.mrf.mxu0
  %v1776 = vadd.f32 %v1607, %v1775
  %v1777 = vpop.f32.mrf.mxu0
  %v1778 = vadd.f32 %v1609, %v1777
  %1779 = vmatmul.bf16.gmra.mxu0 %v1103
  %v1780 = vpop.f32.mrf.mxu0
  %v1781 = vadd.f32 %v1612, %v1780
  %v1782 = vpop.f32.mrf.mxu0
  %v1783 = vadd.f32 %v1614, %v1782
  %1784 = vdwg.mxu0
  %v1785 = vmax.f32 %v1626, %v1666
  %v1786 = vmax.f32 %v1628, %v1668
  %v1787 = vmax.f32 %v1631, %v1671
  %v1788 = vmax.f32 %v1633, %v1673
  %v1789 = vmax.f32 %v1636, %v1676
  %v1790 = vmax.f32 %v1638, %v1678
  %v1791 = vmax.f32 %v1641, %v1681
  %v1792 = vmax.f32 %v1643, %v1683
  %v1793 = vmax.f32 %v1646, %v1686
  %v1794 = vmax.f32 %v1648, %v1688
  %v1795 = vmax.f32 %v1651, %v1691
  %v1796 = vmax.f32 %v1653, %v1693
  %v1797 = vmax.f32 %v1656, %v1696
  %v1798 = vmax.f32 %v1658, %v1698
  %v1799 = vmax.f32 %v1661, %v1701
  %v1800 = vmax.f32 %v1663, %v1703
  %v1801 = vmax.f32 %v1706, %v1746
  %v1802 = vmax.f32 %v1708, %v1748
  %v1803 = vmax.f32 %v1711, %v1751
  %v1804 = vmax.f32 %v1713, %v1753
  %v1805 = vmax.f32 %v1716, %v1756
  %v1806 = vmax.f32 %v1718, %v1758
  %v1807 = vmax.f32 %v1721, %v1761
  %v1808 = vmax.f32 %v1723, %v1763
  %v1809 = vmax.f32 %v1726, %v1766
  %v1810 = vmax.f32 %v1728, %v1768
  %v1811 = vmax.f32 %v1731, %v1771
  %v1812 = vmax.f32 %v1733, %v1773
  %v1813 = vmax.f32 %v1736, %v1776
  %v1814 = vmax.f32 %v1738, %v1778
  %v1815 = vmax.f32 %v1741, %v1781
  %v1816 = vmax.f32 %v1743, %v1783
  %v1817 = vmax.f32 %v1785, %v1801
  %v1818 = vmax.f32 %v1786, %v1802
  %v1819 = vmax.f32 %v1787, %v1803
  %v1820 = vmax.f32 %v1788, %v1804
  %v1821 = vmax.f32 %v1789, %v1805
  %v1822 = vmax.f32 %v1790, %v1806
  %v1823 = vmax.f32 %v1791, %v1807
  %v1824 = vmax.f32 %v1792, %v1808
  %v1825 = vmax.f32 %v1793, %v1809
  %v1826 = vmax.f32 %v1794, %v1810
  %v1827 = vmax.f32 %v1795, %v1811
  %v1828 = vmax.f32 %v1796, %v1812
  %v1829 = vmax.f32 %v1797, %v1813
  %v1830 = vmax.f32 %v1798, %v1814
  %v1831 = vmax.f32 %v1799, %v1815
  %v1832 = vmax.f32 %v1800, %v1816
  %v1833 = vld [vmem:[%s2] sm:$0x1]
  %v1835 = vperm.slane %v1833, 0
  %v1837 = vadd.f32 %v1817, %v1835
  %v1838 = vadd.f32 %v1818, %v1835
  %v1839 = vadd.f32 %v1819, %v1835
  %v1840 = vadd.f32 %v1820, %v1835
  %v1841 = vadd.f32 %v1821, %v1835
  %v1842 = vadd.f32 %v1822, %v1835
  %v1843 = vadd.f32 %v1823, %v1835
  %v1844 = vadd.f32 %v1824, %v1835
  %v1845 = vadd.f32 %v1825, %v1835
  %v1846 = vadd.f32 %v1826, %v1835
  %v1847 = vadd.f32 %v1827, %v1835
  %v1848 = vadd.f32 %v1828, %v1835
  %v1849 = vadd.f32 %v1829, %v1835
  %v1850 = vadd.f32 %v1830, %v1835
  %v1851 = vadd.f32 %v1831, %v1835
  %v1852 = vadd.f32 %v1832, %v1835
  %v1853 = vmax.f32 %v1837, 0.0
  %v1854 = vmax.f32 %v1838, 0.0
  %v1855 = vmax.f32 %v1839, 0.0
  %v1856 = vmax.f32 %v1840, 0.0
  %v1857 = vmax.f32 %v1841, 0.0
  %v1858 = vmax.f32 %v1842, 0.0
  %v1859 = vmax.f32 %v1843, 0.0
  %v1860 = vmax.f32 %v1844, 0.0
  %v1861 = vmax.f32 %v1845, 0.0
  %v1862 = vmax.f32 %v1846, 0.0
  %v1863 = vmax.f32 %v1847, 0.0
  %v1864 = vmax.f32 %v1848, 0.0
  %v1865 = vmax.f32 %v1849, 0.0
  %v1866 = vmax.f32 %v1850, 0.0
  %v1867 = vmax.f32 %v1851, 0.0
  %v1868 = vmax.f32 %v1852, 0.0
  %v1869 = vpack.c.bf16 %v1853, %v1853
  %v1870 = vpack.c.bf16 %v1854, %v1854
  %v1871 = vpack.c.bf16 %v1855, %v1855
  %v1872 = vpack.c.bf16 %v1856, %v1856
  %v1873 = vpack.c.bf16 %v1857, %v1857
  %v1874 = vpack.c.bf16 %v1858, %v1858
  %v1875 = vpack.c.bf16 %v1859, %v1859
  %v1876 = vpack.c.bf16 %v1860, %v1860
  %v1877 = vpack.c.bf16 %v1861, %v1861
  %v1878 = vpack.c.bf16 %v1862, %v1862
  %v1879 = vpack.c.bf16 %v1863, %v1863
  %v1880 = vpack.c.bf16 %v1864, %v1864
  %v1881 = vpack.c.bf16 %v1865, %v1865
  %v1882 = vpack.c.bf16 %v1866, %v1866
  %v1883 = vpack.c.bf16 %v1867, %v1867
  %v1884 = vpack.c.bf16 %v1868, %v1868
  %v1885 = vld [vmem:[%s3] sm:$0xf]
  %v1886 = vld [vmem:[%s3 + $0x4] sm:$0xf]
  %v1887 = vld [vmem:[%s3 + $0x8] sm:$0xf]
  %v1888 = vld [vmem:[%s3 + $0xc] sm:$0xf]
  %v1889 = vld [vmem:[%s3 + $0x10] sm:$0xf]
  %v1890 = vld [vmem:[%s3 + $0x14] sm:$0xf]
  %v1891 = vld [vmem:[%s3 + $0x18] sm:$0xf]
  %v1892 = vld [vmem:[%s3 + $0x1c] sm:$0xf]
  %v1893 = vld [vmem:[%s3 + $0x20] sm:$0xf]
  %v1894 = vld [vmem:[%s3 + $0x24] sm:$0xf]
  %v1895 = vld [vmem:[%s3 + $0x28] sm:$0xf]
  %v1896 = vld [vmem:[%s3 + $0x2c] sm:$0xf]
  %v1897 = vld [vmem:[%s3 + $0x30] sm:$0xf]
  %v1898 = vld [vmem:[%s3 + $0x34] sm:$0xf]
  %v1899 = vld [vmem:[%s3 + $0x38] sm:$0xf]
  %v1900 = vld [vmem:[%s3 + $0x3c] sm:$0xf]
  %v1901 = vld [vmem:[%s3 + $0x40] sm:$0xf]
  %v1902 = vld [vmem:[%s3 + $0x44] sm:$0xf]
  %v1903 = vld [vmem:[%s3 + $0x48] sm:$0xf]
  %v1904 = vld [vmem:[%s3 + $0x4c] sm:$0xf]
  %v1905 = vld [vmem:[%s3 + $0x50] sm:$0xf]
  %v1906 = vld [vmem:[%s3 + $0x54] sm:$0xf]
  %v1907 = vld [vmem:[%s3 + $0x58] sm:$0xf]
  %v1908 = vld [vmem:[%s3 + $0x5c] sm:$0xf]
  %v1909 = vld [vmem:[%s3 + $0x60] sm:$0xf]
  %v1910 = vld [vmem:[%s3 + $0x64] sm:$0xf]
  %v1911 = vld [vmem:[%s3 + $0x68] sm:$0xf]
  %v1912 = vld [vmem:[%s3 + $0x6c] sm:$0xf]
  %v1913 = vld [vmem:[%s3 + $0x70] sm:$0xf]
  %v1914 = vld [vmem:[%s3 + $0x74] sm:$0xf]
  %v1915 = vld [vmem:[%s3 + $0x78] sm:$0xf]
  %v1916 = vld [vmem:[%s3 + $0x7c] sm:$0xf]
  %v1917 = vld [vmem:[%s3 + $0x80] sm:$0xf]
  %v1918 = vld [vmem:[%s3 + $0x84] sm:$0xf]
  %v1919 = vld [vmem:[%s3 + $0x88] sm:$0xf]
  %v1920 = vld [vmem:[%s3 + $0x8c] sm:$0xf]
  %v1921 = vld [vmem:[%s3 + $0x90] sm:$0xf]
  %v1922 = vld [vmem:[%s3 + $0x94] sm:$0xf]
  %v1923 = vld [vmem:[%s3 + $0x98] sm:$0xf]
  %v1924 = vld [vmem:[%s3 + $0x9c] sm:$0xf]
  %v1925 = vld [vmem:[%s3 + $0xa0] sm:$0xf]
  %v1926 = vld [vmem:[%s3 + $0xa4] sm:$0xf]
  %v1927 = vld [vmem:[%s3 + $0xa8] sm:$0xf]
  %v1928 = vld [vmem:[%s3 + $0xac] sm:$0xf]
  %v1929 = vld [vmem:[%s3 + $0xb0] sm:$0xf]
  %v1930 = vld [vmem:[%s3 + $0xb4] sm:$0xf]
  %v1931 = vld [vmem:[%s3 + $0xb8] sm:$0xf]
  %v1932 = vld [vmem:[%s3 + $0xbc] sm:$0xf]
  %v1933 = vld [vmem:[%s3 + $0xc0] sm:$0xf]
  %v1934 = vld [vmem:[%s3 + $0xc4] sm:$0xf]
  %v1935 = vld [vmem:[%s3 + $0xc8] sm:$0xf]
  %v1936 = vld [vmem:[%s3 + $0xcc] sm:$0xf]
  %v1937 = vld [vmem:[%s3 + $0xd0] sm:$0xf]
  %v1938 = vld [vmem:[%s3 + $0xd4] sm:$0xf]
  %v1939 = vld [vmem:[%s3 + $0xd8] sm:$0xf]
  %v1940 = vld [vmem:[%s3 + $0xdc] sm:$0xf]
  %v1941 = vld [vmem:[%s3 + $0xe0] sm:$0xf]
  %v1942 = vld [vmem:[%s3 + $0xe4] sm:$0xf]
  %v1943 = vld [vmem:[%s3 + $0xe8] sm:$0xf]
  %v1944 = vld [vmem:[%s3 + $0xec] sm:$0xf]
  %v1945 = vld [vmem:[%s3 + $0xf0] sm:$0xf]
  %v1946 = vld [vmem:[%s3 + $0xf4] sm:$0xf]
  %v1947 = vld [vmem:[%s3 + $0xf8] sm:$0xf]
  %v1948 = vld [vmem:[%s3 + $0xfc] sm:$0xf]
  %v1949 = vld [vmem:[%s3 + $0x100] sm:$0xf]
  %v1950 = vld [vmem:[%s3 + $0x104] sm:$0xf]
  %v1951 = vld [vmem:[%s3 + $0x108] sm:$0xf]
  %v1952 = vld [vmem:[%s3 + $0x10c] sm:$0xf]
  %v1953 = vld [vmem:[%s3 + $0x110] sm:$0xf]
  %v1954 = vld [vmem:[%s3 + $0x114] sm:$0xf]
  %v1955 = vld [vmem:[%s3 + $0x118] sm:$0xf]
  %v1956 = vld [vmem:[%s3 + $0x11c] sm:$0xf]
  %v1957 = vld [vmem:[%s3 + $0x120] sm:$0xf]
  %v1958 = vld [vmem:[%s3 + $0x124] sm:$0xf]
  %v1959 = vld [vmem:[%s3 + $0x128] sm:$0xf]
  %v1960 = vld [vmem:[%s3 + $0x12c] sm:$0xf]
  %v1961 = vld [vmem:[%s3 + $0x130] sm:$0xf]
  %v1962 = vld [vmem:[%s3 + $0x134] sm:$0xf]
  %v1963 = vld [vmem:[%s3 + $0x138] sm:$0xf]
  %v1964 = vld [vmem:[%s3 + $0x13c] sm:$0xf]
  %v1965 = vld [vmem:[%s3 + $0x140] sm:$0xf]
  %v1966 = vld [vmem:[%s3 + $0x144] sm:$0xf]
  %v1967 = vld [vmem:[%s3 + $0x148] sm:$0xf]
  %v1968 = vld [vmem:[%s3 + $0x14c] sm:$0xf]
  %v1969 = vld [vmem:[%s3 + $0x150] sm:$0xf]
  %v1970 = vld [vmem:[%s3 + $0x154] sm:$0xf]
  %v1971 = vld [vmem:[%s3 + $0x158] sm:$0xf]
  %v1972 = vld [vmem:[%s3 + $0x15c] sm:$0xf]
  %v1973 = vld [vmem:[%s3 + $0x160] sm:$0xf]
  %v1974 = vld [vmem:[%s3 + $0x164] sm:$0xf]
  %v1975 = vld [vmem:[%s3 + $0x168] sm:$0xf]
  %v1976 = vld [vmem:[%s3 + $0x16c] sm:$0xf]
  %v1977 = vld [vmem:[%s3 + $0x170] sm:$0xf]
  %v1978 = vld [vmem:[%s3 + $0x174] sm:$0xf]
  %v1979 = vld [vmem:[%s3 + $0x178] sm:$0xf]
  %v1980 = vld [vmem:[%s3 + $0x17c] sm:$0xf]
  %v1981 = vld [vmem:[%s3 + $0x180] sm:$0xf]
  %v1982 = vld [vmem:[%s3 + $0x184] sm:$0xf]
  %v1983 = vld [vmem:[%s3 + $0x188] sm:$0xf]
  %v1984 = vld [vmem:[%s3 + $0x18c] sm:$0xf]
  %v1985 = vld [vmem:[%s3 + $0x190] sm:$0xf]
  %v1986 = vld [vmem:[%s3 + $0x194] sm:$0xf]
  %v1987 = vld [vmem:[%s3 + $0x198] sm:$0xf]
  %v1988 = vld [vmem:[%s3 + $0x19c] sm:$0xf]
  %v1989 = vld [vmem:[%s3 + $0x1a0] sm:$0xf]
  %v1990 = vld [vmem:[%s3 + $0x1a4] sm:$0xf]
  %v1991 = vld [vmem:[%s3 + $0x1a8] sm:$0xf]
  %v1992 = vld [vmem:[%s3 + $0x1ac] sm:$0xf]
  %v1993 = vld [vmem:[%s3 + $0x1b0] sm:$0xf]
  %v1994 = vld [vmem:[%s3 + $0x1b4] sm:$0xf]
  %v1995 = vld [vmem:[%s3 + $0x1b8] sm:$0xf]
  %v1996 = vld [vmem:[%s3 + $0x1bc] sm:$0xf]
  %v1997 = vld [vmem:[%s3 + $0x1c0] sm:$0xf]
  %v1998 = vld [vmem:[%s3 + $0x1c4] sm:$0xf]
  %v1999 = vld [vmem:[%s3 + $0x1c8] sm:$0xf]
  %v2000 = vld [vmem:[%s3 + $0x1cc] sm:$0xf]
  %v2001 = vld [vmem:[%s3 + $0x1d0] sm:$0xf]
  %v2002 = vld [vmem:[%s3 + $0x1d4] sm:$0xf]
  %v2003 = vld [vmem:[%s3 + $0x1d8] sm:$0xf]
  %v2004 = vld [vmem:[%s3 + $0x1dc] sm:$0xf]
  %v2005 = vld [vmem:[%s3 + $0x1e0] sm:$0xf]
  %v2006 = vld [vmem:[%s3 + $0x1e4] sm:$0xf]
  %v2007 = vld [vmem:[%s3 + $0x1e8] sm:$0xf]
  %v2008 = vld [vmem:[%s3 + $0x1ec] sm:$0xf]
  %v2009 = vld [vmem:[%s3 + $0x1f0] sm:$0xf]
  %v2010 = vld [vmem:[%s3 + $0x1f4] sm:$0xf]
  %v2011 = vld [vmem:[%s3 + $0x1f8] sm:$0xf]
  %v2012 = vld [vmem:[%s3 + $0x1fc] sm:$0xf]
  %v2013 = vld [vmem:[%s3 + $0x200] sm:$0xf]
  %v2014 = vld [vmem:[%s3 + $0x204] sm:$0xf]
  %v2015 = vld [vmem:[%s3 + $0x208] sm:$0xf]
  %v2016 = vld [vmem:[%s3 + $0x20c] sm:$0xf]
  %v2017 = vld [vmem:[%s3 + $0x210] sm:$0xf]
  %v2018 = vld [vmem:[%s3 + $0x214] sm:$0xf]
  %v2019 = vld [vmem:[%s3 + $0x218] sm:$0xf]
  %v2020 = vld [vmem:[%s3 + $0x21c] sm:$0xf]
  %v2021 = vld [vmem:[%s3 + $0x220] sm:$0xf]
  %v2022 = vld [vmem:[%s3 + $0x224] sm:$0xf]
  %v2023 = vld [vmem:[%s3 + $0x228] sm:$0xf]
  %v2024 = vld [vmem:[%s3 + $0x22c] sm:$0xf]
  %v2025 = vld [vmem:[%s3 + $0x230] sm:$0xf]
  %v2026 = vld [vmem:[%s3 + $0x234] sm:$0xf]
  %v2027 = vld [vmem:[%s3 + $0x238] sm:$0xf]
  %v2028 = vld [vmem:[%s3 + $0x23c] sm:$0xf]
  %v2029 = vld [vmem:[%s3 + $0x240] sm:$0xf]
  %v2030 = vld [vmem:[%s3 + $0x244] sm:$0xf]
  %v2031 = vld [vmem:[%s3 + $0x248] sm:$0xf]
  %v2032 = vld [vmem:[%s3 + $0x24c] sm:$0xf]
  %v2033 = vld [vmem:[%s3 + $0x250] sm:$0xf]
  %v2034 = vld [vmem:[%s3 + $0x254] sm:$0xf]
  %v2035 = vld [vmem:[%s3 + $0x258] sm:$0xf]
  %v2036 = vld [vmem:[%s3 + $0x25c] sm:$0xf]
  %v2037 = vld [vmem:[%s3 + $0x260] sm:$0xf]
  %v2038 = vld [vmem:[%s3 + $0x264] sm:$0xf]
  %v2039 = vld [vmem:[%s3 + $0x268] sm:$0xf]
  %v2040 = vld [vmem:[%s3 + $0x26c] sm:$0xf]
  %v2041 = vld [vmem:[%s3 + $0x270] sm:$0xf]
  %v2042 = vld [vmem:[%s3 + $0x274] sm:$0xf]
  %v2043 = vld [vmem:[%s3 + $0x278] sm:$0xf]
  %v2044 = vld [vmem:[%s3 + $0x27c] sm:$0xf]
  %v2045 = vld [vmem:[%s3 + $0x280] sm:$0xf]
  %v2046 = vld [vmem:[%s3 + $0x284] sm:$0xf]
  %v2047 = vld [vmem:[%s3 + $0x288] sm:$0xf]
  %v2048 = vld [vmem:[%s3 + $0x28c] sm:$0xf]
  %v2049 = vld [vmem:[%s3 + $0x290] sm:$0xf]
  %v2050 = vld [vmem:[%s3 + $0x294] sm:$0xf]
  %v2051 = vld [vmem:[%s3 + $0x298] sm:$0xf]
  %v2052 = vld [vmem:[%s3 + $0x29c] sm:$0xf]
  %v2053 = vld [vmem:[%s3 + $0x2a0] sm:$0xf]
  %v2054 = vld [vmem:[%s3 + $0x2a4] sm:$0xf]
  %v2055 = vld [vmem:[%s3 + $0x2a8] sm:$0xf]
  %v2056 = vld [vmem:[%s3 + $0x2ac] sm:$0xf]
  %v2057 = vld [vmem:[%s3 + $0x2b0] sm:$0xf]
  %v2058 = vld [vmem:[%s3 + $0x2b4] sm:$0xf]
  %v2059 = vld [vmem:[%s3 + $0x2b8] sm:$0xf]
  %v2060 = vld [vmem:[%s3 + $0x2bc] sm:$0xf]
  %v2061 = vld [vmem:[%s3 + $0x2c0] sm:$0xf]
  %v2062 = vld [vmem:[%s3 + $0x2c4] sm:$0xf]
  %v2063 = vld [vmem:[%s3 + $0x2c8] sm:$0xf]
  %v2064 = vld [vmem:[%s3 + $0x2cc] sm:$0xf]
  %v2065 = vld [vmem:[%s3 + $0x2d0] sm:$0xf]
  %v2066 = vld [vmem:[%s3 + $0x2d4] sm:$0xf]
  %v2067 = vld [vmem:[%s3 + $0x2d8] sm:$0xf]
  %v2068 = vld [vmem:[%s3 + $0x2dc] sm:$0xf]
  %v2069 = vld [vmem:[%s3 + $0x2e0] sm:$0xf]
  %v2070 = vld [vmem:[%s3 + $0x2e4] sm:$0xf]
  %v2071 = vld [vmem:[%s3 + $0x2e8] sm:$0xf]
  %v2072 = vld [vmem:[%s3 + $0x2ec] sm:$0xf]
  %v2073 = vld [vmem:[%s3 + $0x2f0] sm:$0xf]
  %v2074 = vld [vmem:[%s3 + $0x2f4] sm:$0xf]
  %v2075 = vld [vmem:[%s3 + $0x2f8] sm:$0xf]
  %v2076 = vld [vmem:[%s3 + $0x2fc] sm:$0xf]
  %v2077 = vld [vmem:[%s3 + $0x300] sm:$0xf]
  %v2078 = vld [vmem:[%s3 + $0x304] sm:$0xf]
  %v2079 = vld [vmem:[%s3 + $0x308] sm:$0xf]
  %v2080 = vld [vmem:[%s3 + $0x30c] sm:$0xf]
  %v2081 = vld [vmem:[%s3 + $0x310] sm:$0xf]
  %v2082 = vld [vmem:[%s3 + $0x314] sm:$0xf]
  %v2083 = vld [vmem:[%s3 + $0x318] sm:$0xf]
  %v2084 = vld [vmem:[%s3 + $0x31c] sm:$0xf]
  %v2085 = vld [vmem:[%s3 + $0x320] sm:$0xf]
  %v2086 = vld [vmem:[%s3 + $0x324] sm:$0xf]
  %v2087 = vld [vmem:[%s3 + $0x328] sm:$0xf]
  %v2088 = vld [vmem:[%s3 + $0x32c] sm:$0xf]
  %v2089 = vld [vmem:[%s3 + $0x330] sm:$0xf]
  %v2090 = vld [vmem:[%s3 + $0x334] sm:$0xf]
  %v2091 = vld [vmem:[%s3 + $0x338] sm:$0xf]
  %v2092 = vld [vmem:[%s3 + $0x33c] sm:$0xf]
  %v2093 = vld [vmem:[%s3 + $0x340] sm:$0xf]
  %v2094 = vld [vmem:[%s3 + $0x344] sm:$0xf]
  %v2095 = vld [vmem:[%s3 + $0x348] sm:$0xf]
  %v2096 = vld [vmem:[%s3 + $0x34c] sm:$0xf]
  %v2097 = vld [vmem:[%s3 + $0x350] sm:$0xf]
  %v2098 = vld [vmem:[%s3 + $0x354] sm:$0xf]
  %v2099 = vld [vmem:[%s3 + $0x358] sm:$0xf]
  %v2100 = vld [vmem:[%s3 + $0x35c] sm:$0xf]
  %v2101 = vld [vmem:[%s3 + $0x360] sm:$0xf]
  %v2102 = vld [vmem:[%s3 + $0x364] sm:$0xf]
  %v2103 = vld [vmem:[%s3 + $0x368] sm:$0xf]
  %v2104 = vld [vmem:[%s3 + $0x36c] sm:$0xf]
  %v2105 = vld [vmem:[%s3 + $0x370] sm:$0xf]
  %v2106 = vld [vmem:[%s3 + $0x374] sm:$0xf]
  %v2107 = vld [vmem:[%s3 + $0x378] sm:$0xf]
  %v2108 = vld [vmem:[%s3 + $0x37c] sm:$0xf]
  %v2109 = vld [vmem:[%s3 + $0x380] sm:$0xf]
  %v2110 = vld [vmem:[%s3 + $0x384] sm:$0xf]
  %v2111 = vld [vmem:[%s3 + $0x388] sm:$0xf]
  %v2112 = vld [vmem:[%s3 + $0x38c] sm:$0xf]
  %v2113 = vld [vmem:[%s3 + $0x390] sm:$0xf]
  %v2114 = vld [vmem:[%s3 + $0x394] sm:$0xf]
  %v2115 = vld [vmem:[%s3 + $0x398] sm:$0xf]
  %v2116 = vld [vmem:[%s3 + $0x39c] sm:$0xf]
  %v2117 = vld [vmem:[%s3 + $0x3a0] sm:$0xf]
  %v2118 = vld [vmem:[%s3 + $0x3a4] sm:$0xf]
  %v2119 = vld [vmem:[%s3 + $0x3a8] sm:$0xf]
  %v2120 = vld [vmem:[%s3 + $0x3ac] sm:$0xf]
  %v2121 = vld [vmem:[%s3 + $0x3b0] sm:$0xf]
  %v2122 = vld [vmem:[%s3 + $0x3b4] sm:$0xf]
  %v2123 = vld [vmem:[%s3 + $0x3b8] sm:$0xf]
  %v2124 = vld [vmem:[%s3 + $0x3bc] sm:$0xf]
  %v2125 = vld [vmem:[%s3 + $0x3c0] sm:$0xf]
  %v2126 = vld [vmem:[%s3 + $0x3c4] sm:$0xf]
  %v2127 = vld [vmem:[%s3 + $0x3c8] sm:$0xf]
  %v2128 = vld [vmem:[%s3 + $0x3cc] sm:$0xf]
  %v2129 = vld [vmem:[%s3 + $0x3d0] sm:$0xf]
  %v2130 = vld [vmem:[%s3 + $0x3d4] sm:$0xf]
  %v2131 = vld [vmem:[%s3 + $0x3d8] sm:$0xf]
  %v2132 = vld [vmem:[%s3 + $0x3dc] sm:$0xf]
  %v2133 = vld [vmem:[%s3 + $0x3e0] sm:$0xf]
  %v2134 = vld [vmem:[%s3 + $0x3e4] sm:$0xf]
  %v2135 = vld [vmem:[%s3 + $0x3e8] sm:$0xf]
  %v2136 = vld [vmem:[%s3 + $0x3ec] sm:$0xf]
  %v2137 = vld [vmem:[%s3 + $0x3f0] sm:$0xf]
  %v2138 = vld [vmem:[%s3 + $0x3f4] sm:$0xf]
  %v2139 = vld [vmem:[%s3 + $0x3f8] sm:$0xf]
  %v2140 = vld [vmem:[%s3 + $0x3fc] sm:$0xf]
  %v2157 = vunpack.c.l.b16 %v1901
  %v2158 = vunpack.c.l.b16 %v1902
  %v2159 = vunpack.c.l.b16 %v1903
  %v2160 = vunpack.c.l.b16 %v1904
  %v2161 = vunpack.c.l.b16 %v1905
  %v2162 = vunpack.c.l.b16 %v1906
  %v2163 = vunpack.c.l.b16 %v1907
  %v2164 = vunpack.c.l.b16 %v1908
  %v2165 = vunpack.c.l.b16 %v1909
  %v2166 = vunpack.c.l.b16 %v1910
  %v2167 = vunpack.c.l.b16 %v1911
  %v2168 = vunpack.c.l.b16 %v1912
  %v2169 = vunpack.c.l.b16 %v1913
  %v2170 = vunpack.c.l.b16 %v1914
  %v2171 = vunpack.c.l.b16 %v1915
  %v2172 = vunpack.c.l.b16 %v1916
  %v2173 = vpack.c.b16 %v2158, %v2157
  %v2174 = vpack.c.b16 %v2160, %v2159
  %v2175 = vpack.c.b16 %v2162, %v2161
  %v2176 = vpack.c.b16 %v2164, %v2163
  %v2177 = vpack.c.b16 %v2166, %v2165
  %v2178 = vpack.c.b16 %v2168, %v2167
  %v2179 = vpack.c.b16 %v2170, %v2169
  %v2180 = vpack.c.b16 %v2172, %v2171
  %2189 = vmatpush.bf16.msra.mxu0 %v2180
  %2190 = vmatpush.bf16.msra.mxu0 %v2179
  %2191 = vmatpush.bf16.msra.mxu0 %v2178
  %2192 = vmatpush.bf16.msra.mxu0 %v2177
  %2193 = vmatpush.bf16.msra.mxu0 %v2176
  %2194 = vmatpush.bf16.msra.mxu0 %v2175
  %2195 = vmatpush.bf16.msra.mxu0 %v2174
  %2196 = vmatpush.bf16.msra.mxu0 %v2173
  %2197 = vmatmul.bf16.gmra.mxu0 %v1870
  %v2198 = vpop.f32.mrf.mxu0
  %v2199 = vadd.f32 0.0, %v2198
  %v2200 = vpop.f32.mrf.mxu0
  %2201 = vdwg.mxu0
  %v2218 = vunpack.c.l.b16 %v1885
  %v2219 = vunpack.c.l.b16 %v1886
  %v2220 = vunpack.c.l.b16 %v1887
  %v2221 = vunpack.c.l.b16 %v1888
  %v2222 = vunpack.c.l.b16 %v1889
  %v2223 = vunpack.c.l.b16 %v1890
  %v2224 = vunpack.c.l.b16 %v1891
  %v2225 = vunpack.c.l.b16 %v1892
  %v2226 = vunpack.c.l.b16 %v1893
  %v2227 = vunpack.c.l.b16 %v1894
  %v2228 = vunpack.c.l.b16 %v1895
  %v2229 = vunpack.c.l.b16 %v1896
  %v2230 = vunpack.c.l.b16 %v1897
  %v2231 = vunpack.c.l.b16 %v1898
  %v2232 = vunpack.c.l.b16 %v1899
  %v2233 = vunpack.c.l.b16 %v1900
  %v2234 = vpack.c.b16 %v2219, %v2218
  %v2235 = vpack.c.b16 %v2221, %v2220
  %v2236 = vpack.c.b16 %v2223, %v2222
  %v2237 = vpack.c.b16 %v2225, %v2224
  %v2238 = vpack.c.b16 %v2227, %v2226
  %v2239 = vpack.c.b16 %v2229, %v2228
  %v2240 = vpack.c.b16 %v2231, %v2230
  %v2241 = vpack.c.b16 %v2233, %v2232
  %2250 = vmatpush.bf16.msra.mxu0 %v2241
  %2251 = vmatpush.bf16.msra.mxu0 %v2240
  %2252 = vmatpush.bf16.msra.mxu0 %v2239
  %2253 = vmatpush.bf16.msra.mxu0 %v2238
  %2254 = vmatpush.bf16.msra.mxu0 %v2237
  %2255 = vmatpush.bf16.msra.mxu0 %v2236
  %2256 = vmatpush.bf16.msra.mxu0 %v2235
  %2257 = vmatpush.bf16.msra.mxu0 %v2234
  %2258 = vmatmul.bf16.gmra.mxu0 %v1869
  %v2259 = vpop.f32.mrf.mxu0
  %v2260 = vadd.f32 %v2199, %v2259
  %v2261 = vpop.f32.mrf.mxu0
  %2262 = vdwg.mxu0
  %v2279 = vunpack.c.l.b16 %v1917
  %v2280 = vunpack.c.l.b16 %v1918
  %v2281 = vunpack.c.l.b16 %v1919
  %v2282 = vunpack.c.l.b16 %v1920
  %v2283 = vunpack.c.l.b16 %v1921
  %v2284 = vunpack.c.l.b16 %v1922
  %v2285 = vunpack.c.l.b16 %v1923
  %v2286 = vunpack.c.l.b16 %v1924
  %v2287 = vunpack.c.l.b16 %v1925
  %v2288 = vunpack.c.l.b16 %v1926
  %v2289 = vunpack.c.l.b16 %v1927
  %v2290 = vunpack.c.l.b16 %v1928
  %v2291 = vunpack.c.l.b16 %v1929
  %v2292 = vunpack.c.l.b16 %v1930
  %v2293 = vunpack.c.l.b16 %v1931
  %v2294 = vunpack.c.l.b16 %v1932
  %v2295 = vpack.c.b16 %v2280, %v2279
  %v2296 = vpack.c.b16 %v2282, %v2281
  %v2297 = vpack.c.b16 %v2284, %v2283
  %v2298 = vpack.c.b16 %v2286, %v2285
  %v2299 = vpack.c.b16 %v2288, %v2287
  %v2300 = vpack.c.b16 %v2290, %v2289
  %v2301 = vpack.c.b16 %v2292, %v2291
  %v2302 = vpack.c.b16 %v2294, %v2293
  %2311 = vmatpush.bf16.msra.mxu0 %v2302
  %2312 = vmatpush.bf16.msra.mxu0 %v2301
  %2313 = vmatpush.bf16.msra.mxu0 %v2300
  %2314 = vmatpush.bf16.msra.mxu0 %v2299
  %2315 = vmatpush.bf16.msra.mxu0 %v2298
  %2316 = vmatpush.bf16.msra.mxu0 %v2297
  %2317 = vmatpush.bf16.msra.mxu0 %v2296
  %2318 = vmatpush.bf16.msra.mxu0 %v2295
  %2319 = vmatmul.bf16.gmra.mxu0 %v1871
  %v2320 = vpop.f32.mrf.mxu0
  %v2321 = vadd.f32 0.0, %v2320
  %v2322 = vpop.f32.mrf.mxu0
  %2323 = vdwg.mxu0
  %v2324 = vadd.f32 %v2260, %v2321
  %v2341 = vunpack.c.l.b16 %v1933
  %v2342 = vunpack.c.l.b16 %v1934
  %v2343 = vunpack.c.l.b16 %v1935
  %v2344 = vunpack.c.l.b16 %v1936
  %v2345 = vunpack.c.l.b16 %v1937
  %v2346 = vunpack.c.l.b16 %v1938
  %v2347 = vunpack.c.l.b16 %v1939
  %v2348 = vunpack.c.l.b16 %v1940
  %v2349 = vunpack.c.l.b16 %v1941
  %v2350 = vunpack.c.l.b16 %v1942
  %v2351 = vunpack.c.l.b16 %v1943
  %v2352 = vunpack.c.l.b16 %v1944
  %v2353 = vunpack.c.l.b16 %v1945
  %v2354 = vunpack.c.l.b16 %v1946
  %v2355 = vunpack.c.l.b16 %v1947
  %v2356 = vunpack.c.l.b16 %v1948
  %v2357 = vpack.c.b16 %v2342, %v2341
  %v2358 = vpack.c.b16 %v2344, %v2343
  %v2359 = vpack.c.b16 %v2346, %v2345
  %v2360 = vpack.c.b16 %v2348, %v2347
  %v2361 = vpack.c.b16 %v2350, %v2349
  %v2362 = vpack.c.b16 %v2352, %v2351
  %v2363 = vpack.c.b16 %v2354, %v2353
  %v2364 = vpack.c.b16 %v2356, %v2355
  %2373 = vmatpush.bf16.msra.mxu0 %v2364
  %2374 = vmatpush.bf16.msra.mxu0 %v2363
  %2375 = vmatpush.bf16.msra.mxu0 %v2362
  %2376 = vmatpush.bf16.msra.mxu0 %v2361
  %2377 = vmatpush.bf16.msra.mxu0 %v2360
  %2378 = vmatpush.bf16.msra.mxu0 %v2359
  %2379 = vmatpush.bf16.msra.mxu0 %v2358
  %2380 = vmatpush.bf16.msra.mxu0 %v2357
  %2381 = vmatmul.bf16.gmra.mxu0 %v1872
  %v2382 = vpop.f32.mrf.mxu0
  %v2383 = vadd.f32 0.0, %v2382
  %v2384 = vpop.f32.mrf.mxu0
  %2385 = vdwg.mxu0
  %v2386 = vadd.f32 %v2324, %v2383
  %v2403 = vunpack.c.l.b16 %v1949
  %v2404 = vunpack.c.l.b16 %v1950
  %v2405 = vunpack.c.l.b16 %v1951
  %v2406 = vunpack.c.l.b16 %v1952
  %v2407 = vunpack.c.l.b16 %v1953
  %v2408 = vunpack.c.l.b16 %v1954
  %v2409 = vunpack.c.l.b16 %v1955
  %v2410 = vunpack.c.l.b16 %v1956
  %v2411 = vunpack.c.l.b16 %v1957
  %v2412 = vunpack.c.l.b16 %v1958
  %v2413 = vunpack.c.l.b16 %v1959
  %v2414 = vunpack.c.l.b16 %v1960
  %v2415 = vunpack.c.l.b16 %v1961
  %v2416 = vunpack.c.l.b16 %v1962
  %v2417 = vunpack.c.l.b16 %v1963
  %v2418 = vunpack.c.l.b16 %v1964
  %v2419 = vpack.c.b16 %v2404, %v2403
  %v2420 = vpack.c.b16 %v2406, %v2405
  %v2421 = vpack.c.b16 %v2408, %v2407
  %v2422 = vpack.c.b16 %v2410, %v2409
  %v2423 = vpack.c.b16 %v2412, %v2411
  %v2424 = vpack.c.b16 %v2414, %v2413
  %v2425 = vpack.c.b16 %v2416, %v2415
  %v2426 = vpack.c.b16 %v2418, %v2417
  %2435 = vmatpush.bf16.msra.mxu0 %v2426
  %2436 = vmatpush.bf16.msra.mxu0 %v2425
  %2437 = vmatpush.bf16.msra.mxu0 %v2424
  %2438 = vmatpush.bf16.msra.mxu0 %v2423
  %2439 = vmatpush.bf16.msra.mxu0 %v2422
  %2440 = vmatpush.bf16.msra.mxu0 %v2421
  %2441 = vmatpush.bf16.msra.mxu0 %v2420
  %2442 = vmatpush.bf16.msra.mxu0 %v2419
  %2443 = vmatmul.bf16.gmra.mxu0 %v1873
  %v2444 = vpop.f32.mrf.mxu0
  %v2445 = vadd.f32 0.0, %v2444
  %v2446 = vpop.f32.mrf.mxu0
  %2447 = vdwg.mxu0
  %v2448 = vadd.f32 %v2386, %v2445
  %v2465 = vunpack.c.l.b16 %v1965
  %v2466 = vunpack.c.l.b16 %v1966
  %v2467 = vunpack.c.l.b16 %v1967
  %v2468 = vunpack.c.l.b16 %v1968
  %v2469 = vunpack.c.l.b16 %v1969
  %v2470 = vunpack.c.l.b16 %v1970
  %v2471 = vunpack.c.l.b16 %v1971
  %v2472 = vunpack.c.l.b16 %v1972
  %v2473 = vunpack.c.l.b16 %v1973
  %v2474 = vunpack.c.l.b16 %v1974
  %v2475 = vunpack.c.l.b16 %v1975
  %v2476 = vunpack.c.l.b16 %v1976
  %v2477 = vunpack.c.l.b16 %v1977
  %v2478 = vunpack.c.l.b16 %v1978
  %v2479 = vunpack.c.l.b16 %v1979
  %v2480 = vunpack.c.l.b16 %v1980
  %v2481 = vpack.c.b16 %v2466, %v2465
  %v2482 = vpack.c.b16 %v2468, %v2467
  %v2483 = vpack.c.b16 %v2470, %v2469
  %v2484 = vpack.c.b16 %v2472, %v2471
  %v2485 = vpack.c.b16 %v2474, %v2473
  %v2486 = vpack.c.b16 %v2476, %v2475
  %v2487 = vpack.c.b16 %v2478, %v2477
  %v2488 = vpack.c.b16 %v2480, %v2479
  %2497 = vmatpush.bf16.msra.mxu0 %v2488
  %2498 = vmatpush.bf16.msra.mxu0 %v2487
  %2499 = vmatpush.bf16.msra.mxu0 %v2486
  %2500 = vmatpush.bf16.msra.mxu0 %v2485
  %2501 = vmatpush.bf16.msra.mxu0 %v2484
  %2502 = vmatpush.bf16.msra.mxu0 %v2483
  %2503 = vmatpush.bf16.msra.mxu0 %v2482
  %2504 = vmatpush.bf16.msra.mxu0 %v2481
  %2505 = vmatmul.bf16.gmra.mxu0 %v1874
  %v2506 = vpop.f32.mrf.mxu0
  %v2507 = vadd.f32 0.0, %v2506
  %v2508 = vpop.f32.mrf.mxu0
  %2509 = vdwg.mxu0
  %v2510 = vadd.f32 %v2448, %v2507
  %v2527 = vunpack.c.l.b16 %v1981
  %v2528 = vunpack.c.l.b16 %v1982
  %v2529 = vunpack.c.l.b16 %v1983
  %v2530 = vunpack.c.l.b16 %v1984
  %v2531 = vunpack.c.l.b16 %v1985
  %v2532 = vunpack.c.l.b16 %v1986
  %v2533 = vunpack.c.l.b16 %v1987
  %v2534 = vunpack.c.l.b16 %v1988
  %v2535 = vunpack.c.l.b16 %v1989
  %v2536 = vunpack.c.l.b16 %v1990
  %v2537 = vunpack.c.l.b16 %v1991
  %v2538 = vunpack.c.l.b16 %v1992
  %v2539 = vunpack.c.l.b16 %v1993
  %v2540 = vunpack.c.l.b16 %v1994
  %v2541 = vunpack.c.l.b16 %v1995
  %v2542 = vunpack.c.l.b16 %v1996
  %v2543 = vpack.c.b16 %v2528, %v2527
  %v2544 = vpack.c.b16 %v2530, %v2529
  %v2545 = vpack.c.b16 %v2532, %v2531
  %v2546 = vpack.c.b16 %v2534, %v2533
  %v2547 = vpack.c.b16 %v2536, %v2535
  %v2548 = vpack.c.b16 %v2538, %v2537
  %v2549 = vpack.c.b16 %v2540, %v2539
  %v2550 = vpack.c.b16 %v2542, %v2541
  %2559 = vmatpush.bf16.msra.mxu0 %v2550
  %2560 = vmatpush.bf16.msra.mxu0 %v2549
  %2561 = vmatpush.bf16.msra.mxu0 %v2548
  %2562 = vmatpush.bf16.msra.mxu0 %v2547
  %2563 = vmatpush.bf16.msra.mxu0 %v2546
  %2564 = vmatpush.bf16.msra.mxu0 %v2545
  %2565 = vmatpush.bf16.msra.mxu0 %v2544
  %2566 = vmatpush.bf16.msra.mxu0 %v2543
  %2567 = vmatmul.bf16.gmra.mxu0 %v1875
  %v2568 = vpop.f32.mrf.mxu0
  %v2569 = vadd.f32 0.0, %v2568
  %v2570 = vpop.f32.mrf.mxu0
  %2571 = vdwg.mxu0
  %v2572 = vadd.f32 %v2510, %v2569
  %v2589 = vunpack.c.l.b16 %v1997
  %v2590 = vunpack.c.l.b16 %v1998
  %v2591 = vunpack.c.l.b16 %v1999
  %v2592 = vunpack.c.l.b16 %v2000
  %v2593 = vunpack.c.l.b16 %v2001
  %v2594 = vunpack.c.l.b16 %v2002
  %v2595 = vunpack.c.l.b16 %v2003
  %v2596 = vunpack.c.l.b16 %v2004
  %v2597 = vunpack.c.l.b16 %v2005
  %v2598 = vunpack.c.l.b16 %v2006
  %v2599 = vunpack.c.l.b16 %v2007
  %v2600 = vunpack.c.l.b16 %v2008
  %v2601 = vunpack.c.l.b16 %v2009
  %v2602 = vunpack.c.l.b16 %v2010
  %v2603 = vunpack.c.l.b16 %v2011
  %v2604 = vunpack.c.l.b16 %v2012
  %v2605 = vpack.c.b16 %v2590, %v2589
  %v2606 = vpack.c.b16 %v2592, %v2591
  %v2607 = vpack.c.b16 %v2594, %v2593
  %v2608 = vpack.c.b16 %v2596, %v2595
  %v2609 = vpack.c.b16 %v2598, %v2597
  %v2610 = vpack.c.b16 %v2600, %v2599
  %v2611 = vpack.c.b16 %v2602, %v2601
  %v2612 = vpack.c.b16 %v2604, %v2603
  %2621 = vmatpush.bf16.msra.mxu0 %v2612
  %2622 = vmatpush.bf16.msra.mxu0 %v2611
  %2623 = vmatpush.bf16.msra.mxu0 %v2610
  %2624 = vmatpush.bf16.msra.mxu0 %v2609
  %2625 = vmatpush.bf16.msra.mxu0 %v2608
  %2626 = vmatpush.bf16.msra.mxu0 %v2607
  %2627 = vmatpush.bf16.msra.mxu0 %v2606
  %2628 = vmatpush.bf16.msra.mxu0 %v2605
  %2629 = vmatmul.bf16.gmra.mxu0 %v1876
  %v2630 = vpop.f32.mrf.mxu0
  %v2631 = vadd.f32 0.0, %v2630
  %v2632 = vpop.f32.mrf.mxu0
  %2633 = vdwg.mxu0
  %v2634 = vadd.f32 %v2572, %v2631
  %v2651 = vunpack.c.l.b16 %v2013
  %v2652 = vunpack.c.l.b16 %v2014
  %v2653 = vunpack.c.l.b16 %v2015
  %v2654 = vunpack.c.l.b16 %v2016
  %v2655 = vunpack.c.l.b16 %v2017
  %v2656 = vunpack.c.l.b16 %v2018
  %v2657 = vunpack.c.l.b16 %v2019
  %v2658 = vunpack.c.l.b16 %v2020
  %v2659 = vunpack.c.l.b16 %v2021
  %v2660 = vunpack.c.l.b16 %v2022
  %v2661 = vunpack.c.l.b16 %v2023
  %v2662 = vunpack.c.l.b16 %v2024
  %v2663 = vunpack.c.l.b16 %v2025
  %v2664 = vunpack.c.l.b16 %v2026
  %v2665 = vunpack.c.l.b16 %v2027
  %v2666 = vunpack.c.l.b16 %v2028
  %v2667 = vpack.c.b16 %v2652, %v2651
  %v2668 = vpack.c.b16 %v2654, %v2653
  %v2669 = vpack.c.b16 %v2656, %v2655
  %v2670 = vpack.c.b16 %v2658, %v2657
  %v2671 = vpack.c.b16 %v2660, %v2659
  %v2672 = vpack.c.b16 %v2662, %v2661
  %v2673 = vpack.c.b16 %v2664, %v2663
  %v2674 = vpack.c.b16 %v2666, %v2665
  %2683 = vmatpush.bf16.msra.mxu0 %v2674
  %2684 = vmatpush.bf16.msra.mxu0 %v2673
  %2685 = vmatpush.bf16.msra.mxu0 %v2672
  %2686 = vmatpush.bf16.msra.mxu0 %v2671
  %2687 = vmatpush.bf16.msra.mxu0 %v2670
  %2688 = vmatpush.bf16.msra.mxu0 %v2669
  %2689 = vmatpush.bf16.msra.mxu0 %v2668
  %2690 = vmatpush.bf16.msra.mxu0 %v2667
  %2691 = vmatmul.bf16.gmra.mxu0 %v1877
  %v2692 = vpop.f32.mrf.mxu0
  %v2693 = vadd.f32 0.0, %v2692
  %v2694 = vpop.f32.mrf.mxu0
  %2695 = vdwg.mxu0
  %v2696 = vadd.f32 %v2634, %v2693
  %v2713 = vunpack.c.l.b16 %v2029
  %v2714 = vunpack.c.l.b16 %v2030
  %v2715 = vunpack.c.l.b16 %v2031
  %v2716 = vunpack.c.l.b16 %v2032
  %v2717 = vunpack.c.l.b16 %v2033
  %v2718 = vunpack.c.l.b16 %v2034
  %v2719 = vunpack.c.l.b16 %v2035
  %v2720 = vunpack.c.l.b16 %v2036
  %v2721 = vunpack.c.l.b16 %v2037
  %v2722 = vunpack.c.l.b16 %v2038
  %v2723 = vunpack.c.l.b16 %v2039
  %v2724 = vunpack.c.l.b16 %v2040
  %v2725 = vunpack.c.l.b16 %v2041
  %v2726 = vunpack.c.l.b16 %v2042
  %v2727 = vunpack.c.l.b16 %v2043
  %v2728 = vunpack.c.l.b16 %v2044
  %v2729 = vpack.c.b16 %v2714, %v2713
  %v2730 = vpack.c.b16 %v2716, %v2715
  %v2731 = vpack.c.b16 %v2718, %v2717
  %v2732 = vpack.c.b16 %v2720, %v2719
  %v2733 = vpack.c.b16 %v2722, %v2721
  %v2734 = vpack.c.b16 %v2724, %v2723
  %v2735 = vpack.c.b16 %v2726, %v2725
  %v2736 = vpack.c.b16 %v2728, %v2727
  %2745 = vmatpush.bf16.msra.mxu0 %v2736
  %2746 = vmatpush.bf16.msra.mxu0 %v2735
  %2747 = vmatpush.bf16.msra.mxu0 %v2734
  %2748 = vmatpush.bf16.msra.mxu0 %v2733
  %2749 = vmatpush.bf16.msra.mxu0 %v2732
  %2750 = vmatpush.bf16.msra.mxu0 %v2731
  %2751 = vmatpush.bf16.msra.mxu0 %v2730
  %2752 = vmatpush.bf16.msra.mxu0 %v2729
  %2753 = vmatmul.bf16.gmra.mxu0 %v1878
  %v2754 = vpop.f32.mrf.mxu0
  %v2755 = vadd.f32 0.0, %v2754
  %v2756 = vpop.f32.mrf.mxu0
  %2757 = vdwg.mxu0
  %v2758 = vadd.f32 %v2696, %v2755
  %v2775 = vunpack.c.l.b16 %v2045
  %v2776 = vunpack.c.l.b16 %v2046
  %v2777 = vunpack.c.l.b16 %v2047
  %v2778 = vunpack.c.l.b16 %v2048
  %v2779 = vunpack.c.l.b16 %v2049
  %v2780 = vunpack.c.l.b16 %v2050
  %v2781 = vunpack.c.l.b16 %v2051
  %v2782 = vunpack.c.l.b16 %v2052
  %v2783 = vunpack.c.l.b16 %v2053
  %v2784 = vunpack.c.l.b16 %v2054
  %v2785 = vunpack.c.l.b16 %v2055
  %v2786 = vunpack.c.l.b16 %v2056
  %v2787 = vunpack.c.l.b16 %v2057
  %v2788 = vunpack.c.l.b16 %v2058
  %v2789 = vunpack.c.l.b16 %v2059
  %v2790 = vunpack.c.l.b16 %v2060
  %v2791 = vpack.c.b16 %v2776, %v2775
  %v2792 = vpack.c.b16 %v2778, %v2777
  %v2793 = vpack.c.b16 %v2780, %v2779
  %v2794 = vpack.c.b16 %v2782, %v2781
  %v2795 = vpack.c.b16 %v2784, %v2783
  %v2796 = vpack.c.b16 %v2786, %v2785
  %v2797 = vpack.c.b16 %v2788, %v2787
  %v2798 = vpack.c.b16 %v2790, %v2789
  %2807 = vmatpush.bf16.msra.mxu0 %v2798
  %2808 = vmatpush.bf16.msra.mxu0 %v2797
  %2809 = vmatpush.bf16.msra.mxu0 %v2796
  %2810 = vmatpush.bf16.msra.mxu0 %v2795
  %2811 = vmatpush.bf16.msra.mxu0 %v2794
  %2812 = vmatpush.bf16.msra.mxu0 %v2793
  %2813 = vmatpush.bf16.msra.mxu0 %v2792
  %2814 = vmatpush.bf16.msra.mxu0 %v2791
  %2815 = vmatmul.bf16.gmra.mxu0 %v1879
  %v2816 = vpop.f32.mrf.mxu0
  %v2817 = vadd.f32 0.0, %v2816
  %v2818 = vpop.f32.mrf.mxu0
  %2819 = vdwg.mxu0
  %v2820 = vadd.f32 %v2758, %v2817
  %v2837 = vunpack.c.l.b16 %v2061
  %v2838 = vunpack.c.l.b16 %v2062
  %v2839 = vunpack.c.l.b16 %v2063
  %v2840 = vunpack.c.l.b16 %v2064
  %v2841 = vunpack.c.l.b16 %v2065
  %v2842 = vunpack.c.l.b16 %v2066
  %v2843 = vunpack.c.l.b16 %v2067
  %v2844 = vunpack.c.l.b16 %v2068
  %v2845 = vunpack.c.l.b16 %v2069
  %v2846 = vunpack.c.l.b16 %v2070
  %v2847 = vunpack.c.l.b16 %v2071
  %v2848 = vunpack.c.l.b16 %v2072
  %v2849 = vunpack.c.l.b16 %v2073
  %v2850 = vunpack.c.l.b16 %v2074
  %v2851 = vunpack.c.l.b16 %v2075
  %v2852 = vunpack.c.l.b16 %v2076
  %v2853 = vpack.c.b16 %v2838, %v2837
  %v2854 = vpack.c.b16 %v2840, %v2839
  %v2855 = vpack.c.b16 %v2842, %v2841
  %v2856 = vpack.c.b16 %v2844, %v2843
  %v2857 = vpack.c.b16 %v2846, %v2845
  %v2858 = vpack.c.b16 %v2848, %v2847
  %v2859 = vpack.c.b16 %v2850, %v2849
  %v2860 = vpack.c.b16 %v2852, %v2851
  %2869 = vmatpush.bf16.msra.mxu0 %v2860
  %2870 = vmatpush.bf16.msra.mxu0 %v2859
  %2871 = vmatpush.bf16.msra.mxu0 %v2858
  %2872 = vmatpush.bf16.msra.mxu0 %v2857
  %2873 = vmatpush.bf16.msra.mxu0 %v2856
  %2874 = vmatpush.bf16.msra.mxu0 %v2855
  %2875 = vmatpush.bf16.msra.mxu0 %v2854
  %2876 = vmatpush.bf16.msra.mxu0 %v2853
  %2877 = vmatmul.bf16.gmra.mxu0 %v1880
  %v2878 = vpop.f32.mrf.mxu0
  %v2879 = vadd.f32 0.0, %v2878
  %v2880 = vpop.f32.mrf.mxu0
  %2881 = vdwg.mxu0
  %v2882 = vadd.f32 %v2820, %v2879
  %v2899 = vunpack.c.l.b16 %v2077
  %v2900 = vunpack.c.l.b16 %v2078
  %v2901 = vunpack.c.l.b16 %v2079
  %v2902 = vunpack.c.l.b16 %v2080
  %v2903 = vunpack.c.l.b16 %v2081
  %v2904 = vunpack.c.l.b16 %v2082
  %v2905 = vunpack.c.l.b16 %v2083
  %v2906 = vunpack.c.l.b16 %v2084
  %v2907 = vunpack.c.l.b16 %v2085
  %v2908 = vunpack.c.l.b16 %v2086
  %v2909 = vunpack.c.l.b16 %v2087
  %v2910 = vunpack.c.l.b16 %v2088
  %v2911 = vunpack.c.l.b16 %v2089
  %v2912 = vunpack.c.l.b16 %v2090
  %v2913 = vunpack.c.l.b16 %v2091
  %v2914 = vunpack.c.l.b16 %v2092
  %v2915 = vpack.c.b16 %v2900, %v2899
  %v2916 = vpack.c.b16 %v2902, %v2901
  %v2917 = vpack.c.b16 %v2904, %v2903
  %v2918 = vpack.c.b16 %v2906, %v2905
  %v2919 = vpack.c.b16 %v2908, %v2907
  %v2920 = vpack.c.b16 %v2910, %v2909
  %v2921 = vpack.c.b16 %v2912, %v2911
  %v2922 = vpack.c.b16 %v2914, %v2913
  %2931 = vmatpush.bf16.msra.mxu0 %v2922
  %2932 = vmatpush.bf16.msra.mxu0 %v2921
  %2933 = vmatpush.bf16.msra.mxu0 %v2920
  %2934 = vmatpush.bf16.msra.mxu0 %v2919
  %2935 = vmatpush.bf16.msra.mxu0 %v2918
  %2936 = vmatpush.bf16.msra.mxu0 %v2917
  %2937 = vmatpush.bf16.msra.mxu0 %v2916
  %2938 = vmatpush.bf16.msra.mxu0 %v2915
  %2939 = vmatmul.bf16.gmra.mxu0 %v1881
  %v2940 = vpop.f32.mrf.mxu0
  %v2941 = vadd.f32 0.0, %v2940
  %v2942 = vpop.f32.mrf.mxu0
  %2943 = vdwg.mxu0
  %v2944 = vadd.f32 %v2882, %v2941
  %v2961 = vunpack.c.l.b16 %v2093
  %v2962 = vunpack.c.l.b16 %v2094
  %v2963 = vunpack.c.l.b16 %v2095
  %v2964 = vunpack.c.l.b16 %v2096
  %v2965 = vunpack.c.l.b16 %v2097
  %v2966 = vunpack.c.l.b16 %v2098
  %v2967 = vunpack.c.l.b16 %v2099
  %v2968 = vunpack.c.l.b16 %v2100
  %v2969 = vunpack.c.l.b16 %v2101
  %v2970 = vunpack.c.l.b16 %v2102
  %v2971 = vunpack.c.l.b16 %v2103
  %v2972 = vunpack.c.l.b16 %v2104
  %v2973 = vunpack.c.l.b16 %v2105
  %v2974 = vunpack.c.l.b16 %v2106
  %v2975 = vunpack.c.l.b16 %v2107
  %v2976 = vunpack.c.l.b16 %v2108
  %v2977 = vpack.c.b16 %v2962, %v2961
  %v2978 = vpack.c.b16 %v2964, %v2963
  %v2979 = vpack.c.b16 %v2966, %v2965
  %v2980 = vpack.c.b16 %v2968, %v2967
  %v2981 = vpack.c.b16 %v2970, %v2969
  %v2982 = vpack.c.b16 %v2972, %v2971
  %v2983 = vpack.c.b16 %v2974, %v2973
  %v2984 = vpack.c.b16 %v2976, %v2975
  %2993 = vmatpush.bf16.msra.mxu0 %v2984
  %2994 = vmatpush.bf16.msra.mxu0 %v2983
  %2995 = vmatpush.bf16.msra.mxu0 %v2982
  %2996 = vmatpush.bf16.msra.mxu0 %v2981
  %2997 = vmatpush.bf16.msra.mxu0 %v2980
  %2998 = vmatpush.bf16.msra.mxu0 %v2979
  %2999 = vmatpush.bf16.msra.mxu0 %v2978
  %3000 = vmatpush.bf16.msra.mxu0 %v2977
  %3001 = vmatmul.bf16.gmra.mxu0 %v1882
  %v3002 = vpop.f32.mrf.mxu0
  %v3003 = vadd.f32 0.0, %v3002
  %v3004 = vpop.f32.mrf.mxu0
  %3005 = vdwg.mxu0
  %v3006 = vadd.f32 %v2944, %v3003
  %v3023 = vunpack.c.l.b16 %v2109
  %v3024 = vunpack.c.l.b16 %v2110
  %v3025 = vunpack.c.l.b16 %v2111
  %v3026 = vunpack.c.l.b16 %v2112
  %v3027 = vunpack.c.l.b16 %v2113
  %v3028 = vunpack.c.l.b16 %v2114
  %v3029 = vunpack.c.l.b16 %v2115
  %v3030 = vunpack.c.l.b16 %v2116
  %v3031 = vunpack.c.l.b16 %v2117
  %v3032 = vunpack.c.l.b16 %v2118
  %v3033 = vunpack.c.l.b16 %v2119
  %v3034 = vunpack.c.l.b16 %v2120
  %v3035 = vunpack.c.l.b16 %v2121
  %v3036 = vunpack.c.l.b16 %v2122
  %v3037 = vunpack.c.l.b16 %v2123
  %v3038 = vunpack.c.l.b16 %v2124
  %v3039 = vpack.c.b16 %v3024, %v3023
  %v3040 = vpack.c.b16 %v3026, %v3025
  %v3041 = vpack.c.b16 %v3028, %v3027
  %v3042 = vpack.c.b16 %v3030, %v3029
  %v3043 = vpack.c.b16 %v3032, %v3031
  %v3044 = vpack.c.b16 %v3034, %v3033
  %v3045 = vpack.c.b16 %v3036, %v3035
  %v3046 = vpack.c.b16 %v3038, %v3037
  %3055 = vmatpush.bf16.msra.mxu0 %v3046
  %3056 = vmatpush.bf16.msra.mxu0 %v3045
  %3057 = vmatpush.bf16.msra.mxu0 %v3044
  %3058 = vmatpush.bf16.msra.mxu0 %v3043
  %3059 = vmatpush.bf16.msra.mxu0 %v3042
  %3060 = vmatpush.bf16.msra.mxu0 %v3041
  %3061 = vmatpush.bf16.msra.mxu0 %v3040
  %3062 = vmatpush.bf16.msra.mxu0 %v3039
  %3063 = vmatmul.bf16.gmra.mxu0 %v1883
  %v3064 = vpop.f32.mrf.mxu0
  %v3065 = vadd.f32 0.0, %v3064
  %v3066 = vpop.f32.mrf.mxu0
  %3067 = vdwg.mxu0
  %v3068 = vadd.f32 %v3006, %v3065
  %v3085 = vunpack.c.l.b16 %v2125
  %v3086 = vunpack.c.l.b16 %v2126
  %v3087 = vunpack.c.l.b16 %v2127
  %v3088 = vunpack.c.l.b16 %v2128
  %v3089 = vunpack.c.l.b16 %v2129
  %v3090 = vunpack.c.l.b16 %v2130
  %v3091 = vunpack.c.l.b16 %v2131
  %v3092 = vunpack.c.l.b16 %v2132
  %v3093 = vunpack.c.l.b16 %v2133
  %v3094 = vunpack.c.l.b16 %v2134
  %v3095 = vunpack.c.l.b16 %v2135
  %v3096 = vunpack.c.l.b16 %v2136
  %v3097 = vunpack.c.l.b16 %v2137
  %v3098 = vunpack.c.l.b16 %v2138
  %v3099 = vunpack.c.l.b16 %v2139
  %v3100 = vunpack.c.l.b16 %v2140
  %v3101 = vpack.c.b16 %v3086, %v3085
  %v3102 = vpack.c.b16 %v3088, %v3087
  %v3103 = vpack.c.b16 %v3090, %v3089
  %v3104 = vpack.c.b16 %v3092, %v3091
  %v3105 = vpack.c.b16 %v3094, %v3093
  %v3106 = vpack.c.b16 %v3096, %v3095
  %v3107 = vpack.c.b16 %v3098, %v3097
  %v3108 = vpack.c.b16 %v3100, %v3099
  %3117 = vmatpush.bf16.msra.mxu0 %v3108
  %3118 = vmatpush.bf16.msra.mxu0 %v3107
  %3119 = vmatpush.bf16.msra.mxu0 %v3106
  %3120 = vmatpush.bf16.msra.mxu0 %v3105
  %3121 = vmatpush.bf16.msra.mxu0 %v3104
  %3122 = vmatpush.bf16.msra.mxu0 %v3103
  %3123 = vmatpush.bf16.msra.mxu0 %v3102
  %3124 = vmatpush.bf16.msra.mxu0 %v3101
  %3125 = vmatmul.bf16.gmra.mxu0 %v1884
  %v3126 = vpop.f32.mrf.mxu0
  %v3127 = vadd.f32 0.0, %v3126
  %v3128 = vpop.f32.mrf.mxu0
  %3129 = vdwg.mxu0
  %v3130 = vadd.f32 %v3068, %v3127
  %v3131 = vld [vmem:[%s4] sm:$0x1]
  %v3133 = vperm.slane %v3131, 0
  %v3135 = vadd.f32 %v3130, %v3133
  %3136 = vst [vmem:[%s5] sm:$0xff] %v3135
  // Predicated region
  $region22: #{lenet_forward.3} parent=0 // pred_check
    _
  $region23: #{lenet_forward.3} parent=0 // pred_check_branch
    %3138 = sbr.rel (0) target = $region25
  $region24: #{lenet_forward.3} parent=0 // pred_region
    _
  $region25: #{lenet_forward.3} parent=0 // pred_fallthru
    _
  // Predicated region
  $region26: #{lenet_forward.3} parent=0 // pred_check
    _
  $region27: #{lenet_forward.3} parent=0 // pred_check_branch
    %3140 = sbr.rel (0) target = $region29
  $region28: #{lenet_forward.3} parent=0 // pred_region
    _
  $region29: #{lenet_forward.3} parent=0 // pred_fallthru
    _

</llo_original>
